<compile_context>
chip_gen: v5e
topology: v5e:2x2
jax: 0.10.0
libtpu: 0.0.40
codegen_flags: <defaults>
</compile_context>

<pallas_src>
import functools

import jax
import jax.numpy as jnp
from jax.experimental import pallas as pl
from jax.experimental.pallas import tpu as pltpu


# ---------------------------------------------------------------------------
# Fully fused backbone kernel (one image per grid step)
# ---------------------------------------------------------------------------
def _backbone_kernel(p_ref, sw_ref, sb_ref,
                     s1w_ref, s1b_ref, c1w_ref, c1b_ref,
                     s2w_ref, s2b_ref, c2w_ref, c2b_ref,
                     o_ref, spad_ref, *, Ho, Wo, Hp, Wp, S):
    He, We = (Ho + 1) // 2, (Wo + 1) // 2          # even-parity extents (8, 8)
    M = Hp * Wp                                    # pooled pixel count (49)

    # ---- stem conv 3x3 / s2: one matmul on pre-built patches + bias + ReLU --
    a = p_ref[0]                                                   # (225, 27)
    y = jnp.dot(a, sw_ref[...], preferred_element_type=jnp.float32)
    y = jnp.maximum(y + sb_ref[...], 0.0)                          # (225, 16)
    C0 = y.shape[-1]

    # ---- maxpool 3x3 / s2 epilogue (rows of `y` are parity-grouped) ---------
    #   [0 : 64)    ee : stem pixels (2a, 2b)     -> (8, 8, 16)
    #   [64 : 120)  eo : (2a, 2b+1)               -> (8, 7, 16)
    #   [120: 176)  oe : (2a+1, 2b)               -> (7, 8, 16)
    #   [176: 225)  oo : (2a+1, 2b+1)             -> (7, 7, 16)
    nee, neo, noe, noo = He * We, He * Wp, Hp * We, Hp * Wp
    ee = y[0:nee].reshape(He, We, C0)
    eo = y[nee:nee + neo].reshape(He, Wp, C0)
    oe = y[nee + neo:nee + neo + noe].reshape(Hp, We, C0)
    oo = y[nee + neo + noe:nee + neo + noe + noo].reshape(Hp, Wp, C0)
    taps = [
        ee[0:Hp, 0:Wp], ee[0:Hp, 1:Wp + 1],
        ee[1:Hp + 1, 0:Wp], ee[1:Hp + 1, 1:Wp + 1],
        eo[0:Hp, :], eo[1:Hp + 1, :],
        oe[:, 0:Wp], oe[:, 1:Wp + 1],
        oo,
    ]
    while len(taps) > 1:                     # balanced max tree (depth 4)
        nxt = [jnp.maximum(taps[i], taps[i + 1])
               for i in range(0, len(taps) - 1, 2)]
        if len(taps) % 2:
            nxt.append(taps[-1])
        taps = nxt
    pooled = taps[0].reshape(M, C0)                                # (49, 16)

    # ---- Fire modules, fully in VMEM ----------------------------------------
    # Zero only the 1-wide halo of the padded squeeze map; the interior is
    # overwritten by every fire and the halo is shared by both.
    spad_ref[0:1, :, :] = jnp.zeros((1, Wp + 2, S), jnp.float32)
    spad_ref[Hp + 1:Hp + 2, :, :] = jnp.zeros((1, Wp + 2, S), jnp.float32)
    spad_ref[:, 0:1, :] = jnp.zeros((Hp + 2, 1, S), jnp.float32)
    spad_ref[:, Wp + 1:Wp + 2, :] = jnp.zeros((Hp + 2, 1, S), jnp.float32)

    def fire(x, sqw_ref, sqb_ref, cw_ref, cb_ref):
        # squeeze 1x1 + ReLU, kept on-chip
        s = jnp.dot(x, sqw_ref[...], preferred_element_type=jnp.float32)
        s = jnp.maximum(s + sqb_ref[...], 0.0)                     # (49, S)
        spad_ref[1:Hp + 1, 1:Wp + 1, :] = s.reshape(Hp, Wp, S)
        # expand: 9 accumulated matmuls over the wrap-free padded map.  The
        # expand1x1 weight is folded into the centre tap of cw, so `acc`
        # directly holds the concatenated [expand1x1 | expand3x3] result.
        E = cb_ref.shape[-1]
        acc = jnp.zeros((M, E), jnp.float32)
        for t in range(9):
            dy, dx = divmod(t, 3)
            tap = spad_ref[dy:dy + Hp, dx:dx + Wp, :].reshape(M, S)
            acc = acc + jnp.dot(tap, cw_ref[t * S:(t + 1) * S, :],
                                preferred_element_type=jnp.float32)
        return jnp.maximum(acc + cb_ref[...], 0.0)                 # (49, E)

    f1 = fire(pooled, s1w_ref, s1b_ref, c1w_ref, c1b_ref)          # (49, 32)
    f2 = fire(f1, s2w_ref, s2b_ref, c2w_ref, c2b_ref)              # (49, 32)
    o_ref[0] = f2.astype(o_ref.dtype)


# ---------------------------------------------------------------------------
# Wrapper-side layout plumbing (pure XLA glue, no intermediate kernels)
# ---------------------------------------------------------------------------
def _stem_patches_parity(x_nhwc, k=3, stride=2):
    """im2col patches for the stem conv, rows grouped by output-pixel parity
    (ee, eo, oe, oo) so the fused kernel's maxpool needs unit-stride slices
    only.  Returns ((N, Ho*Wo, k*k*C), Ho, Wo)."""
    N, H, W, C = x_nhwc.shape
    Ho = (H - k) // stride + 1
    Wo = (W - k) // stride + 1
    cols = []
    for dy in range(k):
        for dx in range(k):
            cols.append(x_nhwc[:, dy:dy + stride * (Ho - 1) + 1:stride,
                                  dx:dx + stride * (Wo - 1) + 1:stride, :])
    pr = jnp.concatenate(cols, axis=-1)                  # (N, Ho, Wo, k*k*C)
    Kc = pr.shape[-1]
    groups = [pr[:, 0::2, 0::2], pr[:, 0::2, 1::2],
              pr[:, 1::2, 0::2], pr[:, 1::2, 1::2]]
    flat = [g.reshape(N, -1, Kc) for g in groups]
    return jnp.concatenate(flat, axis=1), Ho, Wo


def squeezenet_mini_forward(params, x_nchw):
    x = jnp.transpose(x_nchw, (0, 2, 3, 1))              # NCHW -> NHWC
    patches, Ho, Wo = _stem_patches_parity(x)            # (N, 225, 27)
    N, _, K = patches.shape
    assert Ho % 2 == 1 and Wo % 2 == 1
    Hp, Wp = (Ho - 1) // 2, (Wo - 1) // 2                # pooled extent (7, 7)
    M = Hp * Wp
    C0 = params["stem_w"].shape[1]                       # 16
    S = params["fire1"]["sq_w"].shape[1]                 # 8
    E = params["fire1"]["cb"].shape[1]                   # 32

    def full(shape):
        n = len(shape)
        return pl.BlockSpec(shape, lambda i, n=n: (0,) * n)

    out = pl.pallas_call(
        functools.partial(_backbone_kernel, Ho=Ho, Wo=Wo, Hp=Hp, Wp=Wp, S=S),
        out_shape=jax.ShapeDtypeStruct((N, M, E), x.dtype),
        grid_spec=pltpu.PrefetchScalarGridSpec(
            num_scalar_prefetch=0,
            grid=(N,),
            in_specs=[
                pl.BlockSpec((1, Ho * Wo, K), lambda i: (i, 0, 0)),
                full((K, C0)), full((1, C0)),
                full((C0, S)), full((1, S)), full((9 * S, E)), full((1, E)),
                full((E, S)), full((1, S)), full((9 * S, E)), full((1, E)),
            ],
            out_specs=pl.BlockSpec((1, M, E), lambda i: (i, 0, 0)),
            scratch_shapes=[pltpu.VMEM((Hp + 2, Wp + 2, S), jnp.float32)],
        ),
        compiler_params=pltpu.CompilerParams(
            dimension_semantics=("parallel",)),
    )(patches,
      params["stem_w"], params["stem_b"],
      params["fire1"]["sq_w"], params["fire1"]["sq_b"],
      params["fire1"]["cw"], params["fire1"]["cb"],
      params["fire2"]["sq_w"], params["fire2"]["sq_b"],
      params["fire2"]["cw"], params["fire2"]["cb"])
    return jnp.transpose(out.reshape(N, Hp, Wp, E), (0, 3, 1, 2))  # NCHW out


# ---------------------------------------------------------------------------
# Backbone wrapper (mirrors the PyTorch module)
# ---------------------------------------------------------------------------
class Backbone:
    def __init__(self, net, out_channels: int, name: str):
        self.net = net
        self.out_channels = out_channels
        self.name = name

    def __call__(self, x):
        return self.net(x)

    forward = __call__

    def freeze(self):
        # TODO(synk): requires_grad has no JAX equivalent; gradient masking is
        # an optimizer concern, so this is a no-op here.
        pass


# ---------------------------------------------------------------------------
# Deterministic parameter init (PyTorch conv layout -> fused matmul layout)
# ---------------------------------------------------------------------------
def _conv_weight(key, cout, cin, k):
    w = jax.random.normal(key, (cout, cin, k, k), jnp.float32) * 0.1
    # (Cout, Cin, kh, kw) -> (kh, kw, Cin, Cout) -> (kh*kw*Cin, Cout)
    return jnp.transpose(w, (2, 3, 1, 0)).reshape(k * k * cin, cout)


def _fire_params(k1, k2, k3, cin, s, e1, e3):
    sq_w = _conv_weight(k1, s, cin, 1)                 # (cin, s)
    e1_w = _conv_weight(k2, e1, s, 1)                  # (s, e1)
    e3_w = _conv_weight(k3, e3, s, 3)                  # (9*s, e3), rows (dy,dx,s)
    # Combined expand weight: e1 folded into the centre tap (dy=1, dx=1) so the
    # accumulated tap matmuls emit the concatenated [e1 | e3] output.
    cw = jnp.zeros((9 * s, e1 + e3), jnp.float32)
    cw = cw.at[:, e1:].set(e3_w)
    cw = cw.at[4 * s:5 * s, :e1].set(e1_w)
    return {
        "sq_w": sq_w,
        "sq_b": jnp.zeros((1, s), jnp.float32),
        "cw": cw,
        "cb": jnp.zeros((1, e1 + e3), jnp.float32),    # [e1_b | e3_b] (zeros)
    }


def init_params(key):
    ks = jax.random.split(key, 8)
    return {
        "stem_w": _conv_weight(ks[0], 16, 3, 3),
        "stem_b": jnp.zeros((1, 16), jnp.float32),
        "fire1": _fire_params(ks[1], ks[2], ks[3], 16, 8, 16, 16),
        "fire2": _fire_params(ks[4], ks[5], ks[6], 32, 8, 16, 16),
    }


# ---------------------------------------------------------------------------
if __name__ == "__main__":
    key = jax.random.PRNGKey(0)
    pkey, xkey = jax.random.split(key)

    params = init_params(pkey)
    x = jax.random.normal(xkey, (2, 3, 32, 32), jnp.float32)   # NCHW, like PyTorch

    net = jax.jit(functools.partial(squeezenet_mini_forward, params))
    backbone = Backbone(net, out_channels=32, name="squeezenet_mini")

    y = jax.block_until_ready(backbone(x))
    assert y.shape == (2, 32, 7, 7), y.shape
    assert y.dtype == jnp.float32

    print("KERNEL_OK")
</pallas_src>

<mosaic_0001>
module attributes {stable_mosaic.version = 11 : i64} {
  func.func @_backbone_kernel(%arg0: i32, %arg1: memref<1x225x27xf32, #tpu.memory_space<vmem>>, %arg2: memref<27x16xf32, #tpu.memory_space<vmem>>, %arg3: memref<1x16xf32, #tpu.memory_space<vmem>>, %arg4: memref<16x8xf32, #tpu.memory_space<vmem>>, %arg5: memref<1x8xf32, #tpu.memory_space<vmem>>, %arg6: memref<72x32xf32, #tpu.memory_space<vmem>>, %arg7: memref<1x32xf32, #tpu.memory_space<vmem>>, %arg8: memref<32x8xf32, #tpu.memory_space<vmem>>, %arg9: memref<1x8xf32, #tpu.memory_space<vmem>>, %arg10: memref<72x32xf32, #tpu.memory_space<vmem>>, %arg11: memref<1x32xf32, #tpu.memory_space<vmem>>, %arg12: memref<1x49x32xf32, #tpu.memory_space<vmem>>, %arg13: memref<9x9x8xf32, #tpu.memory_space<vmem>>) attributes {dimension_semantics = [#tpu.dimension_semantics<parallel>], iteration_bounds = array<i64: 2>, scalar_prefetch = 0 : i64, scratch_operands = 1 : i64, tpu.core_type = #tpu.core_type<tc>, window_params = [{transform_indices = @transform_0, window_bounds = array<i64: 1, 225, 27>}, {pipeline_mode = #tpu.pipeline_mode<synchronous>, transform_indices = @transform_1, window_bounds = array<i64: 27, 16>}, {pipeline_mode = #tpu.pipeline_mode<synchronous>, transform_indices = @transform_2, window_bounds = array<i64: 1, 16>}, {pipeline_mode = #tpu.pipeline_mode<synchronous>, transform_indices = @transform_3, window_bounds = array<i64: 16, 8>}, {pipeline_mode = #tpu.pipeline_mode<synchronous>, transform_indices = @transform_4, window_bounds = array<i64: 1, 8>}, {pipeline_mode = #tpu.pipeline_mode<synchronous>, transform_indices = @transform_5, window_bounds = array<i64: 72, 32>}, {pipeline_mode = #tpu.pipeline_mode<synchronous>, transform_indices = @transform_6, window_bounds = array<i64: 1, 32>}, {pipeline_mode = #tpu.pipeline_mode<synchronous>, transform_indices = @transform_7, window_bounds = array<i64: 32, 8>}, {pipeline_mode = #tpu.pipeline_mode<synchronous>, transform_indices = @transform_8, window_bounds = array<i64: 1, 8>}, {pipeline_mode = #tpu.pipeline_mode<synchronous>, transform_indices = @transform_9, window_bounds = array<i64: 72, 32>}, {pipeline_mode = #tpu.pipeline_mode<synchronous>, transform_indices = @transform_10, window_bounds = array<i64: 1, 32>}, {transform_indices = @transform_11, window_bounds = array<i64: 1, 49, 32>}]} {
    %c0 = arith.constant 0 : index
    %c0_0 = arith.constant 0 : index
    %c0_1 = arith.constant 0 : index
    %0 = vector.load %arg1[%c0, %c0_0, %c0_1] : memref<1x225x27xf32, #tpu.memory_space<vmem>>, vector<1x225x27xf32>
    %1 = vector.shape_cast %0 : vector<1x225x27xf32> to vector<225x27xf32>
    %c0_2 = arith.constant 0 : index
    %c0_3 = arith.constant 0 : index
    %2 = vector.load %arg2[%c0_2, %c0_3] : memref<27x16xf32, #tpu.memory_space<vmem>>, vector<27x16xf32>
    %cst = arith.constant dense<0.000000e+00> : vector<225x16xf32>
    %3 = tpu.matmul %1, %2, %cst {dimension_numbers = #tpu.dot_dimension_numbers<[1], [0], [0], [1], [0, 0, 1, 1], [], []>} : vector<225x27xf32>, vector<27x16xf32>, vector<225x16xf32> -> vector<225x16xf32>
    %c0_4 = arith.constant 0 : index
    %c0_5 = arith.constant 0 : index
    %4 = vector.load %arg3[%c0_4, %c0_5] : memref<1x16xf32, #tpu.memory_space<vmem>>, vector<1x16xf32>
    %5 = vector.broadcast %4 : vector<1x16xf32> to vector<225x16xf32>
    %6 = arith.addf %3, %5 : vector<225x16xf32>
    %cst_6 = arith.constant 0.000000e+00 : f32
    %7 = vector.broadcast %cst_6 : f32 to vector<225x16xf32>
    %8 = arith.maximumf %6, %7 : vector<225x16xf32>
    %9 = vector.extract_strided_slice %8 {offsets = [0, 0], sizes = [64, 16], strides = [1, 1]} : vector<225x16xf32> to vector<64x16xf32>
    %10 = vector.shape_cast %9 : vector<64x16xf32> to vector<8x8x16xf32>
    %11 = vector.extract_strided_slice %8 {offsets = [64, 0], sizes = [56, 16], strides = [1, 1]} : vector<225x16xf32> to vector<56x16xf32>
    %12 = vector.shape_cast %11 : vector<56x16xf32> to vector<8x7x16xf32>
    %13 = vector.extract_strided_slice %8 {offsets = [120, 0], sizes = [56, 16], strides = [1, 1]} : vector<225x16xf32> to vector<56x16xf32>
    %14 = vector.shape_cast %13 : vector<56x16xf32> to vector<7x8x16xf32>
    %15 = vector.extract_strided_slice %8 {offsets = [176, 0], sizes = [49, 16], strides = [1, 1]} : vector<225x16xf32> to vector<49x16xf32>
    %16 = vector.shape_cast %15 : vector<49x16xf32> to vector<7x7x16xf32>
    %17 = vector.extract_strided_slice %10 {offsets = [0, 0, 0], sizes = [7, 7, 16], strides = [1, 1, 1]} : vector<8x8x16xf32> to vector<7x7x16xf32>
    %18 = vector.extract_strided_slice %10 {offsets = [0, 1, 0], sizes = [7, 7, 16], strides = [1, 1, 1]} : vector<8x8x16xf32> to vector<7x7x16xf32>
    %19 = vector.extract_strided_slice %10 {offsets = [1, 0, 0], sizes = [7, 7, 16], strides = [1, 1, 1]} : vector<8x8x16xf32> to vector<7x7x16xf32>
    %20 = vector.extract_strided_slice %10 {offsets = [1, 1, 0], sizes = [7, 7, 16], strides = [1, 1, 1]} : vector<8x8x16xf32> to vector<7x7x16xf32>
    %21 = vector.extract_strided_slice %12 {offsets = [0, 0, 0], sizes = [7, 7, 16], strides = [1, 1, 1]} : vector<8x7x16xf32> to vector<7x7x16xf32>
    %22 = vector.extract_strided_slice %12 {offsets = [1, 0, 0], sizes = [7, 7, 16], strides = [1, 1, 1]} : vector<8x7x16xf32> to vector<7x7x16xf32>
    %23 = vector.extract_strided_slice %14 {offsets = [0, 0, 0], sizes = [7, 7, 16], strides = [1, 1, 1]} : vector<7x8x16xf32> to vector<7x7x16xf32>
    %24 = vector.extract_strided_slice %14 {offsets = [0, 1, 0], sizes = [7, 7, 16], strides = [1, 1, 1]} : vector<7x8x16xf32> to vector<7x7x16xf32>
    %25 = arith.maximumf %17, %18 : vector<7x7x16xf32>
    %26 = arith.maximumf %19, %20 : vector<7x7x16xf32>
    %27 = arith.maximumf %21, %22 : vector<7x7x16xf32>
    %28 = arith.maximumf %23, %24 : vector<7x7x16xf32>
    %29 = arith.maximumf %25, %26 : vector<7x7x16xf32>
    %30 = arith.maximumf %27, %28 : vector<7x7x16xf32>
    %31 = arith.maximumf %29, %30 : vector<7x7x16xf32>
    %32 = arith.maximumf %31, %16 : vector<7x7x16xf32>
    %33 = vector.shape_cast %32 : vector<7x7x16xf32> to vector<49x16xf32>
    %cst_7 = arith.constant 0.000000e+00 : f32
    %34 = vector.broadcast %cst_7 : f32 to vector<1x9x8xf32>
    %c0_8 = arith.constant 0 : index
    %c0_9 = arith.constant 0 : index
    %c0_10 = arith.constant 0 : index
    %35 = vector.load %arg13[%c0_8, %c0_9, %c0_10] : memref<9x9x8xf32, #tpu.memory_space<vmem>>, vector<1x9x8xf32>
    tpu.vector_store %arg13[%c0_8, %c0_9, %c0_10], %34 {strides = array<i32>} : memref<9x9x8xf32, #tpu.memory_space<vmem>>, vector<1x9x8xf32>,
    %cst_11 = arith.constant 0.000000e+00 : f32
    %36 = vector.broadcast %cst_11 : f32 to vector<1x9x8xf32>
    %c8 = arith.constant 8 : index
    %c0_12 = arith.constant 0 : index
    %c0_13 = arith.constant 0 : index
    %37 = vector.load %arg13[%c8, %c0_12, %c0_13] : memref<9x9x8xf32, #tpu.memory_space<vmem>>, vector<1x9x8xf32>
    tpu.vector_store %arg13[%c8, %c0_12, %c0_13], %36 {strides = array<i32>} : memref<9x9x8xf32, #tpu.memory_space<vmem>>, vector<1x9x8xf32>,
    %cst_14 = arith.constant 0.000000e+00 : f32
    %38 = vector.broadcast %cst_14 : f32 to vector<9x1x8xf32>
    %c0_15 = arith.constant 0 : index
    %c0_16 = arith.constant 0 : index
    %c0_17 = arith.constant 0 : index
    %39 = vector.load %arg13[%c0_15, %c0_16, %c0_17] : memref<9x9x8xf32, #tpu.memory_space<vmem>>, vector<9x1x8xf32>
    tpu.vector_store %arg13[%c0_15, %c0_16, %c0_17], %38 {strides = array<i32>} : memref<9x9x8xf32, #tpu.memory_space<vmem>>, vector<9x1x8xf32>,
    %cst_18 = arith.constant 0.000000e+00 : f32
    %40 = vector.broadcast %cst_18 : f32 to vector<9x1x8xf32>
    %c0_19 = arith.constant 0 : index
    %c8_20 = arith.constant 8 : index
    %c0_21 = arith.constant 0 : index
    %41 = vector.load %arg13[%c0_19, %c8_20, %c0_21] : memref<9x9x8xf32, #tpu.memory_space<vmem>>, vector<9x1x8xf32>
    tpu.vector_store %arg13[%c0_19, %c8_20, %c0_21], %40 {strides = array<i32>} : memref<9x9x8xf32, #tpu.memory_space<vmem>>, vector<9x1x8xf32>,
    %c0_22 = arith.constant 0 : index
    %c0_23 = arith.constant 0 : index
    %42 = vector.load %arg4[%c0_22, %c0_23] : memref<16x8xf32, #tpu.memory_space<vmem>>, vector<16x8xf32>
    %cst_24 = arith.constant dense<0.000000e+00> : vector<49x8xf32>
    %43 = tpu.matmul %33, %42, %cst_24 {dimension_numbers = #tpu.dot_dimension_numbers<[1], [0], [0], [1], [0, 0, 1, 1], [], []>} : vector<49x16xf32>, vector<16x8xf32>, vector<49x8xf32> -> vector<49x8xf32>
    %c0_25 = arith.constant 0 : index
    %c0_26 = arith.constant 0 : index
    %44 = vector.load %arg5[%c0_25, %c0_26] : memref<1x8xf32, #tpu.memory_space<vmem>>, vector<1x8xf32>
    %45 = vector.broadcast %44 : vector<1x8xf32> to vector<49x8xf32>
    %46 = arith.addf %43, %45 : vector<49x8xf32>
    %cst_27 = arith.constant 0.000000e+00 : f32
    %47 = vector.broadcast %cst_27 : f32 to vector<49x8xf32>
    %48 = arith.maximumf %46, %47 : vector<49x8xf32>
    %49 = vector.shape_cast %48 : vector<49x8xf32> to vector<7x7x8xf32>
    %c1 = arith.constant 1 : index
    %c1_28 = arith.constant 1 : index
    %c0_29 = arith.constant 0 : index
    %50 = vector.load %arg13[%c1, %c1_28, %c0_29] : memref<9x9x8xf32, #tpu.memory_space<vmem>>, vector<7x7x8xf32>
    tpu.vector_store %arg13[%c1, %c1_28, %c0_29], %49 {strides = array<i32>} : memref<9x9x8xf32, #tpu.memory_space<vmem>>, vector<7x7x8xf32>,
    %cst_30 = arith.constant 0.000000e+00 : f32
    %51 = vector.broadcast %cst_30 : f32 to vector<49x32xf32>
    %c0_31 = arith.constant 0 : index
    %c0_32 = arith.constant 0 : index
    %c0_33 = arith.constant 0 : index
    %52 = vector.load %arg13[%c0_31, %c0_32, %c0_33] : memref<9x9x8xf32, #tpu.memory_space<vmem>>, vector<7x7x8xf32>
    %53 = vector.shape_cast %52 : vector<7x7x8xf32> to vector<49x8xf32>
    %c0_34 = arith.constant 0 : index
    %c0_35 = arith.constant 0 : index
    %54 = vector.load %arg6[%c0_34, %c0_35] : memref<72x32xf32, #tpu.memory_space<vmem>>, vector<8x32xf32>
    %cst_36 = arith.constant dense<0.000000e+00> : vector<49x32xf32>
    %55 = tpu.matmul %53, %54, %cst_36 {dimension_numbers = #tpu.dot_dimension_numbers<[1], [0], [0], [1], [0, 0, 1, 1], [], []>} : vector<49x8xf32>, vector<8x32xf32>, vector<49x32xf32> -> vector<49x32xf32>
    %56 = arith.addf %51, %55 : vector<49x32xf32>
    %c0_37 = arith.constant 0 : index
    %c1_38 = arith.constant 1 : index
    %c0_39 = arith.constant 0 : index
    %57 = vector.load %arg13[%c0_37, %c1_38, %c0_39] : memref<9x9x8xf32, #tpu.memory_space<vmem>>, vector<7x7x8xf32>
    %58 = vector.shape_cast %57 : vector<7x7x8xf32> to vector<49x8xf32>
    %c8_40 = arith.constant 8 : index
    %c0_41 = arith.constant 0 : index
    %59 = vector.load %arg6[%c8_40, %c0_41] : memref<72x32xf32, #tpu.memory_space<vmem>>, vector<8x32xf32>
    %cst_42 = arith.constant dense<0.000000e+00> : vector<49x32xf32>
    %60 = tpu.matmul %58, %59, %cst_42 {dimension_numbers = #tpu.dot_dimension_numbers<[1], [0], [0], [1], [0, 0, 1, 1], [], []>} : vector<49x8xf32>, vector<8x32xf32>, vector<49x32xf32> -> vector<49x32xf32>
    %61 = arith.addf %56, %60 : vector<49x32xf32>
    %c0_43 = arith.constant 0 : index
    %c2 = arith.constant 2 : index
    %c0_44 = arith.constant 0 : index
    %62 = vector.load %arg13[%c0_43, %c2, %c0_44] : memref<9x9x8xf32, #tpu.memory_space<vmem>>, vector<7x7x8xf32>
    %63 = vector.shape_cast %62 : vector<7x7x8xf32> to vector<49x8xf32>
    %c16 = arith.constant 16 : index
    %c0_45 = arith.constant 0 : index
    %64 = vector.load %arg6[%c16, %c0_45] : memref<72x32xf32, #tpu.memory_space<vmem>>, vector<8x32xf32>
    %cst_46 = arith.constant dense<0.000000e+00> : vector<49x32xf32>
    %65 = tpu.matmul %63, %64, %cst_46 {dimension_numbers = #tpu.dot_dimension_numbers<[1], [0], [0], [1], [0, 0, 1, 1], [], []>} : vector<49x8xf32>, vector<8x32xf32>, vector<49x32xf32> -> vector<49x32xf32>
    %66 = arith.addf %61, %65 : vector<49x32xf32>
    %c1_47 = arith.constant 1 : index
    %c0_48 = arith.constant 0 : index
    %c0_49 = arith.constant 0 : index
    %67 = vector.load %arg13[%c1_47, %c0_48, %c0_49] : memref<9x9x8xf32, #tpu.memory_space<vmem>>, vector<7x7x8xf32>
    %68 = vector.shape_cast %67 : vector<7x7x8xf32> to vector<49x8xf32>
    %c24 = arith.constant 24 : index
    %c0_50 = arith.constant 0 : index
    %69 = vector.load %arg6[%c24, %c0_50] : memref<72x32xf32, #tpu.memory_space<vmem>>, vector<8x32xf32>
    %cst_51 = arith.constant dense<0.000000e+00> : vector<49x32xf32>
    %70 = tpu.matmul %68, %69, %cst_51 {dimension_numbers = #tpu.dot_dimension_numbers<[1], [0], [0], [1], [0, 0, 1, 1], [], []>} : vector<49x8xf32>, vector<8x32xf32>, vector<49x32xf32> -> vector<49x32xf32>
    %71 = arith.addf %66, %70 : vector<49x32xf32>
    %c1_52 = arith.constant 1 : index
    %c1_53 = arith.constant 1 : index
    %c0_54 = arith.constant 0 : index
    %72 = vector.load %arg13[%c1_52, %c1_53, %c0_54] : memref<9x9x8xf32, #tpu.memory_space<vmem>>, vector<7x7x8xf32>
    %73 = vector.shape_cast %72 : vector<7x7x8xf32> to vector<49x8xf32>
    %c32 = arith.constant 32 : index
    %c0_55 = arith.constant 0 : index
    %74 = vector.load %arg6[%c32, %c0_55] : memref<72x32xf32, #tpu.memory_space<vmem>>, vector<8x32xf32>
    %cst_56 = arith.constant dense<0.000000e+00> : vector<49x32xf32>
    %75 = tpu.matmul %73, %74, %cst_56 {dimension_numbers = #tpu.dot_dimension_numbers<[1], [0], [0], [1], [0, 0, 1, 1], [], []>} : vector<49x8xf32>, vector<8x32xf32>, vector<49x32xf32> -> vector<49x32xf32>
    %76 = arith.addf %71, %75 : vector<49x32xf32>
    %c1_57 = arith.constant 1 : index
    %c2_58 = arith.constant 2 : index
    %c0_59 = arith.constant 0 : index
    %77 = vector.load %arg13[%c1_57, %c2_58, %c0_59] : memref<9x9x8xf32, #tpu.memory_space<vmem>>, vector<7x7x8xf32>
    %78 = vector.shape_cast %77 : vector<7x7x8xf32> to vector<49x8xf32>
    %c40 = arith.constant 40 : index
    %c0_60 = arith.constant 0 : index
    %79 = vector.load %arg6[%c40, %c0_60] : memref<72x32xf32, #tpu.memory_space<vmem>>, vector<8x32xf32>
    %cst_61 = arith.constant dense<0.000000e+00> : vector<49x32xf32>
    %80 = tpu.matmul %78, %79, %cst_61 {dimension_numbers = #tpu.dot_dimension_numbers<[1], [0], [0], [1], [0, 0, 1, 1], [], []>} : vector<49x8xf32>, vector<8x32xf32>, vector<49x32xf32> -> vector<49x32xf32>
    %81 = arith.addf %76, %80 : vector<49x32xf32>
    %c2_62 = arith.constant 2 : index
    %c0_63 = arith.constant 0 : index
    %c0_64 = arith.constant 0 : index
    %82 = vector.load %arg13[%c2_62, %c0_63, %c0_64] : memref<9x9x8xf32, #tpu.memory_space<vmem>>, vector<7x7x8xf32>
    %83 = vector.shape_cast %82 : vector<7x7x8xf32> to vector<49x8xf32>
    %c48 = arith.constant 48 : index
    %c0_65 = arith.constant 0 : index
    %84 = vector.load %arg6[%c48, %c0_65] : memref<72x32xf32, #tpu.memory_space<vmem>>, vector<8x32xf32>
    %cst_66 = arith.constant dense<0.000000e+00> : vector<49x32xf32>
    %85 = tpu.matmul %83, %84, %cst_66 {dimension_numbers = #tpu.dot_dimension_numbers<[1], [0], [0], [1], [0, 0, 1, 1], [], []>} : vector<49x8xf32>, vector<8x32xf32>, vector<49x32xf32> -> vector<49x32xf32>
    %86 = arith.addf %81, %85 : vector<49x32xf32>
    %c2_67 = arith.constant 2 : index
    %c1_68 = arith.constant 1 : index
    %c0_69 = arith.constant 0 : index
    %87 = vector.load %arg13[%c2_67, %c1_68, %c0_69] : memref<9x9x8xf32, #tpu.memory_space<vmem>>, vector<7x7x8xf32>
    %88 = vector.shape_cast %87 : vector<7x7x8xf32> to vector<49x8xf32>
    %c56 = arith.constant 56 : index
    %c0_70 = arith.constant 0 : index
    %89 = vector.load %arg6[%c56, %c0_70] : memref<72x32xf32, #tpu.memory_space<vmem>>, vector<8x32xf32>
    %cst_71 = arith.constant dense<0.000000e+00> : vector<49x32xf32>
    %90 = tpu.matmul %88, %89, %cst_71 {dimension_numbers = #tpu.dot_dimension_numbers<[1], [0], [0], [1], [0, 0, 1, 1], [], []>} : vector<49x8xf32>, vector<8x32xf32>, vector<49x32xf32> -> vector<49x32xf32>
    %91 = arith.addf %86, %90 : vector<49x32xf32>
    %c2_72 = arith.constant 2 : index
    %c2_73 = arith.constant 2 : index
    %c0_74 = arith.constant 0 : index
    %92 = vector.load %arg13[%c2_72, %c2_73, %c0_74] : memref<9x9x8xf32, #tpu.memory_space<vmem>>, vector<7x7x8xf32>
    %93 = vector.shape_cast %92 : vector<7x7x8xf32> to vector<49x8xf32>
    %c64 = arith.constant 64 : index
    %c0_75 = arith.constant 0 : index
    %94 = vector.load %arg6[%c64, %c0_75] : memref<72x32xf32, #tpu.memory_space<vmem>>, vector<8x32xf32>
    %cst_76 = arith.constant dense<0.000000e+00> : vector<49x32xf32>
    %95 = tpu.matmul %93, %94, %cst_76 {dimension_numbers = #tpu.dot_dimension_numbers<[1], [0], [0], [1], [0, 0, 1, 1], [], []>} : vector<49x8xf32>, vector<8x32xf32>, vector<49x32xf32> -> vector<49x32xf32>
    %96 = arith.addf %91, %95 : vector<49x32xf32>
    %c0_77 = arith.constant 0 : index
    %c0_78 = arith.constant 0 : index
    %97 = vector.load %arg7[%c0_77, %c0_78] : memref<1x32xf32, #tpu.memory_space<vmem>>, vector<1x32xf32>
    %98 = vector.broadcast %97 : vector<1x32xf32> to vector<49x32xf32>
    %99 = arith.addf %96, %98 : vector<49x32xf32>
    %cst_79 = arith.constant 0.000000e+00 : f32
    %100 = vector.broadcast %cst_79 : f32 to vector<49x32xf32>
    %101 = arith.maximumf %99, %100 : vector<49x32xf32>
    %c0_80 = arith.constant 0 : index
    %c0_81 = arith.constant 0 : index
    %102 = vector.load %arg8[%c0_80, %c0_81] : memref<32x8xf32, #tpu.memory_space<vmem>>, vector<32x8xf32>
    %cst_82 = arith.constant dense<0.000000e+00> : vector<49x8xf32>
    %103 = tpu.matmul %101, %102, %cst_82 {dimension_numbers = #tpu.dot_dimension_numbers<[1], [0], [0], [1], [0, 0, 1, 1], [], []>} : vector<49x32xf32>, vector<32x8xf32>, vector<49x8xf32> -> vector<49x8xf32>
    %c0_83 = arith.constant 0 : index
    %c0_84 = arith.constant 0 : index
    %104 = vector.load %arg9[%c0_83, %c0_84] : memref<1x8xf32, #tpu.memory_space<vmem>>, vector<1x8xf32>
    %105 = vector.broadcast %104 : vector<1x8xf32> to vector<49x8xf32>
    %106 = arith.addf %103, %105 : vector<49x8xf32>
    %cst_85 = arith.constant 0.000000e+00 : f32
    %107 = vector.broadcast %cst_85 : f32 to vector<49x8xf32>
    %108 = arith.maximumf %106, %107 : vector<49x8xf32>
    %109 = vector.shape_cast %108 : vector<49x8xf32> to vector<7x7x8xf32>
    %c1_86 = arith.constant 1 : index
    %c1_87 = arith.constant 1 : index
    %c0_88 = arith.constant 0 : index
    %110 = vector.load %arg13[%c1_86, %c1_87, %c0_88] : memref<9x9x8xf32, #tpu.memory_space<vmem>>, vector<7x7x8xf32>
    tpu.vector_store %arg13[%c1_86, %c1_87, %c0_88], %109 {strides = array<i32>} : memref<9x9x8xf32, #tpu.memory_space<vmem>>, vector<7x7x8xf32>,
    %cst_89 = arith.constant 0.000000e+00 : f32
    %111 = vector.broadcast %cst_89 : f32 to vector<49x32xf32>
    %c0_90 = arith.constant 0 : index
    %c0_91 = arith.constant 0 : index
    %c0_92 = arith.constant 0 : index
    %112 = vector.load %arg13[%c0_90, %c0_91, %c0_92] : memref<9x9x8xf32, #tpu.memory_space<vmem>>, vector<7x7x8xf32>
    %113 = vector.shape_cast %112 : vector<7x7x8xf32> to vector<49x8xf32>
    %c0_93 = arith.constant 0 : index
    %c0_94 = arith.constant 0 : index
    %114 = vector.load %arg10[%c0_93, %c0_94] : memref<72x32xf32, #tpu.memory_space<vmem>>, vector<8x32xf32>
    %cst_95 = arith.constant dense<0.000000e+00> : vector<49x32xf32>
    %115 = tpu.matmul %113, %114, %cst_95 {dimension_numbers = #tpu.dot_dimension_numbers<[1], [0], [0], [1], [0, 0, 1, 1], [], []>} : vector<49x8xf32>, vector<8x32xf32>, vector<49x32xf32> -> vector<49x32xf32>
    %116 = arith.addf %111, %115 : vector<49x32xf32>
    %c0_96 = arith.constant 0 : index
    %c1_97 = arith.constant 1 : index
    %c0_98 = arith.constant 0 : index
    %117 = vector.load %arg13[%c0_96, %c1_97, %c0_98] : memref<9x9x8xf32, #tpu.memory_space<vmem>>, vector<7x7x8xf32>
    %118 = vector.shape_cast %117 : vector<7x7x8xf32> to vector<49x8xf32>
    %c8_99 = arith.constant 8 : index
    %c0_100 = arith.constant 0 : index
    %119 = vector.load %arg10[%c8_99, %c0_100] : memref<72x32xf32, #tpu.memory_space<vmem>>, vector<8x32xf32>
    %cst_101 = arith.constant dense<0.000000e+00> : vector<49x32xf32>
    %120 = tpu.matmul %118, %119, %cst_101 {dimension_numbers = #tpu.dot_dimension_numbers<[1], [0], [0], [1], [0, 0, 1, 1], [], []>} : vector<49x8xf32>, vector<8x32xf32>, vector<49x32xf32> -> vector<49x32xf32>
    %121 = arith.addf %116, %120 : vector<49x32xf32>
    %c0_102 = arith.constant 0 : index
    %c2_103 = arith.constant 2 : index
    %c0_104 = arith.constant 0 : index
    %122 = vector.load %arg13[%c0_102, %c2_103, %c0_104] : memref<9x9x8xf32, #tpu.memory_space<vmem>>, vector<7x7x8xf32>
    %123 = vector.shape_cast %122 : vector<7x7x8xf32> to vector<49x8xf32>
    %c16_105 = arith.constant 16 : index
    %c0_106 = arith.constant 0 : index
    %124 = vector.load %arg10[%c16_105, %c0_106] : memref<72x32xf32, #tpu.memory_space<vmem>>, vector<8x32xf32>
    %cst_107 = arith.constant dense<0.000000e+00> : vector<49x32xf32>
    %125 = tpu.matmul %123, %124, %cst_107 {dimension_numbers = #tpu.dot_dimension_numbers<[1], [0], [0], [1], [0, 0, 1, 1], [], []>} : vector<49x8xf32>, vector<8x32xf32>, vector<49x32xf32> -> vector<49x32xf32>
    %126 = arith.addf %121, %125 : vector<49x32xf32>
    %c1_108 = arith.constant 1 : index
    %c0_109 = arith.constant 0 : index
    %c0_110 = arith.constant 0 : index
    %127 = vector.load %arg13[%c1_108, %c0_109, %c0_110] : memref<9x9x8xf32, #tpu.memory_space<vmem>>, vector<7x7x8xf32>
    %128 = vector.shape_cast %127 : vector<7x7x8xf32> to vector<49x8xf32>
    %c24_111 = arith.constant 24 : index
    %c0_112 = arith.constant 0 : index
    %129 = vector.load %arg10[%c24_111, %c0_112] : memref<72x32xf32, #tpu.memory_space<vmem>>, vector<8x32xf32>
    %cst_113 = arith.constant dense<0.000000e+00> : vector<49x32xf32>
    %130 = tpu.matmul %128, %129, %cst_113 {dimension_numbers = #tpu.dot_dimension_numbers<[1], [0], [0], [1], [0, 0, 1, 1], [], []>} : vector<49x8xf32>, vector<8x32xf32>, vector<49x32xf32> -> vector<49x32xf32>
    %131 = arith.addf %126, %130 : vector<49x32xf32>
    %c1_114 = arith.constant 1 : index
    %c1_115 = arith.constant 1 : index
    %c0_116 = arith.constant 0 : index
    %132 = vector.load %arg13[%c1_114, %c1_115, %c0_116] : memref<9x9x8xf32, #tpu.memory_space<vmem>>, vector<7x7x8xf32>
    %133 = vector.shape_cast %132 : vector<7x7x8xf32> to vector<49x8xf32>
    %c32_117 = arith.constant 32 : index
    %c0_118 = arith.constant 0 : index
    %134 = vector.load %arg10[%c32_117, %c0_118] : memref<72x32xf32, #tpu.memory_space<vmem>>, vector<8x32xf32>
    %cst_119 = arith.constant dense<0.000000e+00> : vector<49x32xf32>
    %135 = tpu.matmul %133, %134, %cst_119 {dimension_numbers = #tpu.dot_dimension_numbers<[1], [0], [0], [1], [0, 0, 1, 1], [], []>} : vector<49x8xf32>, vector<8x32xf32>, vector<49x32xf32> -> vector<49x32xf32>
    %136 = arith.addf %131, %135 : vector<49x32xf32>
    %c1_120 = arith.constant 1 : index
    %c2_121 = arith.constant 2 : index
    %c0_122 = arith.constant 0 : index
    %137 = vector.load %arg13[%c1_120, %c2_121, %c0_122] : memref<9x9x8xf32, #tpu.memory_space<vmem>>, vector<7x7x8xf32>
    %138 = vector.shape_cast %137 : vector<7x7x8xf32> to vector<49x8xf32>
    %c40_123 = arith.constant 40 : index
    %c0_124 = arith.constant 0 : index
    %139 = vector.load %arg10[%c40_123, %c0_124] : memref<72x32xf32, #tpu.memory_space<vmem>>, vector<8x32xf32>
    %cst_125 = arith.constant dense<0.000000e+00> : vector<49x32xf32>
    %140 = tpu.matmul %138, %139, %cst_125 {dimension_numbers = #tpu.dot_dimension_numbers<[1], [0], [0], [1], [0, 0, 1, 1], [], []>} : vector<49x8xf32>, vector<8x32xf32>, vector<49x32xf32> -> vector<49x32xf32>
    %141 = arith.addf %136, %140 : vector<49x32xf32>
    %c2_126 = arith.constant 2 : index
    %c0_127 = arith.constant 0 : index
    %c0_128 = arith.constant 0 : index
    %142 = vector.load %arg13[%c2_126, %c0_127, %c0_128] : memref<9x9x8xf32, #tpu.memory_space<vmem>>, vector<7x7x8xf32>
    %143 = vector.shape_cast %142 : vector<7x7x8xf32> to vector<49x8xf32>
    %c48_129 = arith.constant 48 : index
    %c0_130 = arith.constant 0 : index
    %144 = vector.load %arg10[%c48_129, %c0_130] : memref<72x32xf32, #tpu.memory_space<vmem>>, vector<8x32xf32>
    %cst_131 = arith.constant dense<0.000000e+00> : vector<49x32xf32>
    %145 = tpu.matmul %143, %144, %cst_131 {dimension_numbers = #tpu.dot_dimension_numbers<[1], [0], [0], [1], [0, 0, 1, 1], [], []>} : vector<49x8xf32>, vector<8x32xf32>, vector<49x32xf32> -> vector<49x32xf32>
    %146 = arith.addf %141, %145 : vector<49x32xf32>
    %c2_132 = arith.constant 2 : index
    %c1_133 = arith.constant 1 : index
    %c0_134 = arith.constant 0 : index
    %147 = vector.load %arg13[%c2_132, %c1_133, %c0_134] : memref<9x9x8xf32, #tpu.memory_space<vmem>>, vector<7x7x8xf32>
    %148 = vector.shape_cast %147 : vector<7x7x8xf32> to vector<49x8xf32>
    %c56_135 = arith.constant 56 : index
    %c0_136 = arith.constant 0 : index
    %149 = vector.load %arg10[%c56_135, %c0_136] : memref<72x32xf32, #tpu.memory_space<vmem>>, vector<8x32xf32>
    %cst_137 = arith.constant dense<0.000000e+00> : vector<49x32xf32>
    %150 = tpu.matmul %148, %149, %cst_137 {dimension_numbers = #tpu.dot_dimension_numbers<[1], [0], [0], [1], [0, 0, 1, 1], [], []>} : vector<49x8xf32>, vector<8x32xf32>, vector<49x32xf32> -> vector<49x32xf32>
    %151 = arith.addf %146, %150 : vector<49x32xf32>
    %c2_138 = arith.constant 2 : index
    %c2_139 = arith.constant 2 : index
    %c0_140 = arith.constant 0 : index
    %152 = vector.load %arg13[%c2_138, %c2_139, %c0_140] : memref<9x9x8xf32, #tpu.memory_space<vmem>>, vector<7x7x8xf32>
    %153 = vector.shape_cast %152 : vector<7x7x8xf32> to vector<49x8xf32>
    %c64_141 = arith.constant 64 : index
    %c0_142 = arith.constant 0 : index
    %154 = vector.load %arg10[%c64_141, %c0_142] : memref<72x32xf32, #tpu.memory_space<vmem>>, vector<8x32xf32>
    %cst_143 = arith.constant dense<0.000000e+00> : vector<49x32xf32>
    %155 = tpu.matmul %153, %154, %cst_143 {dimension_numbers = #tpu.dot_dimension_numbers<[1], [0], [0], [1], [0, 0, 1, 1], [], []>} : vector<49x8xf32>, vector<8x32xf32>, vector<49x32xf32> -> vector<49x32xf32>
    %156 = arith.addf %151, %155 : vector<49x32xf32>
    %c0_144 = arith.constant 0 : index
    %c0_145 = arith.constant 0 : index
    %157 = vector.load %arg11[%c0_144, %c0_145] : memref<1x32xf32, #tpu.memory_space<vmem>>, vector<1x32xf32>
    %158 = vector.broadcast %157 : vector<1x32xf32> to vector<49x32xf32>
    %159 = arith.addf %156, %158 : vector<49x32xf32>
    %cst_146 = arith.constant 0.000000e+00 : f32
    %160 = vector.broadcast %cst_146 : f32 to vector<49x32xf32>
    %161 = arith.maximumf %159, %160 : vector<49x32xf32>
    %c0_147 = arith.constant 0 : index
    %c0_148 = arith.constant 0 : index
    %c0_149 = arith.constant 0 : index
    %162 = vector.load %arg12[%c0_147, %c0_148, %c0_149] : memref<1x49x32xf32, #tpu.memory_space<vmem>>, vector<1x49x32xf32>
    %163 = vector.shape_cast %162 : vector<1x49x32xf32> to vector<49x32xf32>
    %164 = vector.shape_cast %161 : vector<49x32xf32> to vector<1x49x32xf32>
    tpu.vector_store %arg12[%c0_147, %c0_148, %c0_149], %164 {strides = array<i32>} : memref<1x49x32xf32, #tpu.memory_space<vmem>>, vector<1x49x32xf32>,
    return
  }
  func.func @transform_0(%arg0: i32) -> (i32, i32, i32) {
    %c0_i32 = arith.constant 0 : i32
    %c0_i32_0 = arith.constant 0 : i32
    %c0_i32_1 = arith.constant 0 : i32
    return %arg0, %c0_i32, %c0_i32_0 : i32, i32, i32
  }
  func.func @transform_1(%arg0: i32) -> (i32, i32) {
    %c0_i32 = arith.constant 0 : i32
    %c0_i32_0 = arith.constant 0 : i32
    %c0_i32_1 = arith.constant 0 : i32
    return %c0_i32, %c0_i32_0 : i32, i32
  }
  func.func @transform_2(%arg0: i32) -> (i32, i32) {
    %c0_i32 = arith.constant 0 : i32
    %c0_i32_0 = arith.constant 0 : i32
    %c0_i32_1 = arith.constant 0 : i32
    return %c0_i32, %c0_i32_0 : i32, i32
  }
  func.func @transform_3(%arg0: i32) -> (i32, i32) {
    %c0_i32 = arith.constant 0 : i32
    %c0_i32_0 = arith.constant 0 : i32
    %c0_i32_1 = arith.constant 0 : i32
    return %c0_i32, %c0_i32_0 : i32, i32
  }
  func.func @transform_4(%arg0: i32) -> (i32, i32) {
    %c0_i32 = arith.constant 0 : i32
    %c0_i32_0 = arith.constant 0 : i32
    %c0_i32_1 = arith.constant 0 : i32
    return %c0_i32, %c0_i32_0 : i32, i32
  }
  func.func @transform_5(%arg0: i32) -> (i32, i32) {
    %c0_i32 = arith.constant 0 : i32
    %c0_i32_0 = arith.constant 0 : i32
    %c0_i32_1 = arith.constant 0 : i32
    return %c0_i32, %c0_i32_0 : i32, i32
  }
  func.func @transform_6(%arg0: i32) -> (i32, i32) {
    %c0_i32 = arith.constant 0 : i32
    %c0_i32_0 = arith.constant 0 : i32
    %c0_i32_1 = arith.constant 0 : i32
    return %c0_i32, %c0_i32_0 : i32, i32
  }
  func.func @transform_7(%arg0: i32) -> (i32, i32) {
    %c0_i32 = arith.constant 0 : i32
    %c0_i32_0 = arith.constant 0 : i32
    %c0_i32_1 = arith.constant 0 : i32
    return %c0_i32, %c0_i32_0 : i32, i32
  }
  func.func @transform_8(%arg0: i32) -> (i32, i32) {
    %c0_i32 = arith.constant 0 : i32
    %c0_i32_0 = arith.constant 0 : i32
    %c0_i32_1 = arith.constant 0 : i32
    return %c0_i32, %c0_i32_0 : i32, i32
  }
  func.func @transform_9(%arg0: i32) -> (i32, i32) {
    %c0_i32 = arith.constant 0 : i32
    %c0_i32_0 = arith.constant 0 : i32
    %c0_i32_1 = arith.constant 0 : i32
    return %c0_i32, %c0_i32_0 : i32, i32
  }
  func.func @transform_10(%arg0: i32) -> (i32, i32) {
    %c0_i32 = arith.constant 0 : i32
    %c0_i32_0 = arith.constant 0 : i32
    %c0_i32_1 = arith.constant 0 : i32
    return %c0_i32, %c0_i32_0 : i32, i32
  }
  func.func @transform_11(%arg0: i32) -> (i32, i32, i32) {
    %c0_i32 = arith.constant 0 : i32
    %c0_i32_0 = arith.constant 0 : i32
    %c0_i32_1 = arith.constant 0 : i32
    return %arg0, %c0_i32, %c0_i32_0 : i32, i32, i32
  }
}

</mosaic_0001>

<llo_original>
// kernel: squeezenet_mini_forward.1
$region0: #{squeezenet_mini_forward.1}
  #allocation0 [shape = 'u32[]', space=smem, size = 0x4, offset = 0x4, fixed_abs, tag = 'smem constant byte address 0x4 - core index']
  #allocation1 [shape = 'u32[72,128]{1,0:T(1,128)}', space=vmem, size = 0x9000, scoped, tag = 'internal scratch']
  #allocation2 [shape = 'f32[9,9,8]{2,1,0:T(8,128)}', space=vmem, size = 0x12000, scoped, tag = 'scratch operand']
  %s0 = inlined_call_operand.vmem [shape: f32[2,225,27], index: 0, kind: input, shape index: {}]
  %s1 = inlined_call_operand.vmem [shape: f32[27,16], index: 1, kind: input, shape index: {}]
  %s2 = inlined_call_operand.vmem [shape: f32[1,16], index: 2, kind: input, shape index: {}]
  %s3 = inlined_call_operand.vmem [shape: f32[16,8], index: 3, kind: input, shape index: {}]
  %s4 = inlined_call_operand.vmem [shape: f32[1,8], index: 4, kind: input, shape index: {}, may-alias: {4,8}]
  %s5 = inlined_call_operand.vmem [shape: f32[72,32], index: 5, kind: input, shape index: {}]
  %s6 = inlined_call_operand.vmem [shape: f32[1,32], index: 6, kind: input, shape index: {}, may-alias: {6,10}]
  %s7 = inlined_call_operand.vmem [shape: f32[32,8], index: 7, kind: input, shape index: {}]
  %s8 = inlined_call_operand.vmem [shape: f32[1,8], index: 8, kind: input, shape index: {}, may-alias: {4,8}]
  %s9 = inlined_call_operand.vmem [shape: f32[72,32], index: 9, kind: input, shape index: {}]
  %s10 = inlined_call_operand.vmem [shape: f32[1,32], index: 10, kind: input, shape index: {}, may-alias: {6,10}]
  %s11 = inlined_call_operand.vmem [shape: f32[2,49,32], index: 11, kind: output, shape index: {}]
  %s12 = sld [smem:[#allocation0]]
  $region77: #{squeezenet_mini_forward.1} parent=0
    _
  %s14 = ssub.s32 1, %s12
  %s15 = scalar_select 0, %s14, %s12
  loop: start=0, step=1, limit=4
  $region2: #{squeezenet_mini_forward.1} parent=0 // loop_pre_header
    _
  $region3: #{squeezenet_mini_forward.1} parent=0 // loop_header
    %s17 = sphi 0, %s21
    %p18 = scmp.ge.s32.totalorder %s17, 4
    %s27 = sphi 0, %s29
    %s30 = sphi 0, %s27
    %s31 = sphi 0, %s30
    %s47 = sphi 0, %s31
    %s51 = sphi 0, %s51
    %s53 = sphi 0, %s51
    %s54 = sphi 0, %s53
    %s68 = sphi 0, %s54
    %s72 = sphi 0, %s72
    %s74 = sphi 0, %s72
    %s75 = sphi 0, %s74
    %s89 = sphi 0, %s75
    %s93 = sphi 0, %s93
    %s95 = sphi 0, %s93
    %s96 = sphi 0, %s95
    %s110 = sphi 0, %s96
    %s114 = sphi 0, %s114
    %s116 = sphi 0, %s114
    %s117 = sphi 0, %s116
    %s131 = sphi 0, %s117
    %s135 = sphi 0, %s135
    %s137 = sphi 0, %s135
    %s138 = sphi 0, %s137
    %s152 = sphi 0, %s138
    %s156 = sphi 0, %s156
    %s158 = sphi 0, %s156
    %s159 = sphi 0, %s158
    %s173 = sphi 0, %s159
    %s177 = sphi 0, %s177
    %s179 = sphi 0, %s177
    %s180 = sphi 0, %s179
    %s194 = sphi 0, %s180
    %s198 = sphi 0, %s198
    %s200 = sphi 0, %s198
    %s201 = sphi 0, %s200
    %s215 = sphi 0, %s201
    %s219 = sphi 0, %s219
    %s221 = sphi 0, %s219
    %s222 = sphi 0, %s221
    %s236 = sphi 0, %s222
    %s240 = sphi 0, %s240
    %s242 = sphi 0, %s240
    %s243 = sphi 0, %s242
    %s257 = sphi 0, %s243
    %s263 = sphi 0, %s265
    %s266 = sphi 0, %s263
    %s267 = sphi 0, %s266
    %s283 = sphi 0, %s267
  $region4: #{squeezenet_mini_forward.1} parent=0 // loop_header_branch
    %20 = sbr.rel (%p18) target = $region8
  $region5: #{squeezenet_mini_forward.1} parent=0 // loop_body
    %s22 = ssub.s32 %s17, 1
    %s23 = ssub.s32 %s17, 2
    %s24 = sadd.s32 %s17, 1
    %s25 = ssub.s32 %s17, %s24
    %p26 = scmp.eq.s32.totalorder %s25, 0
    %s28 = sadd.s32 %s27, 1
    %s29 = scalar_select %p26, %s27, %s28
    %p32 = pneg %p26
    %p33 = scmp.eq.s32.totalorder %s17, 1
    %p34 = por %p32, %p33
    %p35 = scmp.ne.s32.totalorder %s27, %s30
    %p36 = scmp.eq.s32.totalorder %s17, 0
    %p37 = por %p35, %p36
    %p38 = scmp.ne.s32.totalorder %s27, %s30
    %p39 = scmp.eq.s32.totalorder %s22, 1
    %p40 = por %p38, %p39
    %p41 = scmp.ne.s32.totalorder %s30, %s31
    %p42 = scmp.eq.s32.totalorder %s22, 0
    %p43 = por %p41, %p42
    %p44 = scmp.ne.s32.totalorder %s30, %s31
    %p45 = scmp.eq.s32.totalorder %s23, 1
    %p46 = por %p44, %p45
    %p48 = scmp.ne.s32.totalorder %s31, %s47
    %p49 = scmp.eq.s32.totalorder %s23, 0
    %p50 = por %p48, %p49
    %s52 = sadd.s32 %s51, 1
    %p55 = scmp.eq.s32.totalorder %s17, 1
    %p56 = scmp.ne.s32.totalorder %s51, %s53
    %p57 = scmp.eq.s32.totalorder %s17, 0
    %p58 = por %p56, %p57
    %p59 = scmp.ne.s32.totalorder %s51, %s53
    %p60 = scmp.eq.s32.totalorder %s22, 1
    %p61 = por %p59, %p60
    %p62 = scmp.ne.s32.totalorder %s53, %s54
    %p63 = scmp.eq.s32.totalorder %s22, 0
    %p64 = por %p62, %p63
    %p65 = scmp.ne.s32.totalorder %s53, %s54
    %p66 = scmp.eq.s32.totalorder %s23, 1
    %p67 = por %p65, %p66
    %p69 = scmp.ne.s32.totalorder %s54, %s68
    %p70 = scmp.eq.s32.totalorder %s23, 0
    %p71 = por %p69, %p70
    %s73 = sadd.s32 %s72, 1
    %p76 = scmp.eq.s32.totalorder %s17, 1
    %p77 = scmp.ne.s32.totalorder %s72, %s74
    %p78 = scmp.eq.s32.totalorder %s17, 0
    %p79 = por %p77, %p78
    %p80 = scmp.ne.s32.totalorder %s72, %s74
    %p81 = scmp.eq.s32.totalorder %s22, 1
    %p82 = por %p80, %p81
    %p83 = scmp.ne.s32.totalorder %s74, %s75
    %p84 = scmp.eq.s32.totalorder %s22, 0
    %p85 = por %p83, %p84
    %p86 = scmp.ne.s32.totalorder %s74, %s75
    %p87 = scmp.eq.s32.totalorder %s23, 1
    %p88 = por %p86, %p87
    %p90 = scmp.ne.s32.totalorder %s75, %s89
    %p91 = scmp.eq.s32.totalorder %s23, 0
    %p92 = por %p90, %p91
    %s94 = sadd.s32 %s93, 1
    %p97 = scmp.eq.s32.totalorder %s17, 1
    %p98 = scmp.ne.s32.totalorder %s93, %s95
    %p99 = scmp.eq.s32.totalorder %s17, 0
    %p100 = por %p98, %p99
    %p101 = scmp.ne.s32.totalorder %s93, %s95
    %p102 = scmp.eq.s32.totalorder %s22, 1
    %p103 = por %p101, %p102
    %p104 = scmp.ne.s32.totalorder %s95, %s96
    %p105 = scmp.eq.s32.totalorder %s22, 0
    %p106 = por %p104, %p105
    %p107 = scmp.ne.s32.totalorder %s95, %s96
    %p108 = scmp.eq.s32.totalorder %s23, 1
    %p109 = por %p107, %p108
    %p111 = scmp.ne.s32.totalorder %s96, %s110
    %p112 = scmp.eq.s32.totalorder %s23, 0
    %p113 = por %p111, %p112
    %s115 = sadd.s32 %s114, 1
    %p118 = scmp.eq.s32.totalorder %s17, 1
    %p119 = scmp.ne.s32.totalorder %s114, %s116
    %p120 = scmp.eq.s32.totalorder %s17, 0
    %p121 = por %p119, %p120
    %p122 = scmp.ne.s32.totalorder %s114, %s116
    %p123 = scmp.eq.s32.totalorder %s22, 1
    %p124 = por %p122, %p123
    %p125 = scmp.ne.s32.totalorder %s116, %s117
    %p126 = scmp.eq.s32.totalorder %s22, 0
    %p127 = por %p125, %p126
    %p128 = scmp.ne.s32.totalorder %s116, %s117
    %p129 = scmp.eq.s32.totalorder %s23, 1
    %p130 = por %p128, %p129
    %p132 = scmp.ne.s32.totalorder %s117, %s131
    %p133 = scmp.eq.s32.totalorder %s23, 0
    %p134 = por %p132, %p133
    %s136 = sadd.s32 %s135, 1
    %p139 = scmp.eq.s32.totalorder %s17, 1
    %p140 = scmp.ne.s32.totalorder %s135, %s137
    %p141 = scmp.eq.s32.totalorder %s17, 0
    %p142 = por %p140, %p141
    %p143 = scmp.ne.s32.totalorder %s135, %s137
    %p144 = scmp.eq.s32.totalorder %s22, 1
    %p145 = por %p143, %p144
    %p146 = scmp.ne.s32.totalorder %s137, %s138
    %p147 = scmp.eq.s32.totalorder %s22, 0
    %p148 = por %p146, %p147
    %p149 = scmp.ne.s32.totalorder %s137, %s138
    %p150 = scmp.eq.s32.totalorder %s23, 1
    %p151 = por %p149, %p150
    %p153 = scmp.ne.s32.totalorder %s138, %s152
    %p154 = scmp.eq.s32.totalorder %s23, 0
    %p155 = por %p153, %p154
    %s157 = sadd.s32 %s156, 1
    %p160 = scmp.eq.s32.totalorder %s17, 1
    %p161 = scmp.ne.s32.totalorder %s156, %s158
    %p162 = scmp.eq.s32.totalorder %s17, 0
    %p163 = por %p161, %p162
    %p164 = scmp.ne.s32.totalorder %s156, %s158
    %p165 = scmp.eq.s32.totalorder %s22, 1
    %p166 = por %p164, %p165
    %p167 = scmp.ne.s32.totalorder %s158, %s159
    %p168 = scmp.eq.s32.totalorder %s22, 0
    %p169 = por %p167, %p168
    %p170 = scmp.ne.s32.totalorder %s158, %s159
    %p171 = scmp.eq.s32.totalorder %s23, 1
    %p172 = por %p170, %p171
    %p174 = scmp.ne.s32.totalorder %s159, %s173
    %p175 = scmp.eq.s32.totalorder %s23, 0
    %p176 = por %p174, %p175
    %s178 = sadd.s32 %s177, 1
    %p181 = scmp.eq.s32.totalorder %s17, 1
    %p182 = scmp.ne.s32.totalorder %s177, %s179
    %p183 = scmp.eq.s32.totalorder %s17, 0
    %p184 = por %p182, %p183
    %p185 = scmp.ne.s32.totalorder %s177, %s179
    %p186 = scmp.eq.s32.totalorder %s22, 1
    %p187 = por %p185, %p186
    %p188 = scmp.ne.s32.totalorder %s179, %s180
    %p189 = scmp.eq.s32.totalorder %s22, 0
    %p190 = por %p188, %p189
    %p191 = scmp.ne.s32.totalorder %s179, %s180
    %p192 = scmp.eq.s32.totalorder %s23, 1
    %p193 = por %p191, %p192
    %p195 = scmp.ne.s32.totalorder %s180, %s194
    %p196 = scmp.eq.s32.totalorder %s23, 0
    %p197 = por %p195, %p196
    %s199 = sadd.s32 %s198, 1
    %p202 = scmp.eq.s32.totalorder %s17, 1
    %p203 = scmp.ne.s32.totalorder %s198, %s200
    %p204 = scmp.eq.s32.totalorder %s17, 0
    %p205 = por %p203, %p204
    %p206 = scmp.ne.s32.totalorder %s198, %s200
    %p207 = scmp.eq.s32.totalorder %s22, 1
    %p208 = por %p206, %p207
    %p209 = scmp.ne.s32.totalorder %s200, %s201
    %p210 = scmp.eq.s32.totalorder %s22, 0
    %p211 = por %p209, %p210
    %p212 = scmp.ne.s32.totalorder %s200, %s201
    %p213 = scmp.eq.s32.totalorder %s23, 1
    %p214 = por %p212, %p213
    %p216 = scmp.ne.s32.totalorder %s201, %s215
    %p217 = scmp.eq.s32.totalorder %s23, 0
    %p218 = por %p216, %p217
    %s220 = sadd.s32 %s219, 1
    %p223 = scmp.eq.s32.totalorder %s17, 1
    %p224 = scmp.ne.s32.totalorder %s219, %s221
    %p225 = scmp.eq.s32.totalorder %s17, 0
    %p226 = por %p224, %p225
    %p227 = scmp.ne.s32.totalorder %s219, %s221
    %p228 = scmp.eq.s32.totalorder %s22, 1
    %p229 = por %p227, %p228
    %p230 = scmp.ne.s32.totalorder %s221, %s222
    %p231 = scmp.eq.s32.totalorder %s22, 0
    %p232 = por %p230, %p231
    %p233 = scmp.ne.s32.totalorder %s221, %s222
    %p234 = scmp.eq.s32.totalorder %s23, 1
    %p235 = por %p233, %p234
    %p237 = scmp.ne.s32.totalorder %s222, %s236
    %p238 = scmp.eq.s32.totalorder %s23, 0
    %p239 = por %p237, %p238
    %s241 = sadd.s32 %s240, 1
    %p244 = scmp.eq.s32.totalorder %s17, 1
    %p245 = scmp.ne.s32.totalorder %s240, %s242
    %p246 = scmp.eq.s32.totalorder %s17, 0
    %p247 = por %p245, %p246
    %p248 = scmp.ne.s32.totalorder %s240, %s242
    %p249 = scmp.eq.s32.totalorder %s22, 1
    %p250 = por %p248, %p249
    %p251 = scmp.ne.s32.totalorder %s242, %s243
    %p252 = scmp.eq.s32.totalorder %s22, 0
    %p253 = por %p251, %p252
    %p254 = scmp.ne.s32.totalorder %s242, %s243
    %p255 = scmp.eq.s32.totalorder %s23, 1
    %p256 = por %p254, %p255
    %p258 = scmp.ne.s32.totalorder %s243, %s257
    %p259 = scmp.eq.s32.totalorder %s23, 0
    %p260 = por %p258, %p259
    %s261 = ssub.s32 %s17, %s24
    %p262 = scmp.eq.s32.totalorder %s261, 0
    %s264 = sadd.s32 %s263, 1
    %s265 = scalar_select %p262, %s263, %s264
    %p268 = pneg %p262
    %p269 = scmp.eq.s32.totalorder %s17, 1
    %p270 = por %p268, %p269
    %p271 = scmp.ne.s32.totalorder %s263, %s266
    %p272 = scmp.eq.s32.totalorder %s17, 0
    %p273 = por %p271, %p272
    %p274 = scmp.ne.s32.totalorder %s263, %s266
    %p275 = scmp.eq.s32.totalorder %s22, 1
    %p276 = por %p274, %p275
    %p277 = scmp.ne.s32.totalorder %s266, %s267
    %p278 = scmp.eq.s32.totalorder %s22, 0
    %p279 = por %p277, %p278
    %p280 = scmp.ne.s32.totalorder %s266, %s267
    %p281 = scmp.eq.s32.totalorder %s23, 1
    %p282 = por %p280, %p281
    %p284 = scmp.ne.s32.totalorder %s267, %s283
    %p285 = scmp.eq.s32.totalorder %s23, 0
    %p286 = por %p284, %p285
    %p287 = scmp.le.s32.totalorder 1, %s17
    %p288 = scmp.lt.s32.totalorder %s17, 3
    %p289 = pnand %p287, %p288
    %p290 = pneg %p289
    // Predicated region
    $region9: #{squeezenet_mini_forward.1} parent=5 // pred_check
      _
    $region10: #{squeezenet_mini_forward.1} parent=5 // pred_check_branch
      %292 = sbr.rel (%p289) target = $region12
    $region11: #{squeezenet_mini_forward.1} parent=5 // pred_region
      %s293 = ssub.s32 %s17, 1
      // Predicated region
      $region13: #{squeezenet_mini_forward.1} parent=11 // pred_check
        %p294 = pneg %p64
      $region14: #{squeezenet_mini_forward.1} parent=11 // pred_check_branch
        %296 = sbr.rel (%p294) target = $region16
      $region15: #{squeezenet_mini_forward.1} parent=11 // pred_region
        _
      $region16: #{squeezenet_mini_forward.1} parent=11 // pred_fallthru
        _
      // Predicated region
      $region17: #{squeezenet_mini_forward.1} parent=11 // pred_check
        %p297 = pneg %p85
      $region18: #{squeezenet_mini_forward.1} parent=11 // pred_check_branch
        %299 = sbr.rel (%p297) target = $region20
      $region19: #{squeezenet_mini_forward.1} parent=11 // pred_region
        _
      $region20: #{squeezenet_mini_forward.1} parent=11 // pred_fallthru
        _
      // Predicated region
      $region21: #{squeezenet_mini_forward.1} parent=11 // pred_check
        %p300 = pneg %p106
      $region22: #{squeezenet_mini_forward.1} parent=11 // pred_check_branch
        %302 = sbr.rel (%p300) target = $region24
      $region23: #{squeezenet_mini_forward.1} parent=11 // pred_region
        _
      $region24: #{squeezenet_mini_forward.1} parent=11 // pred_fallthru
        _
      // Predicated region
      $region25: #{squeezenet_mini_forward.1} parent=11 // pred_check
        %p303 = pneg %p127
      $region26: #{squeezenet_mini_forward.1} parent=11 // pred_check_branch
        %305 = sbr.rel (%p303) target = $region28
      $region27: #{squeezenet_mini_forward.1} parent=11 // pred_region
        _
      $region28: #{squeezenet_mini_forward.1} parent=11 // pred_fallthru
        _
      // Predicated region
      $region29: #{squeezenet_mini_forward.1} parent=11 // pred_check
        %p306 = pneg %p148
      $region30: #{squeezenet_mini_forward.1} parent=11 // pred_check_branch
        %308 = sbr.rel (%p306) target = $region32
      $region31: #{squeezenet_mini_forward.1} parent=11 // pred_region
        _
      $region32: #{squeezenet_mini_forward.1} parent=11 // pred_fallthru
        _
      // Predicated region
      $region33: #{squeezenet_mini_forward.1} parent=11 // pred_check
        %p309 = pneg %p169
      $region34: #{squeezenet_mini_forward.1} parent=11 // pred_check_branch
        %311 = sbr.rel (%p309) target = $region36
      $region35: #{squeezenet_mini_forward.1} parent=11 // pred_region
        _
      $region36: #{squeezenet_mini_forward.1} parent=11 // pred_fallthru
        _
      // Predicated region
      $region37: #{squeezenet_mini_forward.1} parent=11 // pred_check
        %p312 = pneg %p190
      $region38: #{squeezenet_mini_forward.1} parent=11 // pred_check_branch
        %314 = sbr.rel (%p312) target = $region40
      $region39: #{squeezenet_mini_forward.1} parent=11 // pred_region
        _
      $region40: #{squeezenet_mini_forward.1} parent=11 // pred_fallthru
        _
      // Predicated region
      $region41: #{squeezenet_mini_forward.1} parent=11 // pred_check
        %p315 = pneg %p211
      $region42: #{squeezenet_mini_forward.1} parent=11 // pred_check_branch
        %317 = sbr.rel (%p315) target = $region44
      $region43: #{squeezenet_mini_forward.1} parent=11 // pred_region
        _
      $region44: #{squeezenet_mini_forward.1} parent=11 // pred_fallthru
        _
      // Predicated region
      $region45: #{squeezenet_mini_forward.1} parent=11 // pred_check
        %p318 = pneg %p232
      $region46: #{squeezenet_mini_forward.1} parent=11 // pred_check_branch
        %320 = sbr.rel (%p318) target = $region48
      $region47: #{squeezenet_mini_forward.1} parent=11 // pred_region
        _
      $region48: #{squeezenet_mini_forward.1} parent=11 // pred_fallthru
        _
      // Predicated region
      $region49: #{squeezenet_mini_forward.1} parent=11 // pred_check
        %p321 = pneg %p253
      $region50: #{squeezenet_mini_forward.1} parent=11 // pred_check_branch
        %323 = sbr.rel (%p321) target = $region52
      $region51: #{squeezenet_mini_forward.1} parent=11 // pred_region
        _
      $region52: #{squeezenet_mini_forward.1} parent=11 // pred_fallthru
        _
    $region12: #{squeezenet_mini_forward.1} parent=5 // pred_fallthru
      _
    %p324 = scmp.lt.s32.totalorder %s17, 2
    // Predicated region
    $region53: #{squeezenet_mini_forward.1} parent=5 // pred_check
      %p325 = pneg %p324
    $region54: #{squeezenet_mini_forward.1} parent=5 // pred_check_branch
      %327 = sbr.rel (%p325) target = $region56
    $region55: #{squeezenet_mini_forward.1} parent=5 // pred_region
      // Predicated region
      $region57: #{squeezenet_mini_forward.1} parent=55 // pred_check
        %p328 = pneg %p37
      $region58: #{squeezenet_mini_forward.1} parent=55 // pred_check_branch
        %330 = sbr.rel (%p328) target = $region60
      $region59: #{squeezenet_mini_forward.1} parent=55 // pred_region
        %p331 = scmp.lt.s32.totalorder %s17, 1
        %s332 = scalar_select %p331, %s17, 1
        %s333 = smul.addr %s332, 29
        %s334 = smul.addr %s333, 8
        %s335 = scalar_lea.vmem %s0, %s334
      $region60: #{squeezenet_mini_forward.1} parent=55 // pred_fallthru
        _
    $region56: #{squeezenet_mini_forward.1} parent=5 // pred_fallthru
      _
    %p336 = scmp.le.s32.totalorder 1, %s17
    %p337 = scmp.lt.s32.totalorder %s17, 3
    %p338 = pnand %p336, %p337
    %p339 = pneg %p338
    // Predicated region
    $region61: #{squeezenet_mini_forward.1} parent=5 // pred_check
      _
    $region62: #{squeezenet_mini_forward.1} parent=5 // pred_check_branch
      %341 = sbr.rel (%p338) target = $region64
    $region63: #{squeezenet_mini_forward.1} parent=5 // pred_region
      %s342 = ssub.s32 %s17, 1
      %p343 = scmp.lt.s32.totalorder %s22, 1
      %s344 = scalar_select %p343, %s22, 1
      %s345 = smul.addr %s344, 29
      %s346 = smul.addr %s345, 8
      %s347 = scalar_lea.vmem %s0, %s346
      %p348 = pneg %p43
      %p349 = pneg %p40
      %p350 = pneg %p64
      %p351 = pneg %p61
      %p352 = pneg %p85
      %p353 = pneg %p82
      %p354 = pneg %p106
      %p355 = pneg %p103
      %p356 = pneg %p127
      %p357 = pneg %p124
      %p358 = pneg %p148
      %p359 = pneg %p145
      %p360 = pneg %p169
      %p361 = pneg %p166
      %p362 = pneg %p190
      %p363 = pneg %p187
      %p364 = pneg %p211
      %p365 = pneg %p208
      %p366 = pneg %p232
      %p367 = pneg %p229
      %p368 = pneg %p253
      %p369 = pneg %p250
      %p370 = pneg %p279
      %p371 = pneg %p276
      %p372 = scmp.lt.s32.totalorder %s22, 1
      %s373 = scalar_select %p372, %s22, 1
      %s374 = smul.addr %s373, 7
      %s375 = smul.addr %s374, 8
      %s376 = scalar_lea.vmem %s11, %s375
      %p377 = scmp.lt.s32.totalorder %s22, 1
      %s378 = scalar_select %p377, %s22, 1
      %s379 = smul.addr %s378, 29
      %s380 = smul.addr %s379, 8
      %s381 = scalar_lea.vmem %s0, %s380
      %p382 = scmp.lt.s32.totalorder %s22, 1
      %s383 = scalar_select %p382, %s22, 1
      %s384 = smul.addr %s383, 7
      %s385 = smul.addr %s384, 8
      %s386 = scalar_lea.vmem %s11, %s385
      %v387 = vld [vmem:[%s381] sm:$0xff]
      %v388 = vld [vmem:[%s381 + $0x8] sm:$0xff]
      %v389 = vld [vmem:[%s381 + $0x10] sm:$0xff]
      %v390 = vld [vmem:[%s381 + $0x18] sm:$0xff]
      %v391 = vld [vmem:[%s381 + $0x20] sm:$0xff]
      %v392 = vld [vmem:[%s381 + $0x28] sm:$0xff]
      %v393 = vld [vmem:[%s381 + $0x30] sm:$0xff]
      %v394 = vld [vmem:[%s381 + $0x38] sm:$0xff]
      %v395 = vld [vmem:[%s381 + $0x40] sm:$0xff]
      %v396 = vld [vmem:[%s381 + $0x48] sm:$0xff]
      %v397 = vld [vmem:[%s381 + $0x50] sm:$0xff]
      %v398 = vld [vmem:[%s381 + $0x58] sm:$0xff]
      %v399 = vld [vmem:[%s381 + $0x60] sm:$0xff]
      %v400 = vld [vmem:[%s381 + $0x68] sm:$0xff]
      %v401 = vld [vmem:[%s381 + $0x70] sm:$0xff]
      %v402 = vld [vmem:[%s381 + $0x78] sm:$0xff]
      %v403 = vld [vmem:[%s381 + $0x80] sm:$0xff]
      %v404 = vld [vmem:[%s381 + $0x88] sm:$0xff]
      %v405 = vld [vmem:[%s381 + $0x90] sm:$0xff]
      %v406 = vld [vmem:[%s381 + $0x98] sm:$0xff]
      %v407 = vld [vmem:[%s381 + $0xa0] sm:$0xff]
      %v408 = vld [vmem:[%s381 + $0xa8] sm:$0xff]
      %v409 = vld [vmem:[%s381 + $0xb0] sm:$0xff]
      %v410 = vld [vmem:[%s381 + $0xb8] sm:$0xff]
      %v411 = vld [vmem:[%s381 + $0xc0] sm:$0xff]
      %v412 = vld [vmem:[%s381 + $0xc8] sm:$0xff]
      %v413 = vld [vmem:[%s381 + $0xd0] sm:$0xff]
      %v414 = vld [vmem:[%s381 + $0xd8] sm:$0xff]
      %v415 = vld [vmem:[%s381 + $0xe0] sm:$0x1]
      %v416 = vld [vmem:[%s1] sm:$0xff]
      %v417 = vld [vmem:[%s1 + $0x8] sm:$0xff]
      %v418 = vld [vmem:[%s1 + $0x10] sm:$0xff]
      %v419 = vld [vmem:[%s1 + $0x18] sm:$0x7]
      %v420 = vld [vmem:[%s2] sm:$0x1]
      %v422 = vperm.slane %v420, 0
      %vm424 = vcmask 220160
      %v426 = vsel %vm424, %v387, 0
      %v429 = vsel %vm424, %v388, 0
      %v432 = vsel %vm424, %v389, 0
      %v435 = vsel %vm424, %v390, 0
      %v438 = vsel %vm424, %v391, 0
      %v441 = vsel %vm424, %v392, 0
      %v444 = vsel %vm424, %v393, 0
      %v447 = vsel %vm424, %v394, 0
      %v450 = vsel %vm424, %v395, 0
      %v453 = vsel %vm424, %v396, 0
      %v456 = vsel %vm424, %v397, 0
      %v459 = vsel %vm424, %v398, 0
      %v462 = vsel %vm424, %v399, 0
      %v465 = vsel %vm424, %v400, 0
      %v468 = vsel %vm424, %v401, 0
      %v471 = vsel %vm424, %v402, 0
      %v474 = vsel %vm424, %v403, 0
      %v477 = vsel %vm424, %v404, 0
      %v480 = vsel %vm424, %v405, 0
      %v483 = vsel %vm424, %v406, 0
      %v486 = vsel %vm424, %v407, 0
      %v489 = vsel %vm424, %v408, 0
      %v492 = vsel %vm424, %v409, 0
      %v495 = vsel %vm424, %v410, 0
      %v498 = vsel %vm424, %v411, 0
      %v501 = vsel %vm424, %v412, 0
      %v504 = vsel %vm424, %v413, 0
      %v507 = vsel %vm424, %v414, 0
      %v510 = vsel %vm424, %v415, 0
      %vm512 = vcmask 1042432
      %v514 = vsel %vm512, %v419, 0
      %516 = vmatpush.msra.mxu0 0.0
      %517 = vmatpush.msra.mxu0 0.0
      %518 = vmatpush.msra.mxu0 0.0
      %519 = vmatpush.msra.mxu0 0.0
      %520 = vmatpush.msra.mxu0 0.0
      %521 = vmatpush.msra.mxu0 0.0
      %522 = vmatpush.msra.mxu0 0.0
      %523 = vmatpush.msra.mxu0 0.0
      %524 = vmatpush.msra.mxu0 0.0
      %525 = vmatpush.msra.mxu0 0.0
      %526 = vmatpush.msra.mxu0 0.0
      %527 = vmatpush.msra.mxu0 0.0
      %528 = vmatpush.msra.mxu0 %v514
      %529 = vmatpush.msra.mxu0 %v418
      %530 = vmatpush.msra.mxu0 %v417
      %531 = vmatpush.msra.mxu0 %v416
      %532 = vmatmul.f32.gmra.mxu0 %v426
      %v533 = vpop.f32.mrf.mxu0
      %v534 = vadd.f32 %v422, %v533
      %535 = vmatmul.f32.gmra.mxu0 %v429
      %v536 = vpop.f32.mrf.mxu0
      %v537 = vadd.f32 %v422, %v536
      %538 = vmatmul.f32.gmra.mxu0 %v432
      %v539 = vpop.f32.mrf.mxu0
      %v540 = vadd.f32 %v422, %v539
      %541 = vmatmul.f32.gmra.mxu0 %v435
      %v542 = vpop.f32.mrf.mxu0
      %v543 = vadd.f32 %v422, %v542
      %544 = vmatmul.f32.gmra.mxu0 %v438
      %v545 = vpop.f32.mrf.mxu0
      %v546 = vadd.f32 %v422, %v545
      %547 = vmatmul.f32.gmra.mxu0 %v441
      %v548 = vpop.f32.mrf.mxu0
      %v549 = vadd.f32 %v422, %v548
      %550 = vmatmul.f32.gmra.mxu0 %v444
      %v551 = vpop.f32.mrf.mxu0
      %v552 = vadd.f32 %v422, %v551
      %553 = vmatmul.f32.gmra.mxu0 %v447
      %v554 = vpop.f32.mrf.mxu0
      %v555 = vadd.f32 %v422, %v554
      %556 = vmatmul.f32.gmra.mxu0 %v450
      %v557 = vpop.f32.mrf.mxu0
      %v558 = vadd.f32 %v422, %v557
      %559 = vmatmul.f32.gmra.mxu0 %v453
      %v560 = vpop.f32.mrf.mxu0
      %v561 = vadd.f32 %v422, %v560
      %562 = vmatmul.f32.gmra.mxu0 %v456
      %v563 = vpop.f32.mrf.mxu0
      %v564 = vadd.f32 %v422, %v563
      %565 = vmatmul.f32.gmra.mxu0 %v459
      %v566 = vpop.f32.mrf.mxu0
      %v567 = vadd.f32 %v422, %v566
      %568 = vmatmul.f32.gmra.mxu0 %v462
      %v569 = vpop.f32.mrf.mxu0
      %v570 = vadd.f32 %v422, %v569
      %571 = vmatmul.f32.gmra.mxu0 %v465
      %v572 = vpop.f32.mrf.mxu0
      %v573 = vadd.f32 %v422, %v572
      %574 = vmatmul.f32.gmra.mxu0 %v468
      %v575 = vpop.f32.mrf.mxu0
      %v576 = vadd.f32 %v422, %v575
      %577 = vmatmul.f32.gmra.mxu0 %v471
      %v578 = vpop.f32.mrf.mxu0
      %v579 = vadd.f32 %v422, %v578
      %580 = vmatmul.f32.gmra.mxu0 %v474
      %v581 = vpop.f32.mrf.mxu0
      %v582 = vadd.f32 %v422, %v581
      %583 = vmatmul.f32.gmra.mxu0 %v477
      %v584 = vpop.f32.mrf.mxu0
      %v585 = vadd.f32 %v422, %v584
      %586 = vmatmul.f32.gmra.mxu0 %v480
      %v587 = vpop.f32.mrf.mxu0
      %v588 = vadd.f32 %v422, %v587
      %589 = vmatmul.f32.gmra.mxu0 %v483
      %v590 = vpop.f32.mrf.mxu0
      %v591 = vadd.f32 %v422, %v590
      %592 = vmatmul.f32.gmra.mxu0 %v486
      %v593 = vpop.f32.mrf.mxu0
      %v594 = vadd.f32 %v422, %v593
      %595 = vmatmul.f32.gmra.mxu0 %v489
      %v596 = vpop.f32.mrf.mxu0
      %v597 = vadd.f32 %v422, %v596
      %598 = vmatmul.f32.gmra.mxu0 %v492
      %v599 = vpop.f32.mrf.mxu0
      %v600 = vadd.f32 %v422, %v599
      %601 = vmatmul.f32.gmra.mxu0 %v495
      %v602 = vpop.f32.mrf.mxu0
      %v603 = vadd.f32 %v422, %v602
      %604 = vmatmul.f32.gmra.mxu0 %v498
      %v605 = vpop.f32.mrf.mxu0
      %v606 = vadd.f32 %v422, %v605
      %607 = vmatmul.f32.gmra.mxu0 %v501
      %v608 = vpop.f32.mrf.mxu0
      %v609 = vadd.f32 %v422, %v608
      %610 = vmatmul.f32.gmra.mxu0 %v504
      %v611 = vpop.f32.mrf.mxu0
      %v612 = vadd.f32 %v422, %v611
      %613 = vmatmul.f32.gmra.mxu0 %v507
      %v614 = vpop.f32.mrf.mxu0
      %v615 = vadd.f32 %v422, %v614
      %616 = vmatmul.f32.gmra.mxu0 %v510
      %v617 = vpop.f32.mrf.mxu0
      %v618 = vadd.f32 %v422, %v617
      %619 = vdwg.mxu0
      %v620 = vmax.f32 %v534, 0.0
      %v621 = vmax.f32 %v537, 0.0
      %v622 = vmax.f32 %v540, 0.0
      %v623 = vmax.f32 %v543, 0.0
      %v624 = vmax.f32 %v546, 0.0
      %v625 = vmax.f32 %v549, 0.0
      %v626 = vmax.f32 %v552, 0.0
      %v627 = vmax.f32 %v555, 0.0
      %v628 = vmax.f32 %v558, 0.0
      %v629 = vmax.f32 %v561, 0.0
      %v630 = vmax.f32 %v564, 0.0
      %v631 = vmax.f32 %v567, 0.0
      %v632 = vmax.f32 %v570, 0.0
      %v633 = vmax.f32 %v573, 0.0
      %v634 = vmax.f32 %v576, 0.0
      %v635 = vmax.f32 %v579, 0.0
      %v636 = vmax.f32 %v582, 0.0
      %v637 = vmax.f32 %v585, 0.0
      %v638 = vmax.f32 %v588, 0.0
      %v639 = vmax.f32 %v591, 0.0
      %v640 = vmax.f32 %v594, 0.0
      %v641 = vmax.f32 %v597, 0.0
      %v642 = vmax.f32 %v600, 0.0
      %v643 = vmax.f32 %v603, 0.0
      %v644 = vmax.f32 %v606, 0.0
      %v645 = vmax.f32 %v609, 0.0
      %v646 = vmax.f32 %v612, 0.0
      %v647 = vmax.f32 %v615, 0.0
      %v648 = vmax.f32 %v618, 0.0
      %v656 = vrot.slane %v628, 1
      %v657 = vrot.slane %v628, 2
      %v658 = vrot.slane %v628, 3
      %v659 = vrot.slane %v628, 4
      %v660 = vrot.slane %v628, 5
      %v661 = vrot.slane %v628, 6
      %v662 = vrot.slane %v628, 7
      %v663 = vrot.slane %v629, 1
      %v664 = vrot.slane %v629, 2
      %v665 = vrot.slane %v629, 3
      %v666 = vrot.slane %v629, 4
      %v667 = vrot.slane %v629, 5
      %v668 = vrot.slane %v629, 6
      %v669 = vrot.slane %v629, 7
      %v670 = vrot.slane %v630, 1
      %v671 = vrot.slane %v630, 2
      %v672 = vrot.slane %v630, 3
      %v673 = vrot.slane %v630, 4
      %v674 = vrot.slane %v630, 5
      %v675 = vrot.slane %v630, 6
      %v676 = vrot.slane %v630, 7
      %v677 = vrot.slane %v631, 1
      %v678 = vrot.slane %v631, 2
      %v679 = vrot.slane %v631, 3
      %v680 = vrot.slane %v631, 4
      %v681 = vrot.slane %v631, 5
      %v682 = vrot.slane %v631, 6
      %v683 = vrot.slane %v631, 7
      %v684 = vrot.slane %v632, 1
      %v685 = vrot.slane %v632, 2
      %v686 = vrot.slane %v632, 3
      %v687 = vrot.slane %v632, 4
      %v688 = vrot.slane %v632, 5
      %v689 = vrot.slane %v632, 6
      %v690 = vrot.slane %v632, 7
      %v691 = vrot.slane %v633, 1
      %v692 = vrot.slane %v633, 2
      %v693 = vrot.slane %v633, 3
      %v694 = vrot.slane %v633, 4
      %v695 = vrot.slane %v633, 5
      %v696 = vrot.slane %v633, 6
      %v697 = vrot.slane %v633, 7
      %v698 = vrot.slane %v634, 1
      %v699 = vrot.slane %v634, 2
      %v700 = vrot.slane %v634, 3
      %v701 = vrot.slane %v634, 4
      %v702 = vrot.slane %v634, 5
      %v703 = vrot.slane %v634, 6
      %v704 = vrot.slane %v634, 7
      %v761 = vrot.slane %v642, 1
      %v762 = vrot.slane %v642, 2
      %v763 = vrot.slane %v642, 3
      %v764 = vrot.slane %v642, 4
      %v765 = vrot.slane %v642, 5
      %v766 = vrot.slane %v642, 6
      %v767 = vrot.slane %v642, 7
      %v768 = vrot.slane %v643, 1
      %v769 = vrot.slane %v643, 2
      %v770 = vrot.slane %v643, 3
      %v771 = vrot.slane %v643, 4
      %v772 = vrot.slane %v643, 5
      %v773 = vrot.slane %v643, 6
      %v774 = vrot.slane %v643, 7
      %v775 = vrot.slane %v644, 1
      %v776 = vrot.slane %v644, 2
      %v777 = vrot.slane %v644, 3
      %v778 = vrot.slane %v644, 4
      %v779 = vrot.slane %v644, 5
      %v780 = vrot.slane %v644, 6
      %v781 = vrot.slane %v644, 7
      %v782 = vrot.slane %v645, 1
      %v783 = vrot.slane %v645, 2
      %v784 = vrot.slane %v645, 3
      %v785 = vrot.slane %v645, 4
      %v786 = vrot.slane %v645, 5
      %v787 = vrot.slane %v645, 6
      %v788 = vrot.slane %v645, 7
      %v789 = vrot.slane %v646, 1
      %v790 = vrot.slane %v646, 2
      %v791 = vrot.slane %v646, 3
      %v792 = vrot.slane %v646, 4
      %v793 = vrot.slane %v646, 5
      %v794 = vrot.slane %v646, 6
      %v795 = vrot.slane %v646, 7
      %v796 = vrot.slane %v647, 1
      %v797 = vrot.slane %v647, 2
      %v798 = vrot.slane %v647, 3
      %v799 = vrot.slane %v647, 4
      %v800 = vrot.slane %v647, 5
      %v801 = vrot.slane %v647, 6
      %v802 = vrot.slane %v647, 7
      %v810 = vrot.slane %v620, 1
      %v811 = vrot.slane %v621, 1
      %v812 = vrot.slane %v622, 1
      %v813 = vrot.slane %v623, 1
      %v814 = vrot.slane %v624, 1
      %v815 = vrot.slane %v625, 1
      %v816 = vrot.slane %v626, 1
      %v824 = vmax.f32 %v620, %v810
      %v825 = vmax.f32 %v621, %v811
      %v826 = vmax.f32 %v622, %v812
      %v827 = vmax.f32 %v623, %v813
      %v828 = vmax.f32 %v624, %v814
      %v829 = vmax.f32 %v625, %v815
      %v830 = vmax.f32 %v626, %v816
      %v832 = vrot.slane %v627, 1
      %v834 = vmax.f32 %v627, %v832
      %v835 = vmax.f32 %v628, %v662
      %v836 = vmax.f32 %v656, %v629
      %v837 = vmax.f32 %v657, %v663
      %v838 = vmax.f32 %v658, %v664
      %v839 = vmax.f32 %v659, %v665
      %v840 = vmax.f32 %v660, %v666
      %v841 = vmax.f32 %v661, %v667
      %v842 = vmax.f32 %v662, %v668
      %v843 = vmax.f32 %v629, %v669
      %v844 = vmax.f32 %v663, %v630
      %v845 = vmax.f32 %v664, %v670
      %v846 = vmax.f32 %v665, %v671
      %v847 = vmax.f32 %v666, %v672
      %v848 = vmax.f32 %v667, %v673
      %v849 = vmax.f32 %v668, %v674
      %v850 = vmax.f32 %v669, %v675
      %v851 = vmax.f32 %v630, %v676
      %v852 = vmax.f32 %v670, %v631
      %v853 = vmax.f32 %v671, %v677
      %v854 = vmax.f32 %v672, %v678
      %v855 = vmax.f32 %v673, %v679
      %v856 = vmax.f32 %v674, %v680
      %v857 = vmax.f32 %v675, %v681
      %v858 = vmax.f32 %v676, %v682
      %v859 = vmax.f32 %v631, %v683
      %v860 = vmax.f32 %v677, %v632
      %v861 = vmax.f32 %v678, %v684
      %v862 = vmax.f32 %v679, %v685
      %v863 = vmax.f32 %v680, %v686
      %v864 = vmax.f32 %v681, %v687
      %v865 = vmax.f32 %v682, %v688
      %v866 = vmax.f32 %v683, %v689
      %v867 = vmax.f32 %v632, %v690
      %v868 = vmax.f32 %v684, %v633
      %v869 = vmax.f32 %v685, %v691
      %v870 = vmax.f32 %v686, %v692
      %v871 = vmax.f32 %v687, %v693
      %v872 = vmax.f32 %v688, %v694
      %v873 = vmax.f32 %v689, %v695
      %v874 = vmax.f32 %v690, %v696
      %v875 = vmax.f32 %v633, %v697
      %v876 = vmax.f32 %v691, %v634
      %v877 = vmax.f32 %v692, %v698
      %v878 = vmax.f32 %v693, %v699
      %v879 = vmax.f32 %v694, %v700
      %v880 = vmax.f32 %v695, %v701
      %v881 = vmax.f32 %v696, %v702
      %v882 = vmax.f32 %v697, %v703
      %v883 = vmax.f32 %v634, %v704
      %v891 = vrot.slane %v635, 1
      %v892 = vrot.slane %v636, 1
      %v893 = vrot.slane %v637, 1
      %v894 = vrot.slane %v638, 1
      %v895 = vrot.slane %v639, 1
      %v896 = vrot.slane %v640, 1
      %v897 = vrot.slane %v641, 1
      %v905 = vmax.f32 %v635, %v891
      %v906 = vmax.f32 %v636, %v892
      %v907 = vmax.f32 %v637, %v893
      %v908 = vmax.f32 %v638, %v894
      %v909 = vmax.f32 %v639, %v895
      %v910 = vmax.f32 %v640, %v896
      %v911 = vmax.f32 %v641, %v897
      %v912 = vmax.f32 %v824, %v825
      %v913 = vmax.f32 %v825, %v826
      %v914 = vmax.f32 %v826, %v827
      %v915 = vmax.f32 %v827, %v828
      %v916 = vmax.f32 %v828, %v829
      %v917 = vmax.f32 %v829, %v830
      %v918 = vmax.f32 %v830, %v834
      %v926 = vrot.slane %v905, 1
      %v927 = vrot.slane %v905, 2
      %v928 = vrot.slane %v905, 3
      %v929 = vrot.slane %v905, 4
      %v930 = vrot.slane %v905, 5
      %v931 = vrot.slane %v905, 6
      %v932 = vrot.slane %v906, 1
      %v933 = vrot.slane %v906, 2
      %v934 = vrot.slane %v906, 3
      %v935 = vrot.slane %v906, 4
      %v936 = vrot.slane %v906, 5
      %v937 = vrot.slane %v906, 6
      %v938 = vrot.slane %v907, 1
      %v939 = vrot.slane %v907, 2
      %v940 = vrot.slane %v907, 3
      %v941 = vrot.slane %v907, 4
      %v942 = vrot.slane %v907, 5
      %v943 = vrot.slane %v907, 6
      %v944 = vrot.slane %v908, 1
      %v945 = vrot.slane %v908, 2
      %v946 = vrot.slane %v908, 3
      %v947 = vrot.slane %v908, 4
      %v948 = vrot.slane %v908, 5
      %v949 = vrot.slane %v908, 6
      %v950 = vrot.slane %v909, 1
      %v951 = vrot.slane %v909, 2
      %v952 = vrot.slane %v909, 3
      %v953 = vrot.slane %v909, 4
      %v954 = vrot.slane %v909, 5
      %v955 = vrot.slane %v909, 6
      %v956 = vrot.slane %v910, 1
      %v957 = vrot.slane %v910, 2
      %v958 = vrot.slane %v910, 3
      %v959 = vrot.slane %v910, 4
      %v960 = vrot.slane %v910, 5
      %v961 = vrot.slane %v910, 6
      %v962 = vrot.slane %v911, 1
      %v963 = vrot.slane %v911, 2
      %v964 = vrot.slane %v911, 3
      %v965 = vrot.slane %v911, 4
      %v966 = vrot.slane %v911, 5
      %v967 = vrot.slane %v911, 6
      %v1010 = vmax.f32 %v835, %v905
      %v1011 = vmax.f32 %v836, %v926
      %v1012 = vmax.f32 %v837, %v927
      %v1013 = vmax.f32 %v838, %v928
      %v1014 = vmax.f32 %v839, %v929
      %v1015 = vmax.f32 %v840, %v930
      %v1016 = vmax.f32 %v841, %v931
      %v1017 = vmax.f32 %v842, %v906
      %v1018 = vmax.f32 %v843, %v932
      %v1019 = vmax.f32 %v844, %v933
      %v1020 = vmax.f32 %v845, %v934
      %v1021 = vmax.f32 %v846, %v935
      %v1022 = vmax.f32 %v847, %v936
      %v1023 = vmax.f32 %v848, %v937
      %v1024 = vmax.f32 %v849, %v907
      %v1025 = vmax.f32 %v850, %v938
      %v1026 = vmax.f32 %v851, %v939
      %v1027 = vmax.f32 %v852, %v940
      %v1028 = vmax.f32 %v853, %v941
      %v1029 = vmax.f32 %v854, %v942
      %v1030 = vmax.f32 %v855, %v943
      %v1031 = vmax.f32 %v856, %v908
      %v1032 = vmax.f32 %v857, %v944
      %v1033 = vmax.f32 %v858, %v945
      %v1034 = vmax.f32 %v859, %v946
      %v1035 = vmax.f32 %v860, %v947
      %v1036 = vmax.f32 %v861, %v948
      %v1037 = vmax.f32 %v862, %v949
      %v1038 = vmax.f32 %v863, %v909
      %v1039 = vmax.f32 %v864, %v950
      %v1040 = vmax.f32 %v865, %v951
      %v1041 = vmax.f32 %v866, %v952
      %v1042 = vmax.f32 %v867, %v953
      %v1043 = vmax.f32 %v868, %v954
      %v1044 = vmax.f32 %v869, %v955
      %v1045 = vmax.f32 %v870, %v910
      %v1046 = vmax.f32 %v871, %v956
      %v1047 = vmax.f32 %v872, %v957
      %v1048 = vmax.f32 %v873, %v958
      %v1049 = vmax.f32 %v874, %v959
      %v1050 = vmax.f32 %v875, %v960
      %v1051 = vmax.f32 %v876, %v961
      %v1052 = vmax.f32 %v877, %v911
      %v1053 = vmax.f32 %v878, %v962
      %v1054 = vmax.f32 %v879, %v963
      %v1055 = vmax.f32 %v880, %v964
      %v1056 = vmax.f32 %v881, %v965
      %v1057 = vmax.f32 %v882, %v966
      %v1058 = vmax.f32 %v883, %v967
      %1108 = vst [vmem:[#allocation1] ss:$9 sm:$0xff] %v1010
      %s1109 = scalar_lea.vmem [#allocation1], 1
      %1110 = vst [vmem:[%s1109] ss:$9 sm:$0xff] %v1011
      %s1111 = scalar_lea.vmem [#allocation1], 2
      %1112 = vst [vmem:[%s1111] ss:$9 sm:$0xff] %v1012
      %s1113 = scalar_lea.vmem [#allocation1], 3
      %1114 = vst [vmem:[%s1113] ss:$9 sm:$0xff] %v1013
      %s1115 = scalar_lea.vmem [#allocation1], 4
      %1116 = vst [vmem:[%s1115] ss:$9 sm:$0xff] %v1014
      %s1117 = scalar_lea.vmem [#allocation1], 5
      %1118 = vst [vmem:[%s1117] ss:$9 sm:$0xff] %v1015
      %s1119 = scalar_lea.vmem [#allocation1], 6
      %1120 = vst [vmem:[%s1119] ss:$9 sm:$0xff] %v1016
      %v1121 = vld [vmem:[#allocation1] sm:$0xff]
      %1122 = vst [vmem:[#allocation1] ss:$9 sm:$0xff] %v1017
      %1123 = vst [vmem:[%s1109] ss:$9 sm:$0xff] %v1018
      %1124 = vst [vmem:[%s1111] ss:$9 sm:$0xff] %v1019
      %1125 = vst [vmem:[%s1113] ss:$9 sm:$0xff] %v1020
      %1126 = vst [vmem:[%s1115] ss:$9 sm:$0xff] %v1021
      %1127 = vst [vmem:[%s1117] ss:$9 sm:$0xff] %v1022
      %1128 = vst [vmem:[%s1119] ss:$9 sm:$0xff] %v1023
      %v1129 = vld [vmem:[#allocation1] sm:$0xff]
      %1130 = vst [vmem:[#allocation1] ss:$9 sm:$0xff] %v1024
      %1131 = vst [vmem:[%s1109] ss:$9 sm:$0xff] %v1025
      %1132 = vst [vmem:[%s1111] ss:$9 sm:$0xff] %v1026
      %1133 = vst [vmem:[%s1113] ss:$9 sm:$0xff] %v1027
      %1134 = vst [vmem:[%s1115] ss:$9 sm:$0xff] %v1028
      %1135 = vst [vmem:[%s1117] ss:$9 sm:$0xff] %v1029
      %1136 = vst [vmem:[%s1119] ss:$9 sm:$0xff] %v1030
      %v1137 = vld [vmem:[#allocation1] sm:$0xff]
      %1138 = vst [vmem:[#allocation1] ss:$9 sm:$0xff] %v1031
      %1139 = vst [vmem:[%s1109] ss:$9 sm:$0xff] %v1032
      %1140 = vst [vmem:[%s1111] ss:$9 sm:$0xff] %v1033
      %1141 = vst [vmem:[%s1113] ss:$9 sm:$0xff] %v1034
      %1142 = vst [vmem:[%s1115] ss:$9 sm:$0xff] %v1035
      %1143 = vst [vmem:[%s1117] ss:$9 sm:$0xff] %v1036
      %1144 = vst [vmem:[%s1119] ss:$9 sm:$0xff] %v1037
      %v1145 = vld [vmem:[#allocation1] sm:$0xff]
      %1146 = vst [vmem:[#allocation1] ss:$9 sm:$0xff] %v1038
      %1147 = vst [vmem:[%s1109] ss:$9 sm:$0xff] %v1039
      %1148 = vst [vmem:[%s1111] ss:$9 sm:$0xff] %v1040
      %1149 = vst [vmem:[%s1113] ss:$9 sm:$0xff] %v1041
      %1150 = vst [vmem:[%s1115] ss:$9 sm:$0xff] %v1042
      %1151 = vst [vmem:[%s1117] ss:$9 sm:$0xff] %v1043
      %1152 = vst [vmem:[%s1119] ss:$9 sm:$0xff] %v1044
      %v1153 = vld [vmem:[#allocation1] sm:$0xff]
      %1154 = vst [vmem:[#allocation1] ss:$9 sm:$0xff] %v1045
      %1155 = vst [vmem:[%s1109] ss:$9 sm:$0xff] %v1046
      %1156 = vst [vmem:[%s1111] ss:$9 sm:$0xff] %v1047
      %1157 = vst [vmem:[%s1113] ss:$9 sm:$0xff] %v1048
      %1158 = vst [vmem:[%s1115] ss:$9 sm:$0xff] %v1049
      %1159 = vst [vmem:[%s1117] ss:$9 sm:$0xff] %v1050
      %1160 = vst [vmem:[%s1119] ss:$9 sm:$0xff] %v1051
      %v1161 = vld [vmem:[#allocation1] sm:$0xff]
      %1162 = vst [vmem:[#allocation1] ss:$9 sm:$0xff] %v1052
      %1163 = vst [vmem:[%s1109] ss:$9 sm:$0xff] %v1053
      %1164 = vst [vmem:[%s1111] ss:$9 sm:$0xff] %v1054
      %1165 = vst [vmem:[%s1113] ss:$9 sm:$0xff] %v1055
      %1166 = vst [vmem:[%s1115] ss:$9 sm:$0xff] %v1056
      %1167 = vst [vmem:[%s1117] ss:$9 sm:$0xff] %v1057
      %1168 = vst [vmem:[%s1119] ss:$9 sm:$0xff] %v1058
      %v1169 = vld [vmem:[#allocation1] sm:$0xff]
      %v1177 = vmax.f32 %v912, %v1121
      %v1178 = vmax.f32 %v913, %v1129
      %v1179 = vmax.f32 %v914, %v1137
      %v1180 = vmax.f32 %v915, %v1145
      %v1181 = vmax.f32 %v916, %v1153
      %v1182 = vmax.f32 %v917, %v1161
      %v1183 = vmax.f32 %v918, %v1169
      %1184 = vst [vmem:[#allocation1] ss:$9 sm:$0xff] %v642
      %s1185 = scalar_lea.vmem [#allocation1], 1
      %1186 = vst [vmem:[%s1185] ss:$9 sm:$0xff] %v761
      %s1187 = scalar_lea.vmem [#allocation1], 2
      %1188 = vst [vmem:[%s1187] ss:$9 sm:$0xff] %v762
      %s1189 = scalar_lea.vmem [#allocation1], 3
      %1190 = vst [vmem:[%s1189] ss:$9 sm:$0xff] %v763
      %s1191 = scalar_lea.vmem [#allocation1], 4
      %1192 = vst [vmem:[%s1191] ss:$9 sm:$0xff] %v764
      %s1193 = scalar_lea.vmem [#allocation1], 5
      %1194 = vst [vmem:[%s1193] ss:$9 sm:$0xff] %v765
      %s1195 = scalar_lea.vmem [#allocation1], 6
      %1196 = vst [vmem:[%s1195] ss:$9 sm:$0xff] %v766
      %v1197 = vld [vmem:[#allocation1] sm:$0xff]
      %1198 = vst [vmem:[#allocation1] ss:$9 sm:$0xff] %v767
      %1199 = vst [vmem:[%s1185] ss:$9 sm:$0xff] %v643
      %1200 = vst [vmem:[%s1187] ss:$9 sm:$0xff] %v768
      %1201 = vst [vmem:[%s1189] ss:$9 sm:$0xff] %v769
      %1202 = vst [vmem:[%s1191] ss:$9 sm:$0xff] %v770
      %1203 = vst [vmem:[%s1193] ss:$9 sm:$0xff] %v771
      %1204 = vst [vmem:[%s1195] ss:$9 sm:$0xff] %v772
      %v1205 = vld [vmem:[#allocation1] sm:$0xff]
      %1206 = vst [vmem:[#allocation1] ss:$9 sm:$0xff] %v773
      %1207 = vst [vmem:[%s1185] ss:$9 sm:$0xff] %v774
      %1208 = vst [vmem:[%s1187] ss:$9 sm:$0xff] %v644
      %1209 = vst [vmem:[%s1189] ss:$9 sm:$0xff] %v775
      %1210 = vst [vmem:[%s1191] ss:$9 sm:$0xff] %v776
      %1211 = vst [vmem:[%s1193] ss:$9 sm:$0xff] %v777
      %1212 = vst [vmem:[%s1195] ss:$9 sm:$0xff] %v778
      %v1213 = vld [vmem:[#allocation1] sm:$0xff]
      %1214 = vst [vmem:[#allocation1] ss:$9 sm:$0xff] %v779
      %1215 = vst [vmem:[%s1185] ss:$9 sm:$0xff] %v780
      %1216 = vst [vmem:[%s1187] ss:$9 sm:$0xff] %v781
      %1217 = vst [vmem:[%s1189] ss:$9 sm:$0xff] %v645
      %1218 = vst [vmem:[%s1191] ss:$9 sm:$0xff] %v782
      %1219 = vst [vmem:[%s1193] ss:$9 sm:$0xff] %v783
      %1220 = vst [vmem:[%s1195] ss:$9 sm:$0xff] %v784
      %v1221 = vld [vmem:[#allocation1] sm:$0xff]
      %1222 = vst [vmem:[#allocation1] ss:$9 sm:$0xff] %v785
      %1223 = vst [vmem:[%s1185] ss:$9 sm:$0xff] %v786
      %1224 = vst [vmem:[%s1187] ss:$9 sm:$0xff] %v787
      %1225 = vst [vmem:[%s1189] ss:$9 sm:$0xff] %v788
      %1226 = vst [vmem:[%s1191] ss:$9 sm:$0xff] %v646
      %1227 = vst [vmem:[%s1193] ss:$9 sm:$0xff] %v789
      %1228 = vst [vmem:[%s1195] ss:$9 sm:$0xff] %v790
      %v1229 = vld [vmem:[#allocation1] sm:$0xff]
      %1230 = vst [vmem:[#allocation1] ss:$9 sm:$0xff] %v791
      %1231 = vst [vmem:[%s1185] ss:$9 sm:$0xff] %v792
      %1232 = vst [vmem:[%s1187] ss:$9 sm:$0xff] %v793
      %1233 = vst [vmem:[%s1189] ss:$9 sm:$0xff] %v794
      %1234 = vst [vmem:[%s1191] ss:$9 sm:$0xff] %v795
      %1235 = vst [vmem:[%s1193] ss:$9 sm:$0xff] %v647
      %1236 = vst [vmem:[%s1195] ss:$9 sm:$0xff] %v796
      %v1237 = vld [vmem:[#allocation1] sm:$0xff]
      %1238 = vst [vmem:[#allocation1] ss:$9 sm:$0xff] %v797
      %1239 = vst [vmem:[%s1185] ss:$9 sm:$0xff] %v798
      %1240 = vst [vmem:[%s1187] ss:$9 sm:$0xff] %v799
      %1241 = vst [vmem:[%s1189] ss:$9 sm:$0xff] %v800
      %1242 = vst [vmem:[%s1191] ss:$9 sm:$0xff] %v801
      %1243 = vst [vmem:[%s1193] ss:$9 sm:$0xff] %v802
      %1244 = vst [vmem:[%s1195] ss:$9 sm:$0xff] %v648
      %v1245 = vld [vmem:[#allocation1] sm:$0xff]
      %v1253 = vmax.f32 %v1177, %v1197
      %v1254 = vmax.f32 %v1178, %v1205
      %v1255 = vmax.f32 %v1179, %v1213
      %v1256 = vmax.f32 %v1180, %v1221
      %v1257 = vmax.f32 %v1181, %v1229
      %v1258 = vmax.f32 %v1182, %v1237
      %v1259 = vmax.f32 %v1183, %v1245
      %v1267 = vrot.slane %v1253, 1
      %v1268 = vrot.slane %v1253, 2
      %v1269 = vrot.slane %v1253, 3
      %v1270 = vrot.slane %v1253, 4
      %v1271 = vrot.slane %v1253, 5
      %v1272 = vrot.slane %v1253, 6
      %v1273 = vrot.slane %v1254, 1
      %v1274 = vrot.slane %v1254, 2
      %v1275 = vrot.slane %v1254, 3
      %v1276 = vrot.slane %v1254, 4
      %v1277 = vrot.slane %v1254, 5
      %v1278 = vrot.slane %v1254, 6
      %v1279 = vrot.slane %v1255, 1
      %v1280 = vrot.slane %v1255, 2
      %v1281 = vrot.slane %v1255, 3
      %v1282 = vrot.slane %v1255, 4
      %v1283 = vrot.slane %v1255, 5
      %v1284 = vrot.slane %v1255, 6
      %v1285 = vrot.slane %v1256, 1
      %v1286 = vrot.slane %v1256, 2
      %v1287 = vrot.slane %v1256, 3
      %v1288 = vrot.slane %v1256, 4
      %v1289 = vrot.slane %v1256, 5
      %v1290 = vrot.slane %v1256, 6
      %v1291 = vrot.slane %v1257, 1
      %v1292 = vrot.slane %v1257, 2
      %v1293 = vrot.slane %v1257, 3
      %v1294 = vrot.slane %v1257, 4
      %v1295 = vrot.slane %v1257, 5
      %v1296 = vrot.slane %v1257, 6
      %v1297 = vrot.slane %v1258, 1
      %v1298 = vrot.slane %v1258, 2
      %v1299 = vrot.slane %v1258, 3
      %v1300 = vrot.slane %v1258, 4
      %v1301 = vrot.slane %v1258, 5
      %v1302 = vrot.slane %v1258, 6
      %v1303 = vrot.slane %v1259, 1
      %v1304 = vrot.slane %v1259, 2
      %v1305 = vrot.slane %v1259, 3
      %v1306 = vrot.slane %v1259, 4
      %v1307 = vrot.slane %v1259, 5
      %v1308 = vrot.slane %v1259, 6
      %vm1309 = vcmask 64512
      %1310 = vst.msk [vmem:[#allocation2] sm:$0xff] %vm1309, 0.0
      %vm1311 = vcmask 57344
      %1312 = vst.msk [vmem:[#allocation2 + $0x8] sm:$0x1] %vm1311, 0.0
      %s1313 = scalar_lea.vmem [#allocation2], 128
      %1314 = vst.msk [vmem:[%s1313] sm:$0xff] %vm1309, 0.0
      %1315 = vst.msk [vmem:[%s1313 + $0x8] sm:$0x1] %vm1311, 0.0
      %1316 = vst.msk [vmem:[#allocation2] sm:$0x1] %vm1311, 0.0
      %1317 = vst.msk [vmem:[#allocation2 + $0x10] sm:$0x1] %vm1311, 0.0
      %1318 = vst.msk [vmem:[#allocation2 + $0x20] sm:$0x1] %vm1311, 0.0
      %1319 = vst.msk [vmem:[#allocation2 + $0x30] sm:$0x1] %vm1311, 0.0
      %1320 = vst.msk [vmem:[#allocation2 + $0x40] sm:$0x1] %vm1311, 0.0
      %1321 = vst.msk [vmem:[#allocation2 + $0x50] sm:$0x1] %vm1311, 0.0
      %1322 = vst.msk [vmem:[#allocation2 + $0x60] sm:$0x1] %vm1311, 0.0
      %1323 = vst.msk [vmem:[#allocation2 + $0x70] sm:$0x1] %vm1311, 0.0
      %1324 = vst.msk [vmem:[#allocation2 + $0x80] sm:$0x1] %vm1311, 0.0
      %1325 = vst.msk [vmem:[#allocation2 + $0x8] sm:$0x1] %vm1311, 0.0
      %1326 = vst.msk [vmem:[#allocation2 + $0x18] sm:$0x1] %vm1311, 0.0
      %1327 = vst.msk [vmem:[#allocation2 + $0x28] sm:$0x1] %vm1311, 0.0
      %1328 = vst.msk [vmem:[#allocation2 + $0x38] sm:$0x1] %vm1311, 0.0
      %1329 = vst.msk [vmem:[#allocation2 + $0x48] sm:$0x1] %vm1311, 0.0
      %1330 = vst.msk [vmem:[#allocation2 + $0x58] sm:$0x1] %vm1311, 0.0
      %1331 = vst.msk [vmem:[#allocation2 + $0x68] sm:$0x1] %vm1311, 0.0
      %1332 = vst.msk [vmem:[#allocation2 + $0x78] sm:$0x1] %vm1311, 0.0
      %1333 = vst.msk [vmem:[#allocation2 + $0x88] sm:$0x1] %vm1311, 0.0
      %v1334 = vld [vmem:[%s3] sm:$0xff]
      %v1335 = vld [vmem:[%s3 + $0x8] sm:$0xff]
      %v1336 = vld [vmem:[%s4] sm:$0x1]
      %v1338 = vperm.slane %v1336, 0
      %1340 = vst [vmem:[#allocation1] ss:$9 sm:$0xff] %v1253
      %s1341 = scalar_lea.vmem [#allocation1], 1
      %1342 = vst [vmem:[%s1341] ss:$9 sm:$0xff] %v1267
      %s1343 = scalar_lea.vmem [#allocation1], 2
      %1344 = vst [vmem:[%s1343] ss:$9 sm:$0xff] %v1268
      %s1345 = scalar_lea.vmem [#allocation1], 3
      %1346 = vst [vmem:[%s1345] ss:$9 sm:$0xff] %v1269
      %s1347 = scalar_lea.vmem [#allocation1], 4
      %1348 = vst [vmem:[%s1347] ss:$9 sm:$0xff] %v1270
      %s1349 = scalar_lea.vmem [#allocation1], 5
      %1350 = vst [vmem:[%s1349] ss:$9 sm:$0xff] %v1271
      %s1351 = scalar_lea.vmem [#allocation1], 6
      %1352 = vst [vmem:[%s1351] ss:$9 sm:$0xff] %v1272
      %s1353 = scalar_lea.vmem [#allocation1], 7
      %1354 = vst [vmem:[%s1353] ss:$9 sm:$0xff] %v1254
      %v1355 = vld [vmem:[#allocation1] sm:$0xff]
      %1356 = vst [vmem:[#allocation1] ss:$9 sm:$0xff] %v1273
      %1357 = vst [vmem:[%s1341] ss:$9 sm:$0xff] %v1274
      %1358 = vst [vmem:[%s1343] ss:$9 sm:$0xff] %v1275
      %1359 = vst [vmem:[%s1345] ss:$9 sm:$0xff] %v1276
      %1360 = vst [vmem:[%s1347] ss:$9 sm:$0xff] %v1277
      %1361 = vst [vmem:[%s1349] ss:$9 sm:$0xff] %v1278
      %1362 = vst [vmem:[%s1351] ss:$9 sm:$0xff] %v1255
      %1363 = vst [vmem:[%s1353] ss:$9 sm:$0xff] %v1279
      %v1364 = vld [vmem:[#allocation1] sm:$0xff]
      %1365 = vst [vmem:[#allocation1] ss:$9 sm:$0xff] %v1280
      %1366 = vst [vmem:[%s1341] ss:$9 sm:$0xff] %v1281
      %1367 = vst [vmem:[%s1343] ss:$9 sm:$0xff] %v1282
      %1368 = vst [vmem:[%s1345] ss:$9 sm:$0xff] %v1283
      %1369 = vst [vmem:[%s1347] ss:$9 sm:$0xff] %v1284
      %1370 = vst [vmem:[%s1349] ss:$9 sm:$0xff] %v1256
      %1371 = vst [vmem:[%s1351] ss:$9 sm:$0xff] %v1285
      %1372 = vst [vmem:[%s1353] ss:$9 sm:$0xff] %v1286
      %v1373 = vld [vmem:[#allocation1] sm:$0xff]
      %1374 = vst [vmem:[#allocation1] ss:$9 sm:$0xff] %v1287
      %1375 = vst [vmem:[%s1341] ss:$9 sm:$0xff] %v1288
      %1376 = vst [vmem:[%s1343] ss:$9 sm:$0xff] %v1289
      %1377 = vst [vmem:[%s1345] ss:$9 sm:$0xff] %v1290
      %1378 = vst [vmem:[%s1347] ss:$9 sm:$0xff] %v1257
      %1379 = vst [vmem:[%s1349] ss:$9 sm:$0xff] %v1291
      %1380 = vst [vmem:[%s1351] ss:$9 sm:$0xff] %v1292
      %1381 = vst [vmem:[%s1353] ss:$9 sm:$0xff] %v1293
      %v1382 = vld [vmem:[#allocation1] sm:$0xff]
      %1383 = vst [vmem:[#allocation1] ss:$9 sm:$0xff] %v1294
      %1384 = vst [vmem:[%s1341] ss:$9 sm:$0xff] %v1295
      %1385 = vst [vmem:[%s1343] ss:$9 sm:$0xff] %v1296
      %1386 = vst [vmem:[%s1345] ss:$9 sm:$0xff] %v1258
      %1387 = vst [vmem:[%s1347] ss:$9 sm:$0xff] %v1297
      %1388 = vst [vmem:[%s1349] ss:$9 sm:$0xff] %v1298
      %1389 = vst [vmem:[%s1351] ss:$9 sm:$0xff] %v1299
      %1390 = vst [vmem:[%s1353] ss:$9 sm:$0xff] %v1300
      %v1391 = vld [vmem:[#allocation1] sm:$0xff]
      %1392 = vst [vmem:[#allocation1] ss:$9 sm:$0xff] %v1301
      %1393 = vst [vmem:[%s1341] ss:$9 sm:$0xff] %v1302
      %1394 = vst [vmem:[%s1343] ss:$9 sm:$0xff] %v1259
      %1395 = vst [vmem:[%s1345] ss:$9 sm:$0xff] %v1303
      %1396 = vst [vmem:[%s1347] ss:$9 sm:$0xff] %v1304
      %1397 = vst [vmem:[%s1349] ss:$9 sm:$0xff] %v1305
      %1398 = vst [vmem:[%s1351] ss:$9 sm:$0xff] %v1306
      %1399 = vst [vmem:[%s1353] ss:$9 sm:$0xff] %v1307
      %v1400 = vld [vmem:[#allocation1] sm:$0xff]
      %1401 = vst [vmem:[#allocation1] ss:$9 sm:$0xff] %v1308
      %v1402 = vld [vmem:[#allocation1] sm:$0xff]
      %vm1403 = vcmask 130048
      %v1404 = vsel %vm1403, %v1355, 0
      %v1406 = vsel %vm1403, %v1364, 0
      %v1408 = vsel %vm1403, %v1373, 0
      %v1410 = vsel %vm1403, %v1382, 0
      %v1412 = vsel %vm1403, %v1391, 0
      %v1414 = vsel %vm1403, %v1400, 0
      %v1416 = vsel %vm1403, %v1402, 0
      %1418 = vmatpush.msra.mxu0 0.0
      %1419 = vmatpush.msra.mxu0 0.0
      %1420 = vmatpush.msra.mxu0 0.0
      %1421 = vmatpush.msra.mxu0 0.0
      %1422 = vmatpush.msra.mxu0 0.0
      %1423 = vmatpush.msra.mxu0 0.0
      %1424 = vmatpush.msra.mxu0 0.0
      %1425 = vmatpush.msra.mxu0 0.0
      %1426 = vmatpush.msra.mxu0 0.0
      %1427 = vmatpush.msra.mxu0 0.0
      %1428 = vmatpush.msra.mxu0 0.0
      %1429 = vmatpush.msra.mxu0 0.0
      %1430 = vmatpush.msra.mxu0 0.0
      %1431 = vmatpush.msra.mxu0 0.0
      %1432 = vmatpush.msra.mxu0 %v1335
      %1433 = vmatpush.msra.mxu0 %v1334
      %1434 = vmatmul.f32.gmra.mxu0 %v1404
      %v1435 = vpop.f32.mrf.mxu0
      %v1436 = vadd.f32 %v1338, %v1435
      %1437 = vmatmul.f32.gmra.mxu0 %v1406
      %v1438 = vpop.f32.mrf.mxu0
      %v1439 = vadd.f32 %v1338, %v1438
      %1440 = vmatmul.f32.gmra.mxu0 %v1408
      %v1441 = vpop.f32.mrf.mxu0
      %v1442 = vadd.f32 %v1338, %v1441
      %1443 = vmatmul.f32.gmra.mxu0 %v1410
      %v1444 = vpop.f32.mrf.mxu0
      %v1445 = vadd.f32 %v1338, %v1444
      %1446 = vmatmul.f32.gmra.mxu0 %v1412
      %v1447 = vpop.f32.mrf.mxu0
      %v1448 = vadd.f32 %v1338, %v1447
      %1449 = vmatmul.f32.gmra.mxu0 %v1414
      %v1450 = vpop.f32.mrf.mxu0
      %v1451 = vadd.f32 %v1338, %v1450
      %1452 = vmatmul.f32.gmra.mxu0 %v1416
      %v1453 = vpop.f32.mrf.mxu0
      %v1454 = vadd.f32 %v1338, %v1453
      %1455 = vdwg.mxu0
      %v1456 = vmax.f32 %v1436, 0.0
      %v1457 = vmax.f32 %v1439, 0.0
      %v1458 = vmax.f32 %v1442, 0.0
      %v1459 = vmax.f32 %v1445, 0.0
      %v1460 = vmax.f32 %v1448, 0.0
      %v1461 = vmax.f32 %v1451, 0.0
      %v1462 = vmax.f32 %v1454, 0.0
      %v1470 = vrot.slane %v1456, 1
      %v1471 = vrot.slane %v1456, 2
      %v1472 = vrot.slane %v1456, 3
      %v1473 = vrot.slane %v1456, 4
      %v1474 = vrot.slane %v1456, 5
      %v1475 = vrot.slane %v1456, 6
      %v1476 = vrot.slane %v1456, 7
      %v1477 = vrot.slane %v1457, 1
      %v1478 = vrot.slane %v1457, 2
      %v1479 = vrot.slane %v1457, 3
      %v1480 = vrot.slane %v1457, 4
      %v1481 = vrot.slane %v1457, 5
      %v1482 = vrot.slane %v1457, 6
      %v1483 = vrot.slane %v1457, 7
      %v1484 = vrot.slane %v1458, 1
      %v1485 = vrot.slane %v1458, 2
      %v1486 = vrot.slane %v1458, 3
      %v1487 = vrot.slane %v1458, 4
      %v1488 = vrot.slane %v1458, 5
      %v1489 = vrot.slane %v1458, 6
      %v1490 = vrot.slane %v1458, 7
      %v1491 = vrot.slane %v1459, 1
      %v1492 = vrot.slane %v1459, 2
      %v1493 = vrot.slane %v1459, 3
      %v1494 = vrot.slane %v1459, 4
      %v1495 = vrot.slane %v1459, 5
      %v1496 = vrot.slane %v1459, 6
      %v1497 = vrot.slane %v1459, 7
      %v1498 = vrot.slane %v1460, 1
      %v1499 = vrot.slane %v1460, 2
      %v1500 = vrot.slane %v1460, 3
      %v1501 = vrot.slane %v1460, 4
      %v1502 = vrot.slane %v1460, 5
      %v1503 = vrot.slane %v1460, 6
      %v1504 = vrot.slane %v1460, 7
      %v1505 = vrot.slane %v1461, 1
      %v1506 = vrot.slane %v1461, 2
      %v1507 = vrot.slane %v1461, 3
      %v1508 = vrot.slane %v1461, 4
      %v1509 = vrot.slane %v1461, 5
      %v1510 = vrot.slane %v1461, 6
      %v1511 = vrot.slane %v1461, 7
      %1512 = vst [vmem:[#allocation1] ss:$9 sm:$0xff] %v1456
      %s1513 = scalar_lea.vmem [#allocation1], 1
      %1514 = vst [vmem:[%s1513] ss:$9 sm:$0xff] %v1470
      %s1515 = scalar_lea.vmem [#allocation1], 2
      %1516 = vst [vmem:[%s1515] ss:$9 sm:$0xff] %v1471
      %s1517 = scalar_lea.vmem [#allocation1], 3
      %1518 = vst [vmem:[%s1517] ss:$9 sm:$0xff] %v1472
      %s1519 = scalar_lea.vmem [#allocation1], 4
      %1520 = vst [vmem:[%s1519] ss:$9 sm:$0xff] %v1473
      %s1521 = scalar_lea.vmem [#allocation1], 5
      %1522 = vst [vmem:[%s1521] ss:$9 sm:$0xff] %v1474
      %s1523 = scalar_lea.vmem [#allocation1], 6
      %1524 = vst [vmem:[%s1523] ss:$9 sm:$0xff] %v1475
      %v1525 = vld [vmem:[#allocation1] sm:$0xff]
      %1526 = vst [vmem:[#allocation1] ss:$9 sm:$0xff] %v1476
      %1527 = vst [vmem:[%s1513] ss:$9 sm:$0xff] %v1457
      %1528 = vst [vmem:[%s1515] ss:$9 sm:$0xff] %v1477
      %1529 = vst [vmem:[%s1517] ss:$9 sm:$0xff] %v1478
      %1530 = vst [vmem:[%s1519] ss:$9 sm:$0xff] %v1479
      %1531 = vst [vmem:[%s1521] ss:$9 sm:$0xff] %v1480
      %1532 = vst [vmem:[%s1523] ss:$9 sm:$0xff] %v1481
      %v1533 = vld [vmem:[#allocation1] sm:$0xff]
      %1534 = vst [vmem:[#allocation1] ss:$9 sm:$0xff] %v1482
      %1535 = vst [vmem:[%s1513] ss:$9 sm:$0xff] %v1483
      %1536 = vst [vmem:[%s1515] ss:$9 sm:$0xff] %v1458
      %1537 = vst [vmem:[%s1517] ss:$9 sm:$0xff] %v1484
      %1538 = vst [vmem:[%s1519] ss:$9 sm:$0xff] %v1485
      %1539 = vst [vmem:[%s1521] ss:$9 sm:$0xff] %v1486
      %1540 = vst [vmem:[%s1523] ss:$9 sm:$0xff] %v1487
      %v1541 = vld [vmem:[#allocation1] sm:$0xff]
      %1542 = vst [vmem:[#allocation1] ss:$9 sm:$0xff] %v1488
      %1543 = vst [vmem:[%s1513] ss:$9 sm:$0xff] %v1489
      %1544 = vst [vmem:[%s1515] ss:$9 sm:$0xff] %v1490
      %1545 = vst [vmem:[%s1517] ss:$9 sm:$0xff] %v1459
      %1546 = vst [vmem:[%s1519] ss:$9 sm:$0xff] %v1491
      %1547 = vst [vmem:[%s1521] ss:$9 sm:$0xff] %v1492
      %1548 = vst [vmem:[%s1523] ss:$9 sm:$0xff] %v1493
      %v1549 = vld [vmem:[#allocation1] sm:$0xff]
      %1550 = vst [vmem:[#allocation1] ss:$9 sm:$0xff] %v1494
      %1551 = vst [vmem:[%s1513] ss:$9 sm:$0xff] %v1495
      %1552 = vst [vmem:[%s1515] ss:$9 sm:$0xff] %v1496
      %1553 = vst [vmem:[%s1517] ss:$9 sm:$0xff] %v1497
      %1554 = vst [vmem:[%s1519] ss:$9 sm:$0xff] %v1460
      %1555 = vst [vmem:[%s1521] ss:$9 sm:$0xff] %v1498
      %1556 = vst [vmem:[%s1523] ss:$9 sm:$0xff] %v1499
      %v1557 = vld [vmem:[#allocation1] sm:$0xff]
      %1558 = vst [vmem:[#allocation1] ss:$9 sm:$0xff] %v1500
      %1559 = vst [vmem:[%s1513] ss:$9 sm:$0xff] %v1501
      %1560 = vst [vmem:[%s1515] ss:$9 sm:$0xff] %v1502
      %1561 = vst [vmem:[%s1517] ss:$9 sm:$0xff] %v1503
      %1562 = vst [vmem:[%s1519] ss:$9 sm:$0xff] %v1504
      %1563 = vst [vmem:[%s1521] ss:$9 sm:$0xff] %v1461
      %1564 = vst [vmem:[%s1523] ss:$9 sm:$0xff] %v1505
      %v1565 = vld [vmem:[#allocation1] sm:$0xff]
      %1566 = vst [vmem:[#allocation1] ss:$9 sm:$0xff] %v1506
      %1567 = vst [vmem:[%s1513] ss:$9 sm:$0xff] %v1507
      %1568 = vst [vmem:[%s1515] ss:$9 sm:$0xff] %v1508
      %1569 = vst [vmem:[%s1517] ss:$9 sm:$0xff] %v1509
      %1570 = vst [vmem:[%s1519] ss:$9 sm:$0xff] %v1510
      %1571 = vst [vmem:[%s1521] ss:$9 sm:$0xff] %v1511
      %1572 = vst [vmem:[%s1523] ss:$9 sm:$0xff] %v1462
      %v1573 = vld [vmem:[#allocation1] sm:$0xff]
      %s1581 = scalar_lea.vmem [#allocation2], 16
      %vm1582 = vcmask 63488
      %1583 = vst.msk [vmem:[%s1581 + $0x1] sm:$0x7f] %vm1582, %v1525
      %1584 = vst.msk [vmem:[%s1581 + $0x11] sm:$0x7f] %vm1582, %v1533
      %1585 = vst.msk [vmem:[%s1581 + $0x21] sm:$0x7f] %vm1582, %v1541
      %1586 = vst.msk [vmem:[%s1581 + $0x31] sm:$0x7f] %vm1582, %v1549
      %1587 = vst.msk [vmem:[%s1581 + $0x41] sm:$0x7f] %vm1582, %v1557
      %1588 = vst.msk [vmem:[%s1581 + $0x51] sm:$0x7f] %vm1582, %v1565
      %1589 = vst.msk [vmem:[%s1581 + $0x61] sm:$0x7f] %vm1582, %v1573
      %v1590 = vld [vmem:[#allocation2] sm:$0x7f]
      %v1591 = vld [vmem:[#allocation2 + $0x10] sm:$0x7f]
      %v1592 = vld [vmem:[#allocation2 + $0x20] sm:$0x7f]
      %v1593 = vld [vmem:[#allocation2 + $0x30] sm:$0x7f]
      %v1594 = vld [vmem:[#allocation2 + $0x40] sm:$0x7f]
      %v1595 = vld [vmem:[#allocation2 + $0x50] sm:$0x7f]
      %v1596 = vld [vmem:[#allocation2 + $0x60] sm:$0x7f]
      %v1604 = vrot.slane %v1590, 1
      %v1605 = vrot.slane %v1590, 2
      %v1606 = vrot.slane %v1590, 3
      %v1607 = vrot.slane %v1590, 4
      %v1608 = vrot.slane %v1590, 5
      %v1609 = vrot.slane %v1590, 6
      %v1610 = vrot.slane %v1591, 1
      %v1611 = vrot.slane %v1591, 2
      %v1612 = vrot.slane %v1591, 3
      %v1613 = vrot.slane %v1591, 4
      %v1614 = vrot.slane %v1591, 5
      %v1615 = vrot.slane %v1591, 6
      %v1616 = vrot.slane %v1592, 1
      %v1617 = vrot.slane %v1592, 2
      %v1618 = vrot.slane %v1592, 3
      %v1619 = vrot.slane %v1592, 4
      %v1620 = vrot.slane %v1592, 5
      %v1621 = vrot.slane %v1592, 6
      %v1622 = vrot.slane %v1593, 1
      %v1623 = vrot.slane %v1593, 2
      %v1624 = vrot.slane %v1593, 3
      %v1625 = vrot.slane %v1593, 4
      %v1626 = vrot.slane %v1593, 5
      %v1627 = vrot.slane %v1593, 6
      %v1628 = vrot.slane %v1594, 1
      %v1629 = vrot.slane %v1594, 2
      %v1630 = vrot.slane %v1594, 3
      %v1631 = vrot.slane %v1594, 4
      %v1632 = vrot.slane %v1594, 5
      %v1633 = vrot.slane %v1594, 6
      %v1634 = vrot.slane %v1595, 1
      %v1635 = vrot.slane %v1595, 2
      %v1636 = vrot.slane %v1595, 3
      %v1637 = vrot.slane %v1595, 4
      %v1638 = vrot.slane %v1595, 5
      %v1639 = vrot.slane %v1595, 6
      %v1640 = vrot.slane %v1596, 1
      %v1641 = vrot.slane %v1596, 2
      %v1642 = vrot.slane %v1596, 3
      %v1643 = vrot.slane %v1596, 4
      %v1644 = vrot.slane %v1596, 5
      %v1645 = vrot.slane %v1596, 6
      %v1646 = vld [vmem:[%s5] sm:$0xff]
      %v1647 = vld [vmem:[#allocation2 + $0x1] sm:$0x7f]
      %v1648 = vld [vmem:[#allocation2 + $0x11] sm:$0x7f]
      %v1649 = vld [vmem:[#allocation2 + $0x21] sm:$0x7f]
      %v1650 = vld [vmem:[#allocation2 + $0x31] sm:$0x7f]
      %v1651 = vld [vmem:[#allocation2 + $0x41] sm:$0x7f]
      %v1652 = vld [vmem:[#allocation2 + $0x51] sm:$0x7f]
      %v1653 = vld [vmem:[#allocation2 + $0x61] sm:$0x7f]
      %v1661 = vrot.slane %v1647, 1
      %v1662 = vrot.slane %v1647, 2
      %v1663 = vrot.slane %v1647, 3
      %v1664 = vrot.slane %v1647, 4
      %v1665 = vrot.slane %v1647, 5
      %v1666 = vrot.slane %v1647, 6
      %v1667 = vrot.slane %v1648, 1
      %v1668 = vrot.slane %v1648, 2
      %v1669 = vrot.slane %v1648, 3
      %v1670 = vrot.slane %v1648, 4
      %v1671 = vrot.slane %v1648, 5
      %v1672 = vrot.slane %v1648, 6
      %v1673 = vrot.slane %v1649, 1
      %v1674 = vrot.slane %v1649, 2
      %v1675 = vrot.slane %v1649, 3
      %v1676 = vrot.slane %v1649, 4
      %v1677 = vrot.slane %v1649, 5
      %v1678 = vrot.slane %v1649, 6
      %v1679 = vrot.slane %v1650, 1
      %v1680 = vrot.slane %v1650, 2
      %v1681 = vrot.slane %v1650, 3
      %v1682 = vrot.slane %v1650, 4
      %v1683 = vrot.slane %v1650, 5
      %v1684 = vrot.slane %v1650, 6
      %v1685 = vrot.slane %v1651, 1
      %v1686 = vrot.slane %v1651, 2
      %v1687 = vrot.slane %v1651, 3
      %v1688 = vrot.slane %v1651, 4
      %v1689 = vrot.slane %v1651, 5
      %v1690 = vrot.slane %v1651, 6
      %v1691 = vrot.slane %v1652, 1
      %v1692 = vrot.slane %v1652, 2
      %v1693 = vrot.slane %v1652, 3
      %v1694 = vrot.slane %v1652, 4
      %v1695 = vrot.slane %v1652, 5
      %v1696 = vrot.slane %v1652, 6
      %v1697 = vrot.slane %v1653, 1
      %v1698 = vrot.slane %v1653, 2
      %v1699 = vrot.slane %v1653, 3
      %v1700 = vrot.slane %v1653, 4
      %v1701 = vrot.slane %v1653, 5
      %v1702 = vrot.slane %v1653, 6
      %v1703 = vld [vmem:[%s5 + $0x8] sm:$0xff]
      %1704 = vst [vmem:[#allocation1] ss:$9 sm:$0xff] %v1647
      %s1705 = scalar_lea.vmem [#allocation1], 1
      %1706 = vst [vmem:[%s1705] ss:$9 sm:$0xff] %v1661
      %s1707 = scalar_lea.vmem [#allocation1], 2
      %1708 = vst [vmem:[%s1707] ss:$9 sm:$0xff] %v1662
      %s1709 = scalar_lea.vmem [#allocation1], 3
      %1710 = vst [vmem:[%s1709] ss:$9 sm:$0xff] %v1663
      %s1711 = scalar_lea.vmem [#allocation1], 4
      %1712 = vst [vmem:[%s1711] ss:$9 sm:$0xff] %v1664
      %s1713 = scalar_lea.vmem [#allocation1], 5
      %1714 = vst [vmem:[%s1713] ss:$9 sm:$0xff] %v1665
      %s1715 = scalar_lea.vmem [#allocation1], 6
      %1716 = vst [vmem:[%s1715] ss:$9 sm:$0xff] %v1666
      %s1717 = scalar_lea.vmem [#allocation1], 7
      %1718 = vst [vmem:[%s1717] ss:$9 sm:$0xff] %v1648
      %v1719 = vld [vmem:[#allocation1] sm:$0xff]
      %1720 = vst [vmem:[#allocation1] ss:$9 sm:$0xff] %v1667
      %1721 = vst [vmem:[%s1705] ss:$9 sm:$0xff] %v1668
      %1722 = vst [vmem:[%s1707] ss:$9 sm:$0xff] %v1669
      %1723 = vst [vmem:[%s1709] ss:$9 sm:$0xff] %v1670
      %1724 = vst [vmem:[%s1711] ss:$9 sm:$0xff] %v1671
      %1725 = vst [vmem:[%s1713] ss:$9 sm:$0xff] %v1672
      %1726 = vst [vmem:[%s1715] ss:$9 sm:$0xff] %v1649
      %1727 = vst [vmem:[%s1717] ss:$9 sm:$0xff] %v1673
      %v1728 = vld [vmem:[#allocation1] sm:$0xff]
      %1729 = vst [vmem:[#allocation1] ss:$9 sm:$0xff] %v1674
      %1730 = vst [vmem:[%s1705] ss:$9 sm:$0xff] %v1675
      %1731 = vst [vmem:[%s1707] ss:$9 sm:$0xff] %v1676
      %1732 = vst [vmem:[%s1709] ss:$9 sm:$0xff] %v1677
      %1733 = vst [vmem:[%s1711] ss:$9 sm:$0xff] %v1678
      %1734 = vst [vmem:[%s1713] ss:$9 sm:$0xff] %v1650
      %1735 = vst [vmem:[%s1715] ss:$9 sm:$0xff] %v1679
      %1736 = vst [vmem:[%s1717] ss:$9 sm:$0xff] %v1680
      %v1737 = vld [vmem:[#allocation1] sm:$0xff]
      %1738 = vst [vmem:[#allocation1] ss:$9 sm:$0xff] %v1681
      %1739 = vst [vmem:[%s1705] ss:$9 sm:$0xff] %v1682
      %1740 = vst [vmem:[%s1707] ss:$9 sm:$0xff] %v1683
      %1741 = vst [vmem:[%s1709] ss:$9 sm:$0xff] %v1684
      %1742 = vst [vmem:[%s1711] ss:$9 sm:$0xff] %v1651
      %1743 = vst [vmem:[%s1713] ss:$9 sm:$0xff] %v1685
      %1744 = vst [vmem:[%s1715] ss:$9 sm:$0xff] %v1686
      %1745 = vst [vmem:[%s1717] ss:$9 sm:$0xff] %v1687
      %v1746 = vld [vmem:[#allocation1] sm:$0xff]
      %1747 = vst [vmem:[#allocation1] ss:$9 sm:$0xff] %v1688
      %1748 = vst [vmem:[%s1705] ss:$9 sm:$0xff] %v1689
      %1749 = vst [vmem:[%s1707] ss:$9 sm:$0xff] %v1690
      %1750 = vst [vmem:[%s1709] ss:$9 sm:$0xff] %v1652
      %1751 = vst [vmem:[%s1711] ss:$9 sm:$0xff] %v1691
      %1752 = vst [vmem:[%s1713] ss:$9 sm:$0xff] %v1692
      %1753 = vst [vmem:[%s1715] ss:$9 sm:$0xff] %v1693
      %1754 = vst [vmem:[%s1717] ss:$9 sm:$0xff] %v1694
      %v1755 = vld [vmem:[#allocation1] sm:$0xff]
      %1756 = vst [vmem:[#allocation1] ss:$9 sm:$0xff] %v1695
      %1757 = vst [vmem:[%s1705] ss:$9 sm:$0xff] %v1696
      %1758 = vst [vmem:[%s1707] ss:$9 sm:$0xff] %v1653
      %1759 = vst [vmem:[%s1709] ss:$9 sm:$0xff] %v1697
      %1760 = vst [vmem:[%s1711] ss:$9 sm:$0xff] %v1698
      %1761 = vst [vmem:[%s1713] ss:$9 sm:$0xff] %v1699
      %1762 = vst [vmem:[%s1715] ss:$9 sm:$0xff] %v1700
      %1763 = vst [vmem:[%s1717] ss:$9 sm:$0xff] %v1701
      %v1764 = vld [vmem:[#allocation1] sm:$0xff]
      %1765 = vst [vmem:[#allocation1] ss:$9 sm:$0xff] %v1702
      %v1766 = vld [vmem:[#allocation1] sm:$0xff]
      %v1767 = vsel %vm1309, %v1719, 0
      %v1769 = vsel %vm1309, %v1728, 0
      %v1771 = vsel %vm1309, %v1737, 0
      %v1773 = vsel %vm1309, %v1746, 0
      %v1775 = vsel %vm1309, %v1755, 0
      %v1777 = vsel %vm1309, %v1764, 0
      %v1779 = vsel %vm1309, %v1766, 0
      %1781 = vmatpush.msra.mxu0 0.0
      %1782 = vmatpush.msra.mxu0 0.0
      %1783 = vmatpush.msra.mxu0 0.0
      %1784 = vmatpush.msra.mxu0 0.0
      %1785 = vmatpush.msra.mxu0 0.0
      %1786 = vmatpush.msra.mxu0 0.0
      %1787 = vmatpush.msra.mxu0 0.0
      %1788 = vmatpush.msra.mxu0 0.0
      %1789 = vmatpush.msra.mxu0 0.0
      %1790 = vmatpush.msra.mxu0 0.0
      %1791 = vmatpush.msra.mxu0 0.0
      %1792 = vmatpush.msra.mxu0 0.0
      %1793 = vmatpush.msra.mxu0 0.0
      %1794 = vmatpush.msra.mxu0 0.0
      %1795 = vmatpush.msra.mxu0 0.0
      %1796 = vmatpush.msra.mxu0 %v1703
      %1797 = vmatmul.f32.gmra.mxu0 %v1767
      %v1798 = vpop.f32.mrf.mxu0
      %v1799 = vadd.f32 0.0, %v1798
      %1800 = vmatmul.f32.gmra.mxu0 %v1769
      %v1801 = vpop.f32.mrf.mxu0
      %v1802 = vadd.f32 0.0, %v1801
      %1803 = vmatmul.f32.gmra.mxu0 %v1771
      %v1804 = vpop.f32.mrf.mxu0
      %v1805 = vadd.f32 0.0, %v1804
      %1806 = vmatmul.f32.gmra.mxu0 %v1773
      %v1807 = vpop.f32.mrf.mxu0
      %v1808 = vadd.f32 0.0, %v1807
      %1809 = vmatmul.f32.gmra.mxu0 %v1775
      %v1810 = vpop.f32.mrf.mxu0
      %v1811 = vadd.f32 0.0, %v1810
      %1812 = vmatmul.f32.gmra.mxu0 %v1777
      %v1813 = vpop.f32.mrf.mxu0
      %v1814 = vadd.f32 0.0, %v1813
      %1815 = vmatmul.f32.gmra.mxu0 %v1779
      %v1816 = vpop.f32.mrf.mxu0
      %v1817 = vadd.f32 0.0, %v1816
      %1818 = vdwg.mxu0
      %1819 = vst [vmem:[#allocation1] ss:$9 sm:$0xff] %v1590
      %s1820 = scalar_lea.vmem [#allocation1], 1
      %1821 = vst [vmem:[%s1820] ss:$9 sm:$0xff] %v1604
      %s1822 = scalar_lea.vmem [#allocation1], 2
      %1823 = vst [vmem:[%s1822] ss:$9 sm:$0xff] %v1605
      %s1824 = scalar_lea.vmem [#allocation1], 3
      %1825 = vst [vmem:[%s1824] ss:$9 sm:$0xff] %v1606
      %s1826 = scalar_lea.vmem [#allocation1], 4
      %1827 = vst [vmem:[%s1826] ss:$9 sm:$0xff] %v1607
      %s1828 = scalar_lea.vmem [#allocation1], 5
      %1829 = vst [vmem:[%s1828] ss:$9 sm:$0xff] %v1608
      %s1830 = scalar_lea.vmem [#allocation1], 6
      %1831 = vst [vmem:[%s1830] ss:$9 sm:$0xff] %v1609
      %s1832 = scalar_lea.vmem [#allocation1], 7
      %1833 = vst [vmem:[%s1832] ss:$9 sm:$0xff] %v1591
      %v1834 = vld [vmem:[#allocation1] sm:$0xff]
      %1835 = vst [vmem:[#allocation1] ss:$9 sm:$0xff] %v1610
      %1836 = vst [vmem:[%s1820] ss:$9 sm:$0xff] %v1611
      %1837 = vst [vmem:[%s1822] ss:$9 sm:$0xff] %v1612
      %1838 = vst [vmem:[%s1824] ss:$9 sm:$0xff] %v1613
      %1839 = vst [vmem:[%s1826] ss:$9 sm:$0xff] %v1614
      %1840 = vst [vmem:[%s1828] ss:$9 sm:$0xff] %v1615
      %1841 = vst [vmem:[%s1830] ss:$9 sm:$0xff] %v1592
      %1842 = vst [vmem:[%s1832] ss:$9 sm:$0xff] %v1616
      %v1843 = vld [vmem:[#allocation1] sm:$0xff]
      %1844 = vst [vmem:[#allocation1] ss:$9 sm:$0xff] %v1617
      %1845 = vst [vmem:[%s1820] ss:$9 sm:$0xff] %v1618
      %1846 = vst [vmem:[%s1822] ss:$9 sm:$0xff] %v1619
      %1847 = vst [vmem:[%s1824] ss:$9 sm:$0xff] %v1620
      %1848 = vst [vmem:[%s1826] ss:$9 sm:$0xff] %v1621
      %1849 = vst [vmem:[%s1828] ss:$9 sm:$0xff] %v1593
      %1850 = vst [vmem:[%s1830] ss:$9 sm:$0xff] %v1622
      %1851 = vst [vmem:[%s1832] ss:$9 sm:$0xff] %v1623
      %v1852 = vld [vmem:[#allocation1] sm:$0xff]
      %1853 = vst [vmem:[#allocation1] ss:$9 sm:$0xff] %v1624
      %1854 = vst [vmem:[%s1820] ss:$9 sm:$0xff] %v1625
      %1855 = vst [vmem:[%s1822] ss:$9 sm:$0xff] %v1626
      %1856 = vst [vmem:[%s1824] ss:$9 sm:$0xff] %v1627
      %1857 = vst [vmem:[%s1826] ss:$9 sm:$0xff] %v1594
      %1858 = vst [vmem:[%s1828] ss:$9 sm:$0xff] %v1628
      %1859 = vst [vmem:[%s1830] ss:$9 sm:$0xff] %v1629
      %1860 = vst [vmem:[%s1832] ss:$9 sm:$0xff] %v1630
      %v1861 = vld [vmem:[#allocation1] sm:$0xff]
      %1862 = vst [vmem:[#allocation1] ss:$9 sm:$0xff] %v1631
      %1863 = vst [vmem:[%s1820] ss:$9 sm:$0xff] %v1632
      %1864 = vst [vmem:[%s1822] ss:$9 sm:$0xff] %v1633
      %1865 = vst [vmem:[%s1824] ss:$9 sm:$0xff] %v1595
      %1866 = vst [vmem:[%s1826] ss:$9 sm:$0xff] %v1634
      %1867 = vst [vmem:[%s1828] ss:$9 sm:$0xff] %v1635
      %1868 = vst [vmem:[%s1830] ss:$9 sm:$0xff] %v1636
      %1869 = vst [vmem:[%s1832] ss:$9 sm:$0xff] %v1637
      %v1870 = vld [vmem:[#allocation1] sm:$0xff]
      %1871 = vst [vmem:[#allocation1] ss:$9 sm:$0xff] %v1638
      %1872 = vst [vmem:[%s1820] ss:$9 sm:$0xff] %v1639
      %1873 = vst [vmem:[%s1822] ss:$9 sm:$0xff] %v1596
      %1874 = vst [vmem:[%s1824] ss:$9 sm:$0xff] %v1640
      %1875 = vst [vmem:[%s1826] ss:$9 sm:$0xff] %v1641
      %1876 = vst [vmem:[%s1828] ss:$9 sm:$0xff] %v1642
      %1877 = vst [vmem:[%s1830] ss:$9 sm:$0xff] %v1643
      %1878 = vst [vmem:[%s1832] ss:$9 sm:$0xff] %v1644
      %v1879 = vld [vmem:[#allocation1] sm:$0xff]
      %1880 = vst [vmem:[#allocation1] ss:$9 sm:$0xff] %v1645
      %v1881 = vld [vmem:[#allocation1] sm:$0xff]
      %v1882 = vsel %vm1309, %v1834, 0
      %v1884 = vsel %vm1309, %v1843, 0
      %v1886 = vsel %vm1309, %v1852, 0
      %v1888 = vsel %vm1309, %v1861, 0
      %v1890 = vsel %vm1309, %v1870, 0
      %v1892 = vsel %vm1309, %v1879, 0
      %v1894 = vsel %vm1309, %v1881, 0
      %1896 = vmatpush.msra.mxu0 0.0
      %1897 = vmatpush.msra.mxu0 0.0
      %1898 = vmatpush.msra.mxu0 0.0
      %1899 = vmatpush.msra.mxu0 0.0
      %1900 = vmatpush.msra.mxu0 0.0
      %1901 = vmatpush.msra.mxu0 0.0
      %1902 = vmatpush.msra.mxu0 0.0
      %1903 = vmatpush.msra.mxu0 0.0
      %1904 = vmatpush.msra.mxu0 0.0
      %1905 = vmatpush.msra.mxu0 0.0
      %1906 = vmatpush.msra.mxu0 0.0
      %1907 = vmatpush.msra.mxu0 0.0
      %1908 = vmatpush.msra.mxu0 0.0
      %1909 = vmatpush.msra.mxu0 0.0
      %1910 = vmatpush.msra.mxu0 0.0
      %1911 = vmatpush.msra.mxu0 %v1646
      %1912 = vmatmul.f32.gmra.mxu0 %v1882
      %v1913 = vpop.f32.mrf.mxu0
      %v1914 = vadd.f32 %v1799, %v1913
      %1915 = vmatmul.f32.gmra.mxu0 %v1884
      %v1916 = vpop.f32.mrf.mxu0
      %v1917 = vadd.f32 %v1802, %v1916
      %1918 = vmatmul.f32.gmra.mxu0 %v1886
      %v1919 = vpop.f32.mrf.mxu0
      %v1920 = vadd.f32 %v1805, %v1919
      %1921 = vmatmul.f32.gmra.mxu0 %v1888
      %v1922 = vpop.f32.mrf.mxu0
      %v1923 = vadd.f32 %v1808, %v1922
      %1924 = vmatmul.f32.gmra.mxu0 %v1890
      %v1925 = vpop.f32.mrf.mxu0
      %v1926 = vadd.f32 %v1811, %v1925
      %1927 = vmatmul.f32.gmra.mxu0 %v1892
      %v1928 = vpop.f32.mrf.mxu0
      %v1929 = vadd.f32 %v1814, %v1928
      %1930 = vmatmul.f32.gmra.mxu0 %v1894
      %v1931 = vpop.f32.mrf.mxu0
      %v1932 = vadd.f32 %v1817, %v1931
      %1933 = vdwg.mxu0
      %v1934 = vld [vmem:[#allocation2 + $0x2] sm:$0x7f]
      %v1935 = vld [vmem:[#allocation2 + $0x12] sm:$0x7f]
      %v1936 = vld [vmem:[#allocation2 + $0x22] sm:$0x7f]
      %v1937 = vld [vmem:[#allocation2 + $0x32] sm:$0x7f]
      %v1938 = vld [vmem:[#allocation2 + $0x42] sm:$0x7f]
      %v1939 = vld [vmem:[#allocation2 + $0x52] sm:$0x7f]
      %v1940 = vld [vmem:[#allocation2 + $0x62] sm:$0x7f]
      %v1948 = vrot.slane %v1934, 1
      %v1949 = vrot.slane %v1934, 2
      %v1950 = vrot.slane %v1934, 3
      %v1951 = vrot.slane %v1934, 4
      %v1952 = vrot.slane %v1934, 5
      %v1953 = vrot.slane %v1934, 6
      %v1954 = vrot.slane %v1935, 1
      %v1955 = vrot.slane %v1935, 2
      %v1956 = vrot.slane %v1935, 3
      %v1957 = vrot.slane %v1935, 4
      %v1958 = vrot.slane %v1935, 5
      %v1959 = vrot.slane %v1935, 6
      %v1960 = vrot.slane %v1936, 1
      %v1961 = vrot.slane %v1936, 2
      %v1962 = vrot.slane %v1936, 3
      %v1963 = vrot.slane %v1936, 4
      %v1964 = vrot.slane %v1936, 5
      %v1965 = vrot.slane %v1936, 6
      %v1966 = vrot.slane %v1937, 1
      %v1967 = vrot.slane %v1937, 2
      %v1968 = vrot.slane %v1937, 3
      %v1969 = vrot.slane %v1937, 4
      %v1970 = vrot.slane %v1937, 5
      %v1971 = vrot.slane %v1937, 6
      %v1972 = vrot.slane %v1938, 1
      %v1973 = vrot.slane %v1938, 2
      %v1974 = vrot.slane %v1938, 3
      %v1975 = vrot.slane %v1938, 4
      %v1976 = vrot.slane %v1938, 5
      %v1977 = vrot.slane %v1938, 6
      %v1978 = vrot.slane %v1939, 1
      %v1979 = vrot.slane %v1939, 2
      %v1980 = vrot.slane %v1939, 3
      %v1981 = vrot.slane %v1939, 4
      %v1982 = vrot.slane %v1939, 5
      %v1983 = vrot.slane %v1939, 6
      %v1984 = vrot.slane %v1940, 1
      %v1985 = vrot.slane %v1940, 2
      %v1986 = vrot.slane %v1940, 3
      %v1987 = vrot.slane %v1940, 4
      %v1988 = vrot.slane %v1940, 5
      %v1989 = vrot.slane %v1940, 6
      %v1990 = vld [vmem:[%s5 + $0x10] sm:$0xff]
      %1991 = vst [vmem:[#allocation1] ss:$9 sm:$0xff] %v1934
      %s1992 = scalar_lea.vmem [#allocation1], 1
      %1993 = vst [vmem:[%s1992] ss:$9 sm:$0xff] %v1948
      %s1994 = scalar_lea.vmem [#allocation1], 2
      %1995 = vst [vmem:[%s1994] ss:$9 sm:$0xff] %v1949
      %s1996 = scalar_lea.vmem [#allocation1], 3
      %1997 = vst [vmem:[%s1996] ss:$9 sm:$0xff] %v1950
      %s1998 = scalar_lea.vmem [#allocation1], 4
      %1999 = vst [vmem:[%s1998] ss:$9 sm:$0xff] %v1951
      %s2000 = scalar_lea.vmem [#allocation1], 5
      %2001 = vst [vmem:[%s2000] ss:$9 sm:$0xff] %v1952
      %s2002 = scalar_lea.vmem [#allocation1], 6
      %2003 = vst [vmem:[%s2002] ss:$9 sm:$0xff] %v1953
      %s2004 = scalar_lea.vmem [#allocation1], 7
      %2005 = vst [vmem:[%s2004] ss:$9 sm:$0xff] %v1935
      %v2006 = vld [vmem:[#allocation1] sm:$0xff]
      %2007 = vst [vmem:[#allocation1] ss:$9 sm:$0xff] %v1954
      %2008 = vst [vmem:[%s1992] ss:$9 sm:$0xff] %v1955
      %2009 = vst [vmem:[%s1994] ss:$9 sm:$0xff] %v1956
      %2010 = vst [vmem:[%s1996] ss:$9 sm:$0xff] %v1957
      %2011 = vst [vmem:[%s1998] ss:$9 sm:$0xff] %v1958
      %2012 = vst [vmem:[%s2000] ss:$9 sm:$0xff] %v1959
      %2013 = vst [vmem:[%s2002] ss:$9 sm:$0xff] %v1936
      %2014 = vst [vmem:[%s2004] ss:$9 sm:$0xff] %v1960
      %v2015 = vld [vmem:[#allocation1] sm:$0xff]
      %2016 = vst [vmem:[#allocation1] ss:$9 sm:$0xff] %v1961
      %2017 = vst [vmem:[%s1992] ss:$9 sm:$0xff] %v1962
      %2018 = vst [vmem:[%s1994] ss:$9 sm:$0xff] %v1963
      %2019 = vst [vmem:[%s1996] ss:$9 sm:$0xff] %v1964
      %2020 = vst [vmem:[%s1998] ss:$9 sm:$0xff] %v1965
      %2021 = vst [vmem:[%s2000] ss:$9 sm:$0xff] %v1937
      %2022 = vst [vmem:[%s2002] ss:$9 sm:$0xff] %v1966
      %2023 = vst [vmem:[%s2004] ss:$9 sm:$0xff] %v1967
      %v2024 = vld [vmem:[#allocation1] sm:$0xff]
      %2025 = vst [vmem:[#allocation1] ss:$9 sm:$0xff] %v1968
      %2026 = vst [vmem:[%s1992] ss:$9 sm:$0xff] %v1969
      %2027 = vst [vmem:[%s1994] ss:$9 sm:$0xff] %v1970
      %2028 = vst [vmem:[%s1996] ss:$9 sm:$0xff] %v1971
      %2029 = vst [vmem:[%s1998] ss:$9 sm:$0xff] %v1938
      %2030 = vst [vmem:[%s2000] ss:$9 sm:$0xff] %v1972
      %2031 = vst [vmem:[%s2002] ss:$9 sm:$0xff] %v1973
      %2032 = vst [vmem:[%s2004] ss:$9 sm:$0xff] %v1974
      %v2033 = vld [vmem:[#allocation1] sm:$0xff]
      %2034 = vst [vmem:[#allocation1] ss:$9 sm:$0xff] %v1975
      %2035 = vst [vmem:[%s1992] ss:$9 sm:$0xff] %v1976
      %2036 = vst [vmem:[%s1994] ss:$9 sm:$0xff] %v1977
      %2037 = vst [vmem:[%s1996] ss:$9 sm:$0xff] %v1939
      %2038 = vst [vmem:[%s1998] ss:$9 sm:$0xff] %v1978
      %2039 = vst [vmem:[%s2000] ss:$9 sm:$0xff] %v1979
      %2040 = vst [vmem:[%s2002] ss:$9 sm:$0xff] %v1980
      %2041 = vst [vmem:[%s2004] ss:$9 sm:$0xff] %v1981
      %v2042 = vld [vmem:[#allocation1] sm:$0xff]
      %2043 = vst [vmem:[#allocation1] ss:$9 sm:$0xff] %v1982
      %2044 = vst [vmem:[%s1992] ss:$9 sm:$0xff] %v1983
      %2045 = vst [vmem:[%s1994] ss:$9 sm:$0xff] %v1940
      %2046 = vst [vmem:[%s1996] ss:$9 sm:$0xff] %v1984
      %2047 = vst [vmem:[%s1998] ss:$9 sm:$0xff] %v1985
      %2048 = vst [vmem:[%s2000] ss:$9 sm:$0xff] %v1986
      %2049 = vst [vmem:[%s2002] ss:$9 sm:$0xff] %v1987
      %2050 = vst [vmem:[%s2004] ss:$9 sm:$0xff] %v1988
      %v2051 = vld [vmem:[#allocation1] sm:$0xff]
      %2052 = vst [vmem:[#allocation1] ss:$9 sm:$0xff] %v1989
      %v2053 = vld [vmem:[#allocation1] sm:$0xff]
      %v2054 = vsel %vm1309, %v2006, 0
      %v2056 = vsel %vm1309, %v2015, 0
      %v2058 = vsel %vm1309, %v2024, 0
      %v2060 = vsel %vm1309, %v2033, 0
      %v2062 = vsel %vm1309, %v2042, 0
      %v2064 = vsel %vm1309, %v2051, 0
      %v2066 = vsel %vm1309, %v2053, 0
      %2068 = vmatpush.msra.mxu0 0.0
      %2069 = vmatpush.msra.mxu0 0.0
      %2070 = vmatpush.msra.mxu0 0.0
      %2071 = vmatpush.msra.mxu0 0.0
      %2072 = vmatpush.msra.mxu0 0.0
      %2073 = vmatpush.msra.mxu0 0.0
      %2074 = vmatpush.msra.mxu0 0.0
      %2075 = vmatpush.msra.mxu0 0.0
      %2076 = vmatpush.msra.mxu0 0.0
      %2077 = vmatpush.msra.mxu0 0.0
      %2078 = vmatpush.msra.mxu0 0.0
      %2079 = vmatpush.msra.mxu0 0.0
      %2080 = vmatpush.msra.mxu0 0.0
      %2081 = vmatpush.msra.mxu0 0.0
      %2082 = vmatpush.msra.mxu0 0.0
      %2083 = vmatpush.msra.mxu0 %v1990
      %2084 = vmatmul.f32.gmra.mxu0 %v2054
      %v2085 = vpop.f32.mrf.mxu0
      %v2086 = vadd.f32 0.0, %v2085
      %2087 = vmatmul.f32.gmra.mxu0 %v2056
      %v2088 = vpop.f32.mrf.mxu0
      %v2089 = vadd.f32 0.0, %v2088
      %2090 = vmatmul.f32.gmra.mxu0 %v2058
      %v2091 = vpop.f32.mrf.mxu0
      %v2092 = vadd.f32 0.0, %v2091
      %2093 = vmatmul.f32.gmra.mxu0 %v2060
      %v2094 = vpop.f32.mrf.mxu0
      %v2095 = vadd.f32 0.0, %v2094
      %2096 = vmatmul.f32.gmra.mxu0 %v2062
      %v2097 = vpop.f32.mrf.mxu0
      %v2098 = vadd.f32 0.0, %v2097
      %2099 = vmatmul.f32.gmra.mxu0 %v2064
      %v2100 = vpop.f32.mrf.mxu0
      %v2101 = vadd.f32 0.0, %v2100
      %2102 = vmatmul.f32.gmra.mxu0 %v2066
      %v2103 = vpop.f32.mrf.mxu0
      %v2104 = vadd.f32 0.0, %v2103
      %2105 = vdwg.mxu0
      %v2106 = vadd.f32 %v1914, %v2086
      %v2107 = vadd.f32 %v1917, %v2089
      %v2108 = vadd.f32 %v1920, %v2092
      %v2109 = vadd.f32 %v1923, %v2095
      %v2110 = vadd.f32 %v1926, %v2098
      %v2111 = vadd.f32 %v1929, %v2101
      %v2112 = vadd.f32 %v1932, %v2104
      %v2113 = vld [vmem:[%s1581] sm:$0x7f]
      %v2114 = vld [vmem:[%s1581 + $0x10] sm:$0x7f]
      %v2115 = vld [vmem:[%s1581 + $0x20] sm:$0x7f]
      %v2116 = vld [vmem:[%s1581 + $0x30] sm:$0x7f]
      %v2117 = vld [vmem:[%s1581 + $0x40] sm:$0x7f]
      %v2118 = vld [vmem:[%s1581 + $0x50] sm:$0x7f]
      %v2119 = vld [vmem:[%s1581 + $0x60] sm:$0x7f]
      %v2127 = vrot.slane %v2113, 1
      %v2128 = vrot.slane %v2113, 2
      %v2129 = vrot.slane %v2113, 3
      %v2130 = vrot.slane %v2113, 4
      %v2131 = vrot.slane %v2113, 5
      %v2132 = vrot.slane %v2113, 6
      %v2133 = vrot.slane %v2114, 1
      %v2134 = vrot.slane %v2114, 2
      %v2135 = vrot.slane %v2114, 3
      %v2136 = vrot.slane %v2114, 4
      %v2137 = vrot.slane %v2114, 5
      %v2138 = vrot.slane %v2114, 6
      %v2139 = vrot.slane %v2115, 1
      %v2140 = vrot.slane %v2115, 2
      %v2141 = vrot.slane %v2115, 3
      %v2142 = vrot.slane %v2115, 4
      %v2143 = vrot.slane %v2115, 5
      %v2144 = vrot.slane %v2115, 6
      %v2145 = vrot.slane %v2116, 1
      %v2146 = vrot.slane %v2116, 2
      %v2147 = vrot.slane %v2116, 3
      %v2148 = vrot.slane %v2116, 4
      %v2149 = vrot.slane %v2116, 5
      %v2150 = vrot.slane %v2116, 6
      %v2151 = vrot.slane %v2117, 1
      %v2152 = vrot.slane %v2117, 2
      %v2153 = vrot.slane %v2117, 3
      %v2154 = vrot.slane %v2117, 4
      %v2155 = vrot.slane %v2117, 5
      %v2156 = vrot.slane %v2117, 6
      %v2157 = vrot.slane %v2118, 1
      %v2158 = vrot.slane %v2118, 2
      %v2159 = vrot.slane %v2118, 3
      %v2160 = vrot.slane %v2118, 4
      %v2161 = vrot.slane %v2118, 5
      %v2162 = vrot.slane %v2118, 6
      %v2163 = vrot.slane %v2119, 1
      %v2164 = vrot.slane %v2119, 2
      %v2165 = vrot.slane %v2119, 3
      %v2166 = vrot.slane %v2119, 4
      %v2167 = vrot.slane %v2119, 5
      %v2168 = vrot.slane %v2119, 6
      %v2169 = vld [vmem:[%s5 + $0x18] sm:$0xff]
      %2170 = vst [vmem:[#allocation1] ss:$9 sm:$0xff] %v2113
      %s2171 = scalar_lea.vmem [#allocation1], 1
      %2172 = vst [vmem:[%s2171] ss:$9 sm:$0xff] %v2127
      %s2173 = scalar_lea.vmem [#allocation1], 2
      %2174 = vst [vmem:[%s2173] ss:$9 sm:$0xff] %v2128
      %s2175 = scalar_lea.vmem [#allocation1], 3
      %2176 = vst [vmem:[%s2175] ss:$9 sm:$0xff] %v2129
      %s2177 = scalar_lea.vmem [#allocation1], 4
      %2178 = vst [vmem:[%s2177] ss:$9 sm:$0xff] %v2130
      %s2179 = scalar_lea.vmem [#allocation1], 5
      %2180 = vst [vmem:[%s2179] ss:$9 sm:$0xff] %v2131
      %s2181 = scalar_lea.vmem [#allocation1], 6
      %2182 = vst [vmem:[%s2181] ss:$9 sm:$0xff] %v2132
      %s2183 = scalar_lea.vmem [#allocation1], 7
      %2184 = vst [vmem:[%s2183] ss:$9 sm:$0xff] %v2114
      %v2185 = vld [vmem:[#allocation1] sm:$0xff]
      %2186 = vst [vmem:[#allocation1] ss:$9 sm:$0xff] %v2133
      %2187 = vst [vmem:[%s2171] ss:$9 sm:$0xff] %v2134
      %2188 = vst [vmem:[%s2173] ss:$9 sm:$0xff] %v2135
      %2189 = vst [vmem:[%s2175] ss:$9 sm:$0xff] %v2136
      %2190 = vst [vmem:[%s2177] ss:$9 sm:$0xff] %v2137
      %2191 = vst [vmem:[%s2179] ss:$9 sm:$0xff] %v2138
      %2192 = vst [vmem:[%s2181] ss:$9 sm:$0xff] %v2115
      %2193 = vst [vmem:[%s2183] ss:$9 sm:$0xff] %v2139
      %v2194 = vld [vmem:[#allocation1] sm:$0xff]
      %2195 = vst [vmem:[#allocation1] ss:$9 sm:$0xff] %v2140
      %2196 = vst [vmem:[%s2171] ss:$9 sm:$0xff] %v2141
      %2197 = vst [vmem:[%s2173] ss:$9 sm:$0xff] %v2142
      %2198 = vst [vmem:[%s2175] ss:$9 sm:$0xff] %v2143
      %2199 = vst [vmem:[%s2177] ss:$9 sm:$0xff] %v2144
      %2200 = vst [vmem:[%s2179] ss:$9 sm:$0xff] %v2116
      %2201 = vst [vmem:[%s2181] ss:$9 sm:$0xff] %v2145
      %2202 = vst [vmem:[%s2183] ss:$9 sm:$0xff] %v2146
      %v2203 = vld [vmem:[#allocation1] sm:$0xff]
      %2204 = vst [vmem:[#allocation1] ss:$9 sm:$0xff] %v2147
      %2205 = vst [vmem:[%s2171] ss:$9 sm:$0xff] %v2148
      %2206 = vst [vmem:[%s2173] ss:$9 sm:$0xff] %v2149
      %2207 = vst [vmem:[%s2175] ss:$9 sm:$0xff] %v2150
      %2208 = vst [vmem:[%s2177] ss:$9 sm:$0xff] %v2117
      %2209 = vst [vmem:[%s2179] ss:$9 sm:$0xff] %v2151
      %2210 = vst [vmem:[%s2181] ss:$9 sm:$0xff] %v2152
      %2211 = vst [vmem:[%s2183] ss:$9 sm:$0xff] %v2153
      %v2212 = vld [vmem:[#allocation1] sm:$0xff]
      %2213 = vst [vmem:[#allocation1] ss:$9 sm:$0xff] %v2154
      %2214 = vst [vmem:[%s2171] ss:$9 sm:$0xff] %v2155
      %2215 = vst [vmem:[%s2173] ss:$9 sm:$0xff] %v2156
      %2216 = vst [vmem:[%s2175] ss:$9 sm:$0xff] %v2118
      %2217 = vst [vmem:[%s2177] ss:$9 sm:$0xff] %v2157
      %2218 = vst [vmem:[%s2179] ss:$9 sm:$0xff] %v2158
      %2219 = vst [vmem:[%s2181] ss:$9 sm:$0xff] %v2159
      %2220 = vst [vmem:[%s2183] ss:$9 sm:$0xff] %v2160
      %v2221 = vld [vmem:[#allocation1] sm:$0xff]
      %2222 = vst [vmem:[#allocation1] ss:$9 sm:$0xff] %v2161
      %2223 = vst [vmem:[%s2171] ss:$9 sm:$0xff] %v2162
      %2224 = vst [vmem:[%s2173] ss:$9 sm:$0xff] %v2119
      %2225 = vst [vmem:[%s2175] ss:$9 sm:$0xff] %v2163
      %2226 = vst [vmem:[%s2177] ss:$9 sm:$0xff] %v2164
      %2227 = vst [vmem:[%s2179] ss:$9 sm:$0xff] %v2165
      %2228 = vst [vmem:[%s2181] ss:$9 sm:$0xff] %v2166
      %2229 = vst [vmem:[%s2183] ss:$9 sm:$0xff] %v2167
      %v2230 = vld [vmem:[#allocation1] sm:$0xff]
      %2231 = vst [vmem:[#allocation1] ss:$9 sm:$0xff] %v2168
      %v2232 = vld [vmem:[#allocation1] sm:$0xff]
      %v2233 = vsel %vm1309, %v2185, 0
      %v2235 = vsel %vm1309, %v2194, 0
      %v2237 = vsel %vm1309, %v2203, 0
      %v2239 = vsel %vm1309, %v2212, 0
      %v2241 = vsel %vm1309, %v2221, 0
      %v2243 = vsel %vm1309, %v2230, 0
      %v2245 = vsel %vm1309, %v2232, 0
      %2247 = vmatpush.msra.mxu0 0.0
      %2248 = vmatpush.msra.mxu0 0.0
      %2249 = vmatpush.msra.mxu0 0.0
      %2250 = vmatpush.msra.mxu0 0.0
      %2251 = vmatpush.msra.mxu0 0.0
      %2252 = vmatpush.msra.mxu0 0.0
      %2253 = vmatpush.msra.mxu0 0.0
      %2254 = vmatpush.msra.mxu0 0.0
      %2255 = vmatpush.msra.mxu0 0.0
      %2256 = vmatpush.msra.mxu0 0.0
      %2257 = vmatpush.msra.mxu0 0.0
      %2258 = vmatpush.msra.mxu0 0.0
      %2259 = vmatpush.msra.mxu0 0.0
      %2260 = vmatpush.msra.mxu0 0.0
      %2261 = vmatpush.msra.mxu0 0.0
      %2262 = vmatpush.msra.mxu0 %v2169
      %2263 = vmatmul.f32.gmra.mxu0 %v2233
      %v2264 = vpop.f32.mrf.mxu0
      %v2265 = vadd.f32 0.0, %v2264
      %2266 = vmatmul.f32.gmra.mxu0 %v2235
      %v2267 = vpop.f32.mrf.mxu0
      %v2268 = vadd.f32 0.0, %v2267
      %2269 = vmatmul.f32.gmra.mxu0 %v2237
      %v2270 = vpop.f32.mrf.mxu0
      %v2271 = vadd.f32 0.0, %v2270
      %2272 = vmatmul.f32.gmra.mxu0 %v2239
      %v2273 = vpop.f32.mrf.mxu0
      %v2274 = vadd.f32 0.0, %v2273
      %2275 = vmatmul.f32.gmra.mxu0 %v2241
      %v2276 = vpop.f32.mrf.mxu0
      %v2277 = vadd.f32 0.0, %v2276
      %2278 = vmatmul.f32.gmra.mxu0 %v2243
      %v2279 = vpop.f32.mrf.mxu0
      %v2280 = vadd.f32 0.0, %v2279
      %2281 = vmatmul.f32.gmra.mxu0 %v2245
      %v2282 = vpop.f32.mrf.mxu0
      %v2283 = vadd.f32 0.0, %v2282
      %2284 = vdwg.mxu0
      %v2285 = vadd.f32 %v2106, %v2265
      %v2286 = vadd.f32 %v2107, %v2268
      %v2287 = vadd.f32 %v2108, %v2271
      %v2288 = vadd.f32 %v2109, %v2274
      %v2289 = vadd.f32 %v2110, %v2277
      %v2290 = vadd.f32 %v2111, %v2280
      %v2291 = vadd.f32 %v2112, %v2283
      %v2292 = vld [vmem:[%s1581 + $0x1] sm:$0x7f]
      %v2293 = vld [vmem:[%s1581 + $0x11] sm:$0x7f]
      %v2294 = vld [vmem:[%s1581 + $0x21] sm:$0x7f]
      %v2295 = vld [vmem:[%s1581 + $0x31] sm:$0x7f]
      %v2296 = vld [vmem:[%s1581 + $0x41] sm:$0x7f]
      %v2297 = vld [vmem:[%s1581 + $0x51] sm:$0x7f]
      %v2298 = vld [vmem:[%s1581 + $0x61] sm:$0x7f]
      %v2306 = vrot.slane %v2292, 1
      %v2307 = vrot.slane %v2292, 2
      %v2308 = vrot.slane %v2292, 3
      %v2309 = vrot.slane %v2292, 4
      %v2310 = vrot.slane %v2292, 5
      %v2311 = vrot.slane %v2292, 6
      %v2312 = vrot.slane %v2293, 1
      %v2313 = vrot.slane %v2293, 2
      %v2314 = vrot.slane %v2293, 3
      %v2315 = vrot.slane %v2293, 4
      %v2316 = vrot.slane %v2293, 5
      %v2317 = vrot.slane %v2293, 6
      %v2318 = vrot.slane %v2294, 1
      %v2319 = vrot.slane %v2294, 2
      %v2320 = vrot.slane %v2294, 3
      %v2321 = vrot.slane %v2294, 4
      %v2322 = vrot.slane %v2294, 5
      %v2323 = vrot.slane %v2294, 6
      %v2324 = vrot.slane %v2295, 1
      %v2325 = vrot.slane %v2295, 2
      %v2326 = vrot.slane %v2295, 3
      %v2327 = vrot.slane %v2295, 4
      %v2328 = vrot.slane %v2295, 5
      %v2329 = vrot.slane %v2295, 6
      %v2330 = vrot.slane %v2296, 1
      %v2331 = vrot.slane %v2296, 2
      %v2332 = vrot.slane %v2296, 3
      %v2333 = vrot.slane %v2296, 4
      %v2334 = vrot.slane %v2296, 5
      %v2335 = vrot.slane %v2296, 6
      %v2336 = vrot.slane %v2297, 1
      %v2337 = vrot.slane %v2297, 2
      %v2338 = vrot.slane %v2297, 3
      %v2339 = vrot.slane %v2297, 4
      %v2340 = vrot.slane %v2297, 5
      %v2341 = vrot.slane %v2297, 6
      %v2342 = vrot.slane %v2298, 1
      %v2343 = vrot.slane %v2298, 2
      %v2344 = vrot.slane %v2298, 3
      %v2345 = vrot.slane %v2298, 4
      %v2346 = vrot.slane %v2298, 5
      %v2347 = vrot.slane %v2298, 6
      %v2348 = vld [vmem:[%s5 + $0x20] sm:$0xff]
      %2349 = vst [vmem:[#allocation1] ss:$9 sm:$0xff] %v2292
      %s2350 = scalar_lea.vmem [#allocation1], 1
      %2351 = vst [vmem:[%s2350] ss:$9 sm:$0xff] %v2306
      %s2352 = scalar_lea.vmem [#allocation1], 2
      %2353 = vst [vmem:[%s2352] ss:$9 sm:$0xff] %v2307
      %s2354 = scalar_lea.vmem [#allocation1], 3
      %2355 = vst [vmem:[%s2354] ss:$9 sm:$0xff] %v2308
      %s2356 = scalar_lea.vmem [#allocation1], 4
      %2357 = vst [vmem:[%s2356] ss:$9 sm:$0xff] %v2309
      %s2358 = scalar_lea.vmem [#allocation1], 5
      %2359 = vst [vmem:[%s2358] ss:$9 sm:$0xff] %v2310
      %s2360 = scalar_lea.vmem [#allocation1], 6
      %2361 = vst [vmem:[%s2360] ss:$9 sm:$0xff] %v2311
      %s2362 = scalar_lea.vmem [#allocation1], 7
      %2363 = vst [vmem:[%s2362] ss:$9 sm:$0xff] %v2293
      %v2364 = vld [vmem:[#allocation1] sm:$0xff]
      %2365 = vst [vmem:[#allocation1] ss:$9 sm:$0xff] %v2312
      %2366 = vst [vmem:[%s2350] ss:$9 sm:$0xff] %v2313
      %2367 = vst [vmem:[%s2352] ss:$9 sm:$0xff] %v2314
      %2368 = vst [vmem:[%s2354] ss:$9 sm:$0xff] %v2315
      %2369 = vst [vmem:[%s2356] ss:$9 sm:$0xff] %v2316
      %2370 = vst [vmem:[%s2358] ss:$9 sm:$0xff] %v2317
      %2371 = vst [vmem:[%s2360] ss:$9 sm:$0xff] %v2294
      %2372 = vst [vmem:[%s2362] ss:$9 sm:$0xff] %v2318
      %v2373 = vld [vmem:[#allocation1] sm:$0xff]
      %2374 = vst [vmem:[#allocation1] ss:$9 sm:$0xff] %v2319
      %2375 = vst [vmem:[%s2350] ss:$9 sm:$0xff] %v2320
      %2376 = vst [vmem:[%s2352] ss:$9 sm:$0xff] %v2321
      %2377 = vst [vmem:[%s2354] ss:$9 sm:$0xff] %v2322
      %2378 = vst [vmem:[%s2356] ss:$9 sm:$0xff] %v2323
      %2379 = vst [vmem:[%s2358] ss:$9 sm:$0xff] %v2295
      %2380 = vst [vmem:[%s2360] ss:$9 sm:$0xff] %v2324
      %2381 = vst [vmem:[%s2362] ss:$9 sm:$0xff] %v2325
      %v2382 = vld [vmem:[#allocation1] sm:$0xff]
      %2383 = vst [vmem:[#allocation1] ss:$9 sm:$0xff] %v2326
      %2384 = vst [vmem:[%s2350] ss:$9 sm:$0xff] %v2327
      %2385 = vst [vmem:[%s2352] ss:$9 sm:$0xff] %v2328
      %2386 = vst [vmem:[%s2354] ss:$9 sm:$0xff] %v2329
      %2387 = vst [vmem:[%s2356] ss:$9 sm:$0xff] %v2296
      %2388 = vst [vmem:[%s2358] ss:$9 sm:$0xff] %v2330
      %2389 = vst [vmem:[%s2360] ss:$9 sm:$0xff] %v2331
      %2390 = vst [vmem:[%s2362] ss:$9 sm:$0xff] %v2332
      %v2391 = vld [vmem:[#allocation1] sm:$0xff]
      %2392 = vst [vmem:[#allocation1] ss:$9 sm:$0xff] %v2333
      %2393 = vst [vmem:[%s2350] ss:$9 sm:$0xff] %v2334
      %2394 = vst [vmem:[%s2352] ss:$9 sm:$0xff] %v2335
      %2395 = vst [vmem:[%s2354] ss:$9 sm:$0xff] %v2297
      %2396 = vst [vmem:[%s2356] ss:$9 sm:$0xff] %v2336
      %2397 = vst [vmem:[%s2358] ss:$9 sm:$0xff] %v2337
      %2398 = vst [vmem:[%s2360] ss:$9 sm:$0xff] %v2338
      %2399 = vst [vmem:[%s2362] ss:$9 sm:$0xff] %v2339
      %v2400 = vld [vmem:[#allocation1] sm:$0xff]
      %2401 = vst [vmem:[#allocation1] ss:$9 sm:$0xff] %v2340
      %2402 = vst [vmem:[%s2350] ss:$9 sm:$0xff] %v2341
      %2403 = vst [vmem:[%s2352] ss:$9 sm:$0xff] %v2298
      %2404 = vst [vmem:[%s2354] ss:$9 sm:$0xff] %v2342
      %2405 = vst [vmem:[%s2356] ss:$9 sm:$0xff] %v2343
      %2406 = vst [vmem:[%s2358] ss:$9 sm:$0xff] %v2344
      %2407 = vst [vmem:[%s2360] ss:$9 sm:$0xff] %v2345
      %2408 = vst [vmem:[%s2362] ss:$9 sm:$0xff] %v2346
      %v2409 = vld [vmem:[#allocation1] sm:$0xff]
      %2410 = vst [vmem:[#allocation1] ss:$9 sm:$0xff] %v2347
      %v2411 = vld [vmem:[#allocation1] sm:$0xff]
      %v2412 = vsel %vm1309, %v2364, 0
      %v2414 = vsel %vm1309, %v2373, 0
      %v2416 = vsel %vm1309, %v2382, 0
      %v2418 = vsel %vm1309, %v2391, 0
      %v2420 = vsel %vm1309, %v2400, 0
      %v2422 = vsel %vm1309, %v2409, 0
      %v2424 = vsel %vm1309, %v2411, 0
      %2426 = vmatpush.msra.mxu0 0.0
      %2427 = vmatpush.msra.mxu0 0.0
      %2428 = vmatpush.msra.mxu0 0.0
      %2429 = vmatpush.msra.mxu0 0.0
      %2430 = vmatpush.msra.mxu0 0.0
      %2431 = vmatpush.msra.mxu0 0.0
      %2432 = vmatpush.msra.mxu0 0.0
      %2433 = vmatpush.msra.mxu0 0.0
      %2434 = vmatpush.msra.mxu0 0.0
      %2435 = vmatpush.msra.mxu0 0.0
      %2436 = vmatpush.msra.mxu0 0.0
      %2437 = vmatpush.msra.mxu0 0.0
      %2438 = vmatpush.msra.mxu0 0.0
      %2439 = vmatpush.msra.mxu0 0.0
      %2440 = vmatpush.msra.mxu0 0.0
      %2441 = vmatpush.msra.mxu0 %v2348
      %2442 = vmatmul.f32.gmra.mxu0 %v2412
      %v2443 = vpop.f32.mrf.mxu0
      %v2444 = vadd.f32 0.0, %v2443
      %2445 = vmatmul.f32.gmra.mxu0 %v2414
      %v2446 = vpop.f32.mrf.mxu0
      %v2447 = vadd.f32 0.0, %v2446
      %2448 = vmatmul.f32.gmra.mxu0 %v2416
      %v2449 = vpop.f32.mrf.mxu0
      %v2450 = vadd.f32 0.0, %v2449
      %2451 = vmatmul.f32.gmra.mxu0 %v2418
      %v2452 = vpop.f32.mrf.mxu0
      %v2453 = vadd.f32 0.0, %v2452
      %2454 = vmatmul.f32.gmra.mxu0 %v2420
      %v2455 = vpop.f32.mrf.mxu0
      %v2456 = vadd.f32 0.0, %v2455
      %2457 = vmatmul.f32.gmra.mxu0 %v2422
      %v2458 = vpop.f32.mrf.mxu0
      %v2459 = vadd.f32 0.0, %v2458
      %2460 = vmatmul.f32.gmra.mxu0 %v2424
      %v2461 = vpop.f32.mrf.mxu0
      %v2462 = vadd.f32 0.0, %v2461
      %2463 = vdwg.mxu0
      %v2464 = vadd.f32 %v2285, %v2444
      %v2465 = vadd.f32 %v2286, %v2447
      %v2466 = vadd.f32 %v2287, %v2450
      %v2467 = vadd.f32 %v2288, %v2453
      %v2468 = vadd.f32 %v2289, %v2456
      %v2469 = vadd.f32 %v2290, %v2459
      %v2470 = vadd.f32 %v2291, %v2462
      %v2471 = vld [vmem:[%s1581 + $0x2] sm:$0x7f]
      %v2472 = vld [vmem:[%s1581 + $0x12] sm:$0x7f]
      %v2473 = vld [vmem:[%s1581 + $0x22] sm:$0x7f]
      %v2474 = vld [vmem:[%s1581 + $0x32] sm:$0x7f]
      %v2475 = vld [vmem:[%s1581 + $0x42] sm:$0x7f]
      %v2476 = vld [vmem:[%s1581 + $0x52] sm:$0x7f]
      %v2477 = vld [vmem:[%s1581 + $0x62] sm:$0x7f]
      %v2485 = vrot.slane %v2471, 1
      %v2486 = vrot.slane %v2471, 2
      %v2487 = vrot.slane %v2471, 3
      %v2488 = vrot.slane %v2471, 4
      %v2489 = vrot.slane %v2471, 5
      %v2490 = vrot.slane %v2471, 6
      %v2491 = vrot.slane %v2472, 1
      %v2492 = vrot.slane %v2472, 2
      %v2493 = vrot.slane %v2472, 3
      %v2494 = vrot.slane %v2472, 4
      %v2495 = vrot.slane %v2472, 5
      %v2496 = vrot.slane %v2472, 6
      %v2497 = vrot.slane %v2473, 1
      %v2498 = vrot.slane %v2473, 2
      %v2499 = vrot.slane %v2473, 3
      %v2500 = vrot.slane %v2473, 4
      %v2501 = vrot.slane %v2473, 5
      %v2502 = vrot.slane %v2473, 6
      %v2503 = vrot.slane %v2474, 1
      %v2504 = vrot.slane %v2474, 2
      %v2505 = vrot.slane %v2474, 3
      %v2506 = vrot.slane %v2474, 4
      %v2507 = vrot.slane %v2474, 5
      %v2508 = vrot.slane %v2474, 6
      %v2509 = vrot.slane %v2475, 1
      %v2510 = vrot.slane %v2475, 2
      %v2511 = vrot.slane %v2475, 3
      %v2512 = vrot.slane %v2475, 4
      %v2513 = vrot.slane %v2475, 5
      %v2514 = vrot.slane %v2475, 6
      %v2515 = vrot.slane %v2476, 1
      %v2516 = vrot.slane %v2476, 2
      %v2517 = vrot.slane %v2476, 3
      %v2518 = vrot.slane %v2476, 4
      %v2519 = vrot.slane %v2476, 5
      %v2520 = vrot.slane %v2476, 6
      %v2521 = vrot.slane %v2477, 1
      %v2522 = vrot.slane %v2477, 2
      %v2523 = vrot.slane %v2477, 3
      %v2524 = vrot.slane %v2477, 4
      %v2525 = vrot.slane %v2477, 5
      %v2526 = vrot.slane %v2477, 6
      %v2527 = vld [vmem:[%s5 + $0x28] sm:$0xff]
      %2528 = vst [vmem:[#allocation1] ss:$9 sm:$0xff] %v2471
      %s2529 = scalar_lea.vmem [#allocation1], 1
      %2530 = vst [vmem:[%s2529] ss:$9 sm:$0xff] %v2485
      %s2531 = scalar_lea.vmem [#allocation1], 2
      %2532 = vst [vmem:[%s2531] ss:$9 sm:$0xff] %v2486
      %s2533 = scalar_lea.vmem [#allocation1], 3
      %2534 = vst [vmem:[%s2533] ss:$9 sm:$0xff] %v2487
      %s2535 = scalar_lea.vmem [#allocation1], 4
      %2536 = vst [vmem:[%s2535] ss:$9 sm:$0xff] %v2488
      %s2537 = scalar_lea.vmem [#allocation1], 5
      %2538 = vst [vmem:[%s2537] ss:$9 sm:$0xff] %v2489
      %s2539 = scalar_lea.vmem [#allocation1], 6
      %2540 = vst [vmem:[%s2539] ss:$9 sm:$0xff] %v2490
      %s2541 = scalar_lea.vmem [#allocation1], 7
      %2542 = vst [vmem:[%s2541] ss:$9 sm:$0xff] %v2472
      %v2543 = vld [vmem:[#allocation1] sm:$0xff]
      %2544 = vst [vmem:[#allocation1] ss:$9 sm:$0xff] %v2491
      %2545 = vst [vmem:[%s2529] ss:$9 sm:$0xff] %v2492
      %2546 = vst [vmem:[%s2531] ss:$9 sm:$0xff] %v2493
      %2547 = vst [vmem:[%s2533] ss:$9 sm:$0xff] %v2494
      %2548 = vst [vmem:[%s2535] ss:$9 sm:$0xff] %v2495
      %2549 = vst [vmem:[%s2537] ss:$9 sm:$0xff] %v2496
      %2550 = vst [vmem:[%s2539] ss:$9 sm:$0xff] %v2473
      %2551 = vst [vmem:[%s2541] ss:$9 sm:$0xff] %v2497
      %v2552 = vld [vmem:[#allocation1] sm:$0xff]
      %2553 = vst [vmem:[#allocation1] ss:$9 sm:$0xff] %v2498
      %2554 = vst [vmem:[%s2529] ss:$9 sm:$0xff] %v2499
      %2555 = vst [vmem:[%s2531] ss:$9 sm:$0xff] %v2500
      %2556 = vst [vmem:[%s2533] ss:$9 sm:$0xff] %v2501
      %2557 = vst [vmem:[%s2535] ss:$9 sm:$0xff] %v2502
      %2558 = vst [vmem:[%s2537] ss:$9 sm:$0xff] %v2474
      %2559 = vst [vmem:[%s2539] ss:$9 sm:$0xff] %v2503
      %2560 = vst [vmem:[%s2541] ss:$9 sm:$0xff] %v2504
      %v2561 = vld [vmem:[#allocation1] sm:$0xff]
      %2562 = vst [vmem:[#allocation1] ss:$9 sm:$0xff] %v2505
      %2563 = vst [vmem:[%s2529] ss:$9 sm:$0xff] %v2506
      %2564 = vst [vmem:[%s2531] ss:$9 sm:$0xff] %v2507
      %2565 = vst [vmem:[%s2533] ss:$9 sm:$0xff] %v2508
      %2566 = vst [vmem:[%s2535] ss:$9 sm:$0xff] %v2475
      %2567 = vst [vmem:[%s2537] ss:$9 sm:$0xff] %v2509
      %2568 = vst [vmem:[%s2539] ss:$9 sm:$0xff] %v2510
      %2569 = vst [vmem:[%s2541] ss:$9 sm:$0xff] %v2511
      %v2570 = vld [vmem:[#allocation1] sm:$0xff]
      %2571 = vst [vmem:[#allocation1] ss:$9 sm:$0xff] %v2512
      %2572 = vst [vmem:[%s2529] ss:$9 sm:$0xff] %v2513
      %2573 = vst [vmem:[%s2531] ss:$9 sm:$0xff] %v2514
      %2574 = vst [vmem:[%s2533] ss:$9 sm:$0xff] %v2476
      %2575 = vst [vmem:[%s2535] ss:$9 sm:$0xff] %v2515
      %2576 = vst [vmem:[%s2537] ss:$9 sm:$0xff] %v2516
      %2577 = vst [vmem:[%s2539] ss:$9 sm:$0xff] %v2517
      %2578 = vst [vmem:[%s2541] ss:$9 sm:$0xff] %v2518
      %v2579 = vld [vmem:[#allocation1] sm:$0xff]
      %2580 = vst [vmem:[#allocation1] ss:$9 sm:$0xff] %v2519
      %2581 = vst [vmem:[%s2529] ss:$9 sm:$0xff] %v2520
      %2582 = vst [vmem:[%s2531] ss:$9 sm:$0xff] %v2477
      %2583 = vst [vmem:[%s2533] ss:$9 sm:$0xff] %v2521
      %2584 = vst [vmem:[%s2535] ss:$9 sm:$0xff] %v2522
      %2585 = vst [vmem:[%s2537] ss:$9 sm:$0xff] %v2523
      %2586 = vst [vmem:[%s2539] ss:$9 sm:$0xff] %v2524
      %2587 = vst [vmem:[%s2541] ss:$9 sm:$0xff] %v2525
      %v2588 = vld [vmem:[#allocation1] sm:$0xff]
      %2589 = vst [vmem:[#allocation1] ss:$9 sm:$0xff] %v2526
      %v2590 = vld [vmem:[#allocation1] sm:$0xff]
      %v2591 = vsel %vm1309, %v2543, 0
      %v2593 = vsel %vm1309, %v2552, 0
      %v2595 = vsel %vm1309, %v2561, 0
      %v2597 = vsel %vm1309, %v2570, 0
      %v2599 = vsel %vm1309, %v2579, 0
      %v2601 = vsel %vm1309, %v2588, 0
      %v2603 = vsel %vm1309, %v2590, 0
      %2605 = vmatpush.msra.mxu0 0.0
      %2606 = vmatpush.msra.mxu0 0.0
      %2607 = vmatpush.msra.mxu0 0.0
      %2608 = vmatpush.msra.mxu0 0.0
      %2609 = vmatpush.msra.mxu0 0.0
      %2610 = vmatpush.msra.mxu0 0.0
      %2611 = vmatpush.msra.mxu0 0.0
      %2612 = vmatpush.msra.mxu0 0.0
      %2613 = vmatpush.msra.mxu0 0.0
      %2614 = vmatpush.msra.mxu0 0.0
      %2615 = vmatpush.msra.mxu0 0.0
      %2616 = vmatpush.msra.mxu0 0.0
      %2617 = vmatpush.msra.mxu0 0.0
      %2618 = vmatpush.msra.mxu0 0.0
      %2619 = vmatpush.msra.mxu0 0.0
      %2620 = vmatpush.msra.mxu0 %v2527
      %2621 = vmatmul.f32.gmra.mxu0 %v2591
      %v2622 = vpop.f32.mrf.mxu0
      %v2623 = vadd.f32 0.0, %v2622
      %2624 = vmatmul.f32.gmra.mxu0 %v2593
      %v2625 = vpop.f32.mrf.mxu0
      %v2626 = vadd.f32 0.0, %v2625
      %2627 = vmatmul.f32.gmra.mxu0 %v2595
      %v2628 = vpop.f32.mrf.mxu0
      %v2629 = vadd.f32 0.0, %v2628
      %2630 = vmatmul.f32.gmra.mxu0 %v2597
      %v2631 = vpop.f32.mrf.mxu0
      %v2632 = vadd.f32 0.0, %v2631
      %2633 = vmatmul.f32.gmra.mxu0 %v2599
      %v2634 = vpop.f32.mrf.mxu0
      %v2635 = vadd.f32 0.0, %v2634
      %2636 = vmatmul.f32.gmra.mxu0 %v2601
      %v2637 = vpop.f32.mrf.mxu0
      %v2638 = vadd.f32 0.0, %v2637
      %2639 = vmatmul.f32.gmra.mxu0 %v2603
      %v2640 = vpop.f32.mrf.mxu0
      %v2641 = vadd.f32 0.0, %v2640
      %2642 = vdwg.mxu0
      %v2643 = vadd.f32 %v2464, %v2623
      %v2644 = vadd.f32 %v2465, %v2626
      %v2645 = vadd.f32 %v2466, %v2629
      %v2646 = vadd.f32 %v2467, %v2632
      %v2647 = vadd.f32 %v2468, %v2635
      %v2648 = vadd.f32 %v2469, %v2638
      %v2649 = vadd.f32 %v2470, %v2641
      %s2650 = scalar_lea.vmem [#allocation2], 32
      %v2651 = vld [vmem:[%s2650] sm:$0x7f]
      %v2652 = vld [vmem:[%s2650 + $0x10] sm:$0x7f]
      %v2653 = vld [vmem:[%s2650 + $0x20] sm:$0x7f]
      %v2654 = vld [vmem:[%s2650 + $0x30] sm:$0x7f]
      %v2655 = vld [vmem:[%s2650 + $0x40] sm:$0x7f]
      %v2656 = vld [vmem:[%s2650 + $0x50] sm:$0x7f]
      %v2657 = vld [vmem:[%s2650 + $0x60] sm:$0x7f]
      %v2665 = vrot.slane %v2651, 1
      %v2666 = vrot.slane %v2651, 2
      %v2667 = vrot.slane %v2651, 3
      %v2668 = vrot.slane %v2651, 4
      %v2669 = vrot.slane %v2651, 5
      %v2670 = vrot.slane %v2651, 6
      %v2671 = vrot.slane %v2652, 1
      %v2672 = vrot.slane %v2652, 2
      %v2673 = vrot.slane %v2652, 3
      %v2674 = vrot.slane %v2652, 4
      %v2675 = vrot.slane %v2652, 5
      %v2676 = vrot.slane %v2652, 6
      %v2677 = vrot.slane %v2653, 1
      %v2678 = vrot.slane %v2653, 2
      %v2679 = vrot.slane %v2653, 3
      %v2680 = vrot.slane %v2653, 4
      %v2681 = vrot.slane %v2653, 5
      %v2682 = vrot.slane %v2653, 6
      %v2683 = vrot.slane %v2654, 1
      %v2684 = vrot.slane %v2654, 2
      %v2685 = vrot.slane %v2654, 3
      %v2686 = vrot.slane %v2654, 4
      %v2687 = vrot.slane %v2654, 5
      %v2688 = vrot.slane %v2654, 6
      %v2689 = vrot.slane %v2655, 1
      %v2690 = vrot.slane %v2655, 2
      %v2691 = vrot.slane %v2655, 3
      %v2692 = vrot.slane %v2655, 4
      %v2693 = vrot.slane %v2655, 5
      %v2694 = vrot.slane %v2655, 6
      %v2695 = vrot.slane %v2656, 1
      %v2696 = vrot.slane %v2656, 2
      %v2697 = vrot.slane %v2656, 3
      %v2698 = vrot.slane %v2656, 4
      %v2699 = vrot.slane %v2656, 5
      %v2700 = vrot.slane %v2656, 6
      %v2701 = vrot.slane %v2657, 1
      %v2702 = vrot.slane %v2657, 2
      %v2703 = vrot.slane %v2657, 3
      %v2704 = vrot.slane %v2657, 4
      %v2705 = vrot.slane %v2657, 5
      %v2706 = vrot.slane %v2657, 6
      %v2707 = vld [vmem:[%s5 + $0x30] sm:$0xff]
      %2708 = vst [vmem:[#allocation1] ss:$9 sm:$0xff] %v2651
      %s2709 = scalar_lea.vmem [#allocation1], 1
      %2710 = vst [vmem:[%s2709] ss:$9 sm:$0xff] %v2665
      %s2711 = scalar_lea.vmem [#allocation1], 2
      %2712 = vst [vmem:[%s2711] ss:$9 sm:$0xff] %v2666
      %s2713 = scalar_lea.vmem [#allocation1], 3
      %2714 = vst [vmem:[%s2713] ss:$9 sm:$0xff] %v2667
      %s2715 = scalar_lea.vmem [#allocation1], 4
      %2716 = vst [vmem:[%s2715] ss:$9 sm:$0xff] %v2668
      %s2717 = scalar_lea.vmem [#allocation1], 5
      %2718 = vst [vmem:[%s2717] ss:$9 sm:$0xff] %v2669
      %s2719 = scalar_lea.vmem [#allocation1], 6
      %2720 = vst [vmem:[%s2719] ss:$9 sm:$0xff] %v2670
      %s2721 = scalar_lea.vmem [#allocation1], 7
      %2722 = vst [vmem:[%s2721] ss:$9 sm:$0xff] %v2652
      %v2723 = vld [vmem:[#allocation1] sm:$0xff]
      %2724 = vst [vmem:[#allocation1] ss:$9 sm:$0xff] %v2671
      %2725 = vst [vmem:[%s2709] ss:$9 sm:$0xff] %v2672
      %2726 = vst [vmem:[%s2711] ss:$9 sm:$0xff] %v2673
      %2727 = vst [vmem:[%s2713] ss:$9 sm:$0xff] %v2674
      %2728 = vst [vmem:[%s2715] ss:$9 sm:$0xff] %v2675
      %2729 = vst [vmem:[%s2717] ss:$9 sm:$0xff] %v2676
      %2730 = vst [vmem:[%s2719] ss:$9 sm:$0xff] %v2653
      %2731 = vst [vmem:[%s2721] ss:$9 sm:$0xff] %v2677
      %v2732 = vld [vmem:[#allocation1] sm:$0xff]
      %2733 = vst [vmem:[#allocation1] ss:$9 sm:$0xff] %v2678
      %2734 = vst [vmem:[%s2709] ss:$9 sm:$0xff] %v2679
      %2735 = vst [vmem:[%s2711] ss:$9 sm:$0xff] %v2680
      %2736 = vst [vmem:[%s2713] ss:$9 sm:$0xff] %v2681
      %2737 = vst [vmem:[%s2715] ss:$9 sm:$0xff] %v2682
      %2738 = vst [vmem:[%s2717] ss:$9 sm:$0xff] %v2654
      %2739 = vst [vmem:[%s2719] ss:$9 sm:$0xff] %v2683
      %2740 = vst [vmem:[%s2721] ss:$9 sm:$0xff] %v2684
      %v2741 = vld [vmem:[#allocation1] sm:$0xff]
      %2742 = vst [vmem:[#allocation1] ss:$9 sm:$0xff] %v2685
      %2743 = vst [vmem:[%s2709] ss:$9 sm:$0xff] %v2686
      %2744 = vst [vmem:[%s2711] ss:$9 sm:$0xff] %v2687
      %2745 = vst [vmem:[%s2713] ss:$9 sm:$0xff] %v2688
      %2746 = vst [vmem:[%s2715] ss:$9 sm:$0xff] %v2655
      %2747 = vst [vmem:[%s2717] ss:$9 sm:$0xff] %v2689
      %2748 = vst [vmem:[%s2719] ss:$9 sm:$0xff] %v2690
      %2749 = vst [vmem:[%s2721] ss:$9 sm:$0xff] %v2691
      %v2750 = vld [vmem:[#allocation1] sm:$0xff]
      %2751 = vst [vmem:[#allocation1] ss:$9 sm:$0xff] %v2692
      %2752 = vst [vmem:[%s2709] ss:$9 sm:$0xff] %v2693
      %2753 = vst [vmem:[%s2711] ss:$9 sm:$0xff] %v2694
      %2754 = vst [vmem:[%s2713] ss:$9 sm:$0xff] %v2656
      %2755 = vst [vmem:[%s2715] ss:$9 sm:$0xff] %v2695
      %2756 = vst [vmem:[%s2717] ss:$9 sm:$0xff] %v2696
      %2757 = vst [vmem:[%s2719] ss:$9 sm:$0xff] %v2697
      %2758 = vst [vmem:[%s2721] ss:$9 sm:$0xff] %v2698
      %v2759 = vld [vmem:[#allocation1] sm:$0xff]
      %2760 = vst [vmem:[#allocation1] ss:$9 sm:$0xff] %v2699
      %2761 = vst [vmem:[%s2709] ss:$9 sm:$0xff] %v2700
      %2762 = vst [vmem:[%s2711] ss:$9 sm:$0xff] %v2657
      %2763 = vst [vmem:[%s2713] ss:$9 sm:$0xff] %v2701
      %2764 = vst [vmem:[%s2715] ss:$9 sm:$0xff] %v2702
      %2765 = vst [vmem:[%s2717] ss:$9 sm:$0xff] %v2703
      %2766 = vst [vmem:[%s2719] ss:$9 sm:$0xff] %v2704
      %2767 = vst [vmem:[%s2721] ss:$9 sm:$0xff] %v2705
      %v2768 = vld [vmem:[#allocation1] sm:$0xff]
      %2769 = vst [vmem:[#allocation1] ss:$9 sm:$0xff] %v2706
      %v2770 = vld [vmem:[#allocation1] sm:$0xff]
      %v2771 = vsel %vm1309, %v2723, 0
      %v2773 = vsel %vm1309, %v2732, 0
      %v2775 = vsel %vm1309, %v2741, 0
      %v2777 = vsel %vm1309, %v2750, 0
      %v2779 = vsel %vm1309, %v2759, 0
      %v2781 = vsel %vm1309, %v2768, 0
      %v2783 = vsel %vm1309, %v2770, 0
      %2785 = vmatpush.msra.mxu0 0.0
      %2786 = vmatpush.msra.mxu0 0.0
      %2787 = vmatpush.msra.mxu0 0.0
      %2788 = vmatpush.msra.mxu0 0.0
      %2789 = vmatpush.msra.mxu0 0.0
      %2790 = vmatpush.msra.mxu0 0.0
      %2791 = vmatpush.msra.mxu0 0.0
      %2792 = vmatpush.msra.mxu0 0.0
      %2793 = vmatpush.msra.mxu0 0.0
      %2794 = vmatpush.msra.mxu0 0.0
      %2795 = vmatpush.msra.mxu0 0.0
      %2796 = vmatpush.msra.mxu0 0.0
      %2797 = vmatpush.msra.mxu0 0.0
      %2798 = vmatpush.msra.mxu0 0.0
      %2799 = vmatpush.msra.mxu0 0.0
      %2800 = vmatpush.msra.mxu0 %v2707
      %2801 = vmatmul.f32.gmra.mxu0 %v2771
      %v2802 = vpop.f32.mrf.mxu0
      %v2803 = vadd.f32 0.0, %v2802
      %2804 = vmatmul.f32.gmra.mxu0 %v2773
      %v2805 = vpop.f32.mrf.mxu0
      %v2806 = vadd.f32 0.0, %v2805
      %2807 = vmatmul.f32.gmra.mxu0 %v2775
      %v2808 = vpop.f32.mrf.mxu0
      %v2809 = vadd.f32 0.0, %v2808
      %2810 = vmatmul.f32.gmra.mxu0 %v2777
      %v2811 = vpop.f32.mrf.mxu0
      %v2812 = vadd.f32 0.0, %v2811
      %2813 = vmatmul.f32.gmra.mxu0 %v2779
      %v2814 = vpop.f32.mrf.mxu0
      %v2815 = vadd.f32 0.0, %v2814
      %2816 = vmatmul.f32.gmra.mxu0 %v2781
      %v2817 = vpop.f32.mrf.mxu0
      %v2818 = vadd.f32 0.0, %v2817
      %2819 = vmatmul.f32.gmra.mxu0 %v2783
      %v2820 = vpop.f32.mrf.mxu0
      %v2821 = vadd.f32 0.0, %v2820
      %2822 = vdwg.mxu0
      %v2823 = vadd.f32 %v2643, %v2803
      %v2824 = vadd.f32 %v2644, %v2806
      %v2825 = vadd.f32 %v2645, %v2809
      %v2826 = vadd.f32 %v2646, %v2812
      %v2827 = vadd.f32 %v2647, %v2815
      %v2828 = vadd.f32 %v2648, %v2818
      %v2829 = vadd.f32 %v2649, %v2821
      %v2830 = vld [vmem:[%s2650 + $0x1] sm:$0x7f]
      %v2831 = vld [vmem:[%s2650 + $0x11] sm:$0x7f]
      %v2832 = vld [vmem:[%s2650 + $0x21] sm:$0x7f]
      %v2833 = vld [vmem:[%s2650 + $0x31] sm:$0x7f]
      %v2834 = vld [vmem:[%s2650 + $0x41] sm:$0x7f]
      %v2835 = vld [vmem:[%s2650 + $0x51] sm:$0x7f]
      %v2836 = vld [vmem:[%s2650 + $0x61] sm:$0x7f]
      %v2844 = vrot.slane %v2830, 1
      %v2845 = vrot.slane %v2830, 2
      %v2846 = vrot.slane %v2830, 3
      %v2847 = vrot.slane %v2830, 4
      %v2848 = vrot.slane %v2830, 5
      %v2849 = vrot.slane %v2830, 6
      %v2850 = vrot.slane %v2831, 1
      %v2851 = vrot.slane %v2831, 2
      %v2852 = vrot.slane %v2831, 3
      %v2853 = vrot.slane %v2831, 4
      %v2854 = vrot.slane %v2831, 5
      %v2855 = vrot.slane %v2831, 6
      %v2856 = vrot.slane %v2832, 1
      %v2857 = vrot.slane %v2832, 2
      %v2858 = vrot.slane %v2832, 3
      %v2859 = vrot.slane %v2832, 4
      %v2860 = vrot.slane %v2832, 5
      %v2861 = vrot.slane %v2832, 6
      %v2862 = vrot.slane %v2833, 1
      %v2863 = vrot.slane %v2833, 2
      %v2864 = vrot.slane %v2833, 3
      %v2865 = vrot.slane %v2833, 4
      %v2866 = vrot.slane %v2833, 5
      %v2867 = vrot.slane %v2833, 6
      %v2868 = vrot.slane %v2834, 1
      %v2869 = vrot.slane %v2834, 2
      %v2870 = vrot.slane %v2834, 3
      %v2871 = vrot.slane %v2834, 4
      %v2872 = vrot.slane %v2834, 5
      %v2873 = vrot.slane %v2834, 6
      %v2874 = vrot.slane %v2835, 1
      %v2875 = vrot.slane %v2835, 2
      %v2876 = vrot.slane %v2835, 3
      %v2877 = vrot.slane %v2835, 4
      %v2878 = vrot.slane %v2835, 5
      %v2879 = vrot.slane %v2835, 6
      %v2880 = vrot.slane %v2836, 1
      %v2881 = vrot.slane %v2836, 2
      %v2882 = vrot.slane %v2836, 3
      %v2883 = vrot.slane %v2836, 4
      %v2884 = vrot.slane %v2836, 5
      %v2885 = vrot.slane %v2836, 6
      %v2886 = vld [vmem:[%s5 + $0x38] sm:$0xff]
      %2887 = vst [vmem:[#allocation1] ss:$9 sm:$0xff] %v2830
      %s2888 = scalar_lea.vmem [#allocation1], 1
      %2889 = vst [vmem:[%s2888] ss:$9 sm:$0xff] %v2844
      %s2890 = scalar_lea.vmem [#allocation1], 2
      %2891 = vst [vmem:[%s2890] ss:$9 sm:$0xff] %v2845
      %s2892 = scalar_lea.vmem [#allocation1], 3
      %2893 = vst [vmem:[%s2892] ss:$9 sm:$0xff] %v2846
      %s2894 = scalar_lea.vmem [#allocation1], 4
      %2895 = vst [vmem:[%s2894] ss:$9 sm:$0xff] %v2847
      %s2896 = scalar_lea.vmem [#allocation1], 5
      %2897 = vst [vmem:[%s2896] ss:$9 sm:$0xff] %v2848
      %s2898 = scalar_lea.vmem [#allocation1], 6
      %2899 = vst [vmem:[%s2898] ss:$9 sm:$0xff] %v2849
      %s2900 = scalar_lea.vmem [#allocation1], 7
      %2901 = vst [vmem:[%s2900] ss:$9 sm:$0xff] %v2831
      %v2902 = vld [vmem:[#allocation1] sm:$0xff]
      %2903 = vst [vmem:[#allocation1] ss:$9 sm:$0xff] %v2850
      %2904 = vst [vmem:[%s2888] ss:$9 sm:$0xff] %v2851
      %2905 = vst [vmem:[%s2890] ss:$9 sm:$0xff] %v2852
      %2906 = vst [vmem:[%s2892] ss:$9 sm:$0xff] %v2853
      %2907 = vst [vmem:[%s2894] ss:$9 sm:$0xff] %v2854
      %2908 = vst [vmem:[%s2896] ss:$9 sm:$0xff] %v2855
      %2909 = vst [vmem:[%s2898] ss:$9 sm:$0xff] %v2832
      %2910 = vst [vmem:[%s2900] ss:$9 sm:$0xff] %v2856
      %v2911 = vld [vmem:[#allocation1] sm:$0xff]
      %2912 = vst [vmem:[#allocation1] ss:$9 sm:$0xff] %v2857
      %2913 = vst [vmem:[%s2888] ss:$9 sm:$0xff] %v2858
      %2914 = vst [vmem:[%s2890] ss:$9 sm:$0xff] %v2859
      %2915 = vst [vmem:[%s2892] ss:$9 sm:$0xff] %v2860
      %2916 = vst [vmem:[%s2894] ss:$9 sm:$0xff] %v2861
      %2917 = vst [vmem:[%s2896] ss:$9 sm:$0xff] %v2833
      %2918 = vst [vmem:[%s2898] ss:$9 sm:$0xff] %v2862
      %2919 = vst [vmem:[%s2900] ss:$9 sm:$0xff] %v2863
      %v2920 = vld [vmem:[#allocation1] sm:$0xff]
      %2921 = vst [vmem:[#allocation1] ss:$9 sm:$0xff] %v2864
      %2922 = vst [vmem:[%s2888] ss:$9 sm:$0xff] %v2865
      %2923 = vst [vmem:[%s2890] ss:$9 sm:$0xff] %v2866
      %2924 = vst [vmem:[%s2892] ss:$9 sm:$0xff] %v2867
      %2925 = vst [vmem:[%s2894] ss:$9 sm:$0xff] %v2834
      %2926 = vst [vmem:[%s2896] ss:$9 sm:$0xff] %v2868
      %2927 = vst [vmem:[%s2898] ss:$9 sm:$0xff] %v2869
      %2928 = vst [vmem:[%s2900] ss:$9 sm:$0xff] %v2870
      %v2929 = vld [vmem:[#allocation1] sm:$0xff]
      %2930 = vst [vmem:[#allocation1] ss:$9 sm:$0xff] %v2871
      %2931 = vst [vmem:[%s2888] ss:$9 sm:$0xff] %v2872
      %2932 = vst [vmem:[%s2890] ss:$9 sm:$0xff] %v2873
      %2933 = vst [vmem:[%s2892] ss:$9 sm:$0xff] %v2835
      %2934 = vst [vmem:[%s2894] ss:$9 sm:$0xff] %v2874
      %2935 = vst [vmem:[%s2896] ss:$9 sm:$0xff] %v2875
      %2936 = vst [vmem:[%s2898] ss:$9 sm:$0xff] %v2876
      %2937 = vst [vmem:[%s2900] ss:$9 sm:$0xff] %v2877
      %v2938 = vld [vmem:[#allocation1] sm:$0xff]
      %2939 = vst [vmem:[#allocation1] ss:$9 sm:$0xff] %v2878
      %2940 = vst [vmem:[%s2888] ss:$9 sm:$0xff] %v2879
      %2941 = vst [vmem:[%s2890] ss:$9 sm:$0xff] %v2836
      %2942 = vst [vmem:[%s2892] ss:$9 sm:$0xff] %v2880
      %2943 = vst [vmem:[%s2894] ss:$9 sm:$0xff] %v2881
      %2944 = vst [vmem:[%s2896] ss:$9 sm:$0xff] %v2882
      %2945 = vst [vmem:[%s2898] ss:$9 sm:$0xff] %v2883
      %2946 = vst [vmem:[%s2900] ss:$9 sm:$0xff] %v2884
      %v2947 = vld [vmem:[#allocation1] sm:$0xff]
      %2948 = vst [vmem:[#allocation1] ss:$9 sm:$0xff] %v2885
      %v2949 = vld [vmem:[#allocation1] sm:$0xff]
      %v2950 = vsel %vm1309, %v2902, 0
      %v2952 = vsel %vm1309, %v2911, 0
      %v2954 = vsel %vm1309, %v2920, 0
      %v2956 = vsel %vm1309, %v2929, 0
      %v2958 = vsel %vm1309, %v2938, 0
      %v2960 = vsel %vm1309, %v2947, 0
      %v2962 = vsel %vm1309, %v2949, 0
      %2964 = vmatpush.msra.mxu0 0.0
      %2965 = vmatpush.msra.mxu0 0.0
      %2966 = vmatpush.msra.mxu0 0.0
      %2967 = vmatpush.msra.mxu0 0.0
      %2968 = vmatpush.msra.mxu0 0.0
      %2969 = vmatpush.msra.mxu0 0.0
      %2970 = vmatpush.msra.mxu0 0.0
      %2971 = vmatpush.msra.mxu0 0.0
      %2972 = vmatpush.msra.mxu0 0.0
      %2973 = vmatpush.msra.mxu0 0.0
      %2974 = vmatpush.msra.mxu0 0.0
      %2975 = vmatpush.msra.mxu0 0.0
      %2976 = vmatpush.msra.mxu0 0.0
      %2977 = vmatpush.msra.mxu0 0.0
      %2978 = vmatpush.msra.mxu0 0.0
      %2979 = vmatpush.msra.mxu0 %v2886
      %2980 = vmatmul.f32.gmra.mxu0 %v2950
      %v2981 = vpop.f32.mrf.mxu0
      %v2982 = vadd.f32 0.0, %v2981
      %2983 = vmatmul.f32.gmra.mxu0 %v2952
      %v2984 = vpop.f32.mrf.mxu0
      %v2985 = vadd.f32 0.0, %v2984
      %2986 = vmatmul.f32.gmra.mxu0 %v2954
      %v2987 = vpop.f32.mrf.mxu0
      %v2988 = vadd.f32 0.0, %v2987
      %2989 = vmatmul.f32.gmra.mxu0 %v2956
      %v2990 = vpop.f32.mrf.mxu0
      %v2991 = vadd.f32 0.0, %v2990
      %2992 = vmatmul.f32.gmra.mxu0 %v2958
      %v2993 = vpop.f32.mrf.mxu0
      %v2994 = vadd.f32 0.0, %v2993
      %2995 = vmatmul.f32.gmra.mxu0 %v2960
      %v2996 = vpop.f32.mrf.mxu0
      %v2997 = vadd.f32 0.0, %v2996
      %2998 = vmatmul.f32.gmra.mxu0 %v2962
      %v2999 = vpop.f32.mrf.mxu0
      %v3000 = vadd.f32 0.0, %v2999
      %3001 = vdwg.mxu0
      %v3002 = vadd.f32 %v2823, %v2982
      %v3003 = vadd.f32 %v2824, %v2985
      %v3004 = vadd.f32 %v2825, %v2988
      %v3005 = vadd.f32 %v2826, %v2991
      %v3006 = vadd.f32 %v2827, %v2994
      %v3007 = vadd.f32 %v2828, %v2997
      %v3008 = vadd.f32 %v2829, %v3000
      %v3009 = vld [vmem:[%s2650 + $0x2] sm:$0x7f]
      %v3010 = vld [vmem:[%s2650 + $0x12] sm:$0x7f]
      %v3011 = vld [vmem:[%s2650 + $0x22] sm:$0x7f]
      %v3012 = vld [vmem:[%s2650 + $0x32] sm:$0x7f]
      %v3013 = vld [vmem:[%s2650 + $0x42] sm:$0x7f]
      %v3014 = vld [vmem:[%s2650 + $0x52] sm:$0x7f]
      %v3015 = vld [vmem:[%s2650 + $0x62] sm:$0x7f]
      %v3023 = vrot.slane %v3009, 1
      %v3024 = vrot.slane %v3009, 2
      %v3025 = vrot.slane %v3009, 3
      %v3026 = vrot.slane %v3009, 4
      %v3027 = vrot.slane %v3009, 5
      %v3028 = vrot.slane %v3009, 6
      %v3029 = vrot.slane %v3010, 1
      %v3030 = vrot.slane %v3010, 2
      %v3031 = vrot.slane %v3010, 3
      %v3032 = vrot.slane %v3010, 4
      %v3033 = vrot.slane %v3010, 5
      %v3034 = vrot.slane %v3010, 6
      %v3035 = vrot.slane %v3011, 1
      %v3036 = vrot.slane %v3011, 2
      %v3037 = vrot.slane %v3011, 3
      %v3038 = vrot.slane %v3011, 4
      %v3039 = vrot.slane %v3011, 5
      %v3040 = vrot.slane %v3011, 6
      %v3041 = vrot.slane %v3012, 1
      %v3042 = vrot.slane %v3012, 2
      %v3043 = vrot.slane %v3012, 3
      %v3044 = vrot.slane %v3012, 4
      %v3045 = vrot.slane %v3012, 5
      %v3046 = vrot.slane %v3012, 6
      %v3047 = vrot.slane %v3013, 1
      %v3048 = vrot.slane %v3013, 2
      %v3049 = vrot.slane %v3013, 3
      %v3050 = vrot.slane %v3013, 4
      %v3051 = vrot.slane %v3013, 5
      %v3052 = vrot.slane %v3013, 6
      %v3053 = vrot.slane %v3014, 1
      %v3054 = vrot.slane %v3014, 2
      %v3055 = vrot.slane %v3014, 3
      %v3056 = vrot.slane %v3014, 4
      %v3057 = vrot.slane %v3014, 5
      %v3058 = vrot.slane %v3014, 6
      %v3059 = vrot.slane %v3015, 1
      %v3060 = vrot.slane %v3015, 2
      %v3061 = vrot.slane %v3015, 3
      %v3062 = vrot.slane %v3015, 4
      %v3063 = vrot.slane %v3015, 5
      %v3064 = vrot.slane %v3015, 6
      %v3065 = vld [vmem:[%s5 + $0x40] sm:$0xff]
      %3066 = vst [vmem:[#allocation1] ss:$9 sm:$0xff] %v3009
      %s3067 = scalar_lea.vmem [#allocation1], 1
      %3068 = vst [vmem:[%s3067] ss:$9 sm:$0xff] %v3023
      %s3069 = scalar_lea.vmem [#allocation1], 2
      %3070 = vst [vmem:[%s3069] ss:$9 sm:$0xff] %v3024
      %s3071 = scalar_lea.vmem [#allocation1], 3
      %3072 = vst [vmem:[%s3071] ss:$9 sm:$0xff] %v3025
      %s3073 = scalar_lea.vmem [#allocation1], 4
      %3074 = vst [vmem:[%s3073] ss:$9 sm:$0xff] %v3026
      %s3075 = scalar_lea.vmem [#allocation1], 5
      %3076 = vst [vmem:[%s3075] ss:$9 sm:$0xff] %v3027
      %s3077 = scalar_lea.vmem [#allocation1], 6
      %3078 = vst [vmem:[%s3077] ss:$9 sm:$0xff] %v3028
      %s3079 = scalar_lea.vmem [#allocation1], 7
      %3080 = vst [vmem:[%s3079] ss:$9 sm:$0xff] %v3010
      %v3081 = vld [vmem:[#allocation1] sm:$0xff]
      %3082 = vst [vmem:[#allocation1] ss:$9 sm:$0xff] %v3029
      %3083 = vst [vmem:[%s3067] ss:$9 sm:$0xff] %v3030
      %3084 = vst [vmem:[%s3069] ss:$9 sm:$0xff] %v3031
      %3085 = vst [vmem:[%s3071] ss:$9 sm:$0xff] %v3032
      %3086 = vst [vmem:[%s3073] ss:$9 sm:$0xff] %v3033
      %3087 = vst [vmem:[%s3075] ss:$9 sm:$0xff] %v3034
      %3088 = vst [vmem:[%s3077] ss:$9 sm:$0xff] %v3011
      %3089 = vst [vmem:[%s3079] ss:$9 sm:$0xff] %v3035
      %v3090 = vld [vmem:[#allocation1] sm:$0xff]
      %3091 = vst [vmem:[#allocation1] ss:$9 sm:$0xff] %v3036
      %3092 = vst [vmem:[%s3067] ss:$9 sm:$0xff] %v3037
      %3093 = vst [vmem:[%s3069] ss:$9 sm:$0xff] %v3038
      %3094 = vst [vmem:[%s3071] ss:$9 sm:$0xff] %v3039
      %3095 = vst [vmem:[%s3073] ss:$9 sm:$0xff] %v3040
      %3096 = vst [vmem:[%s3075] ss:$9 sm:$0xff] %v3012
      %3097 = vst [vmem:[%s3077] ss:$9 sm:$0xff] %v3041
      %3098 = vst [vmem:[%s3079] ss:$9 sm:$0xff] %v3042
      %v3099 = vld [vmem:[#allocation1] sm:$0xff]
      %3100 = vst [vmem:[#allocation1] ss:$9 sm:$0xff] %v3043
      %3101 = vst [vmem:[%s3067] ss:$9 sm:$0xff] %v3044
      %3102 = vst [vmem:[%s3069] ss:$9 sm:$0xff] %v3045
      %3103 = vst [vmem:[%s3071] ss:$9 sm:$0xff] %v3046
      %3104 = vst [vmem:[%s3073] ss:$9 sm:$0xff] %v3013
      %3105 = vst [vmem:[%s3075] ss:$9 sm:$0xff] %v3047
      %3106 = vst [vmem:[%s3077] ss:$9 sm:$0xff] %v3048
      %3107 = vst [vmem:[%s3079] ss:$9 sm:$0xff] %v3049
      %v3108 = vld [vmem:[#allocation1] sm:$0xff]
      %3109 = vst [vmem:[#allocation1] ss:$9 sm:$0xff] %v3050
      %3110 = vst [vmem:[%s3067] ss:$9 sm:$0xff] %v3051
      %3111 = vst [vmem:[%s3069] ss:$9 sm:$0xff] %v3052
      %3112 = vst [vmem:[%s3071] ss:$9 sm:$0xff] %v3014
      %3113 = vst [vmem:[%s3073] ss:$9 sm:$0xff] %v3053
      %3114 = vst [vmem:[%s3075] ss:$9 sm:$0xff] %v3054
      %3115 = vst [vmem:[%s3077] ss:$9 sm:$0xff] %v3055
      %3116 = vst [vmem:[%s3079] ss:$9 sm:$0xff] %v3056
      %v3117 = vld [vmem:[#allocation1] sm:$0xff]
      %3118 = vst [vmem:[#allocation1] ss:$9 sm:$0xff] %v3057
      %3119 = vst [vmem:[%s3067] ss:$9 sm:$0xff] %v3058
      %3120 = vst [vmem:[%s3069] ss:$9 sm:$0xff] %v3015
      %3121 = vst [vmem:[%s3071] ss:$9 sm:$0xff] %v3059
      %3122 = vst [vmem:[%s3073] ss:$9 sm:$0xff] %v3060
      %3123 = vst [vmem:[%s3075] ss:$9 sm:$0xff] %v3061
      %3124 = vst [vmem:[%s3077] ss:$9 sm:$0xff] %v3062
      %3125 = vst [vmem:[%s3079] ss:$9 sm:$0xff] %v3063
      %v3126 = vld [vmem:[#allocation1] sm:$0xff]
      %3127 = vst [vmem:[#allocation1] ss:$9 sm:$0xff] %v3064
      %v3128 = vld [vmem:[#allocation1] sm:$0xff]
      %v3129 = vsel %vm1309, %v3081, 0
      %v3131 = vsel %vm1309, %v3090, 0
      %v3133 = vsel %vm1309, %v3099, 0
      %v3135 = vsel %vm1309, %v3108, 0
      %v3137 = vsel %vm1309, %v3117, 0
      %v3139 = vsel %vm1309, %v3126, 0
      %v3141 = vsel %vm1309, %v3128, 0
      %3143 = vmatpush.msra.mxu0 0.0
      %3144 = vmatpush.msra.mxu0 0.0
      %3145 = vmatpush.msra.mxu0 0.0
      %3146 = vmatpush.msra.mxu0 0.0
      %3147 = vmatpush.msra.mxu0 0.0
      %3148 = vmatpush.msra.mxu0 0.0
      %3149 = vmatpush.msra.mxu0 0.0
      %3150 = vmatpush.msra.mxu0 0.0
      %3151 = vmatpush.msra.mxu0 0.0
      %3152 = vmatpush.msra.mxu0 0.0
      %3153 = vmatpush.msra.mxu0 0.0
      %3154 = vmatpush.msra.mxu0 0.0
      %3155 = vmatpush.msra.mxu0 0.0
      %3156 = vmatpush.msra.mxu0 0.0
      %3157 = vmatpush.msra.mxu0 0.0
      %3158 = vmatpush.msra.mxu0 %v3065
      %3159 = vmatmul.f32.gmra.mxu0 %v3129
      %v3160 = vpop.f32.mrf.mxu0
      %v3161 = vadd.f32 0.0, %v3160
      %3162 = vmatmul.f32.gmra.mxu0 %v3131
      %v3163 = vpop.f32.mrf.mxu0
      %v3164 = vadd.f32 0.0, %v3163
      %3165 = vmatmul.f32.gmra.mxu0 %v3133
      %v3166 = vpop.f32.mrf.mxu0
      %v3167 = vadd.f32 0.0, %v3166
      %3168 = vmatmul.f32.gmra.mxu0 %v3135
      %v3169 = vpop.f32.mrf.mxu0
      %v3170 = vadd.f32 0.0, %v3169
      %3171 = vmatmul.f32.gmra.mxu0 %v3137
      %v3172 = vpop.f32.mrf.mxu0
      %v3173 = vadd.f32 0.0, %v3172
      %3174 = vmatmul.f32.gmra.mxu0 %v3139
      %v3175 = vpop.f32.mrf.mxu0
      %v3176 = vadd.f32 0.0, %v3175
      %3177 = vmatmul.f32.gmra.mxu0 %v3141
      %v3178 = vpop.f32.mrf.mxu0
      %v3179 = vadd.f32 0.0, %v3178
      %3180 = vdwg.mxu0
      %v3181 = vadd.f32 %v3002, %v3161
      %v3182 = vadd.f32 %v3003, %v3164
      %v3183 = vadd.f32 %v3004, %v3167
      %v3184 = vadd.f32 %v3005, %v3170
      %v3185 = vadd.f32 %v3006, %v3173
      %v3186 = vadd.f32 %v3007, %v3176
      %v3187 = vadd.f32 %v3008, %v3179
      %v3188 = vld [vmem:[%s6] sm:$0x1]
      %v3190 = vperm.slane %v3188, 0
      %v3192 = vadd.f32 %v3181, %v3190
      %v3193 = vadd.f32 %v3182, %v3190
      %v3194 = vadd.f32 %v3183, %v3190
      %v3195 = vadd.f32 %v3184, %v3190
      %v3196 = vadd.f32 %v3185, %v3190
      %v3197 = vadd.f32 %v3186, %v3190
      %v3198 = vadd.f32 %v3187, %v3190
      %v3199 = vmax.f32 %v3192, 0.0
      %v3200 = vmax.f32 %v3193, 0.0
      %v3201 = vmax.f32 %v3194, 0.0
      %v3202 = vmax.f32 %v3195, 0.0
      %v3203 = vmax.f32 %v3196, 0.0
      %v3204 = vmax.f32 %v3197, 0.0
      %v3205 = vmax.f32 %v3198, 0.0
      %v3206 = vld [vmem:[%s7] sm:$0xff]
      %v3207 = vld [vmem:[%s7 + $0x8] sm:$0xff]
      %v3208 = vld [vmem:[%s7 + $0x10] sm:$0xff]
      %v3209 = vld [vmem:[%s7 + $0x18] sm:$0xff]
      %v3210 = vld [vmem:[%s8] sm:$0x1]
      %v3212 = vperm.slane %v3210, 0
      %vm3214 = vcmask 261120
      %v3216 = vsel %vm3214, %v3199, 0
      %v3219 = vsel %vm3214, %v3200, 0
      %v3222 = vsel %vm3214, %v3201, 0
      %v3225 = vsel %vm3214, %v3202, 0
      %v3228 = vsel %vm3214, %v3203, 0
      %v3231 = vsel %vm3214, %v3204, 0
      %v3234 = vsel %vm3214, %v3205, 0
      %3236 = vmatpush.msra.mxu0 0.0
      %3237 = vmatpush.msra.mxu0 0.0
      %3238 = vmatpush.msra.mxu0 0.0
      %3239 = vmatpush.msra.mxu0 0.0
      %3240 = vmatpush.msra.mxu0 0.0
      %3241 = vmatpush.msra.mxu0 0.0
      %3242 = vmatpush.msra.mxu0 0.0
      %3243 = vmatpush.msra.mxu0 0.0
      %3244 = vmatpush.msra.mxu0 0.0
      %3245 = vmatpush.msra.mxu0 0.0
      %3246 = vmatpush.msra.mxu0 0.0
      %3247 = vmatpush.msra.mxu0 0.0
      %3248 = vmatpush.msra.mxu0 %v3209
      %3249 = vmatpush.msra.mxu0 %v3208
      %3250 = vmatpush.msra.mxu0 %v3207
      %3251 = vmatpush.msra.mxu0 %v3206
      %3252 = vmatmul.f32.gmra.mxu0 %v3216
      %v3253 = vpop.f32.mrf.mxu0
      %v3254 = vadd.f32 %v3212, %v3253
      %3255 = vmatmul.f32.gmra.mxu0 %v3219
      %v3256 = vpop.f32.mrf.mxu0
      %v3257 = vadd.f32 %v3212, %v3256
      %3258 = vmatmul.f32.gmra.mxu0 %v3222
      %v3259 = vpop.f32.mrf.mxu0
      %v3260 = vadd.f32 %v3212, %v3259
      %3261 = vmatmul.f32.gmra.mxu0 %v3225
      %v3262 = vpop.f32.mrf.mxu0
      %v3263 = vadd.f32 %v3212, %v3262
      %3264 = vmatmul.f32.gmra.mxu0 %v3228
      %v3265 = vpop.f32.mrf.mxu0
      %v3266 = vadd.f32 %v3212, %v3265
      %3267 = vmatmul.f32.gmra.mxu0 %v3231
      %v3268 = vpop.f32.mrf.mxu0
      %v3269 = vadd.f32 %v3212, %v3268
      %3270 = vmatmul.f32.gmra.mxu0 %v3234
      %v3271 = vpop.f32.mrf.mxu0
      %v3272 = vadd.f32 %v3212, %v3271
      %3273 = vdwg.mxu0
      %v3274 = vmax.f32 %v3254, 0.0
      %v3275 = vmax.f32 %v3257, 0.0
      %v3276 = vmax.f32 %v3260, 0.0
      %v3277 = vmax.f32 %v3263, 0.0
      %v3278 = vmax.f32 %v3266, 0.0
      %v3279 = vmax.f32 %v3269, 0.0
      %v3280 = vmax.f32 %v3272, 0.0
      %v3288 = vrot.slane %v3274, 1
      %v3289 = vrot.slane %v3274, 2
      %v3290 = vrot.slane %v3274, 3
      %v3291 = vrot.slane %v3274, 4
      %v3292 = vrot.slane %v3274, 5
      %v3293 = vrot.slane %v3274, 6
      %v3294 = vrot.slane %v3274, 7
      %v3295 = vrot.slane %v3275, 1
      %v3296 = vrot.slane %v3275, 2
      %v3297 = vrot.slane %v3275, 3
      %v3298 = vrot.slane %v3275, 4
      %v3299 = vrot.slane %v3275, 5
      %v3300 = vrot.slane %v3275, 6
      %v3301 = vrot.slane %v3275, 7
      %v3302 = vrot.slane %v3276, 1
      %v3303 = vrot.slane %v3276, 2
      %v3304 = vrot.slane %v3276, 3
      %v3305 = vrot.slane %v3276, 4
      %v3306 = vrot.slane %v3276, 5
      %v3307 = vrot.slane %v3276, 6
      %v3308 = vrot.slane %v3276, 7
      %v3309 = vrot.slane %v3277, 1
      %v3310 = vrot.slane %v3277, 2
      %v3311 = vrot.slane %v3277, 3
      %v3312 = vrot.slane %v3277, 4
      %v3313 = vrot.slane %v3277, 5
      %v3314 = vrot.slane %v3277, 6
      %v3315 = vrot.slane %v3277, 7
      %v3316 = vrot.slane %v3278, 1
      %v3317 = vrot.slane %v3278, 2
      %v3318 = vrot.slane %v3278, 3
      %v3319 = vrot.slane %v3278, 4
      %v3320 = vrot.slane %v3278, 5
      %v3321 = vrot.slane %v3278, 6
      %v3322 = vrot.slane %v3278, 7
      %v3323 = vrot.slane %v3279, 1
      %v3324 = vrot.slane %v3279, 2
      %v3325 = vrot.slane %v3279, 3
      %v3326 = vrot.slane %v3279, 4
      %v3327 = vrot.slane %v3279, 5
      %v3328 = vrot.slane %v3279, 6
      %v3329 = vrot.slane %v3279, 7
      %3330 = vst [vmem:[#allocation1] ss:$9 sm:$0xff] %v3274
      %s3331 = scalar_lea.vmem [#allocation1], 1
      %3332 = vst [vmem:[%s3331] ss:$9 sm:$0xff] %v3288
      %s3333 = scalar_lea.vmem [#allocation1], 2
      %3334 = vst [vmem:[%s3333] ss:$9 sm:$0xff] %v3289
      %s3335 = scalar_lea.vmem [#allocation1], 3
      %3336 = vst [vmem:[%s3335] ss:$9 sm:$0xff] %v3290
      %s3337 = scalar_lea.vmem [#allocation1], 4
      %3338 = vst [vmem:[%s3337] ss:$9 sm:$0xff] %v3291
      %s3339 = scalar_lea.vmem [#allocation1], 5
      %3340 = vst [vmem:[%s3339] ss:$9 sm:$0xff] %v3292
      %s3341 = scalar_lea.vmem [#allocation1], 6
      %3342 = vst [vmem:[%s3341] ss:$9 sm:$0xff] %v3293
      %v3343 = vld [vmem:[#allocation1] sm:$0xff]
      %3344 = vst [vmem:[#allocation1] ss:$9 sm:$0xff] %v3294
      %3345 = vst [vmem:[%s3331] ss:$9 sm:$0xff] %v3275
      %3346 = vst [vmem:[%s3333] ss:$9 sm:$0xff] %v3295
      %3347 = vst [vmem:[%s3335] ss:$9 sm:$0xff] %v3296
      %3348 = vst [vmem:[%s3337] ss:$9 sm:$0xff] %v3297
      %3349 = vst [vmem:[%s3339] ss:$9 sm:$0xff] %v3298
      %3350 = vst [vmem:[%s3341] ss:$9 sm:$0xff] %v3299
      %v3351 = vld [vmem:[#allocation1] sm:$0xff]
      %3352 = vst [vmem:[#allocation1] ss:$9 sm:$0xff] %v3300
      %3353 = vst [vmem:[%s3331] ss:$9 sm:$0xff] %v3301
      %3354 = vst [vmem:[%s3333] ss:$9 sm:$0xff] %v3276
      %3355 = vst [vmem:[%s3335] ss:$9 sm:$0xff] %v3302
      %3356 = vst [vmem:[%s3337] ss:$9 sm:$0xff] %v3303
      %3357 = vst [vmem:[%s3339] ss:$9 sm:$0xff] %v3304
      %3358 = vst [vmem:[%s3341] ss:$9 sm:$0xff] %v3305
      %v3359 = vld [vmem:[#allocation1] sm:$0xff]
      %3360 = vst [vmem:[#allocation1] ss:$9 sm:$0xff] %v3306
      %3361 = vst [vmem:[%s3331] ss:$9 sm:$0xff] %v3307
      %3362 = vst [vmem:[%s3333] ss:$9 sm:$0xff] %v3308
      %3363 = vst [vmem:[%s3335] ss:$9 sm:$0xff] %v3277
      %3364 = vst [vmem:[%s3337] ss:$9 sm:$0xff] %v3309
      %3365 = vst [vmem:[%s3339] ss:$9 sm:$0xff] %v3310
      %3366 = vst [vmem:[%s3341] ss:$9 sm:$0xff] %v3311
      %v3367 = vld [vmem:[#allocation1] sm:$0xff]
      %3368 = vst [vmem:[#allocation1] ss:$9 sm:$0xff] %v3312
      %3369 = vst [vmem:[%s3331] ss:$9 sm:$0xff] %v3313
      %3370 = vst [vmem:[%s3333] ss:$9 sm:$0xff] %v3314
      %3371 = vst [vmem:[%s3335] ss:$9 sm:$0xff] %v3315
      %3372 = vst [vmem:[%s3337] ss:$9 sm:$0xff] %v3278
      %3373 = vst [vmem:[%s3339] ss:$9 sm:$0xff] %v3316
      %3374 = vst [vmem:[%s3341] ss:$9 sm:$0xff] %v3317
      %v3375 = vld [vmem:[#allocation1] sm:$0xff]
      %3376 = vst [vmem:[#allocation1] ss:$9 sm:$0xff] %v3318
      %3377 = vst [vmem:[%s3331] ss:$9 sm:$0xff] %v3319
      %3378 = vst [vmem:[%s3333] ss:$9 sm:$0xff] %v3320
      %3379 = vst [vmem:[%s3335] ss:$9 sm:$0xff] %v3321
      %3380 = vst [vmem:[%s3337] ss:$9 sm:$0xff] %v3322
      %3381 = vst [vmem:[%s3339] ss:$9 sm:$0xff] %v3279
      %3382 = vst [vmem:[%s3341] ss:$9 sm:$0xff] %v3323
      %v3383 = vld [vmem:[#allocation1] sm:$0xff]
      %3384 = vst [vmem:[#allocation1] ss:$9 sm:$0xff] %v3324
      %3385 = vst [vmem:[%s3331] ss:$9 sm:$0xff] %v3325
      %3386 = vst [vmem:[%s3333] ss:$9 sm:$0xff] %v3326
      %3387 = vst [vmem:[%s3335] ss:$9 sm:$0xff] %v3327
      %3388 = vst [vmem:[%s3337] ss:$9 sm:$0xff] %v3328
      %3389 = vst [vmem:[%s3339] ss:$9 sm:$0xff] %v3329
      %3390 = vst [vmem:[%s3341] ss:$9 sm:$0xff] %v3280
      %v3391 = vld [vmem:[#allocation1] sm:$0xff]
      %3399 = vst.msk [vmem:[%s1581 + $0x1] sm:$0x7f] %vm1582, %v3343
      %3400 = vst.msk [vmem:[%s1581 + $0x11] sm:$0x7f] %vm1582, %v3351
      %3401 = vst.msk [vmem:[%s1581 + $0x21] sm:$0x7f] %vm1582, %v3359
      %3402 = vst.msk [vmem:[%s1581 + $0x31] sm:$0x7f] %vm1582, %v3367
      %3403 = vst.msk [vmem:[%s1581 + $0x41] sm:$0x7f] %vm1582, %v3375
      %3404 = vst.msk [vmem:[%s1581 + $0x51] sm:$0x7f] %vm1582, %v3383
      %3405 = vst.msk [vmem:[%s1581 + $0x61] sm:$0x7f] %vm1582, %v3391
      %v3406 = vld [vmem:[#allocation2] sm:$0x7f]
      %v3407 = vld [vmem:[#allocation2 + $0x10] sm:$0x7f]
      %v3408 = vld [vmem:[#allocation2 + $0x20] sm:$0x7f]
      %v3409 = vld [vmem:[#allocation2 + $0x30] sm:$0x7f]
      %v3410 = vld [vmem:[#allocation2 + $0x40] sm:$0x7f]
      %v3411 = vld [vmem:[#allocation2 + $0x50] sm:$0x7f]
      %v3412 = vld [vmem:[#allocation2 + $0x60] sm:$0x7f]
      %v3420 = vrot.slane %v3406, 1
      %v3421 = vrot.slane %v3406, 2
      %v3422 = vrot.slane %v3406, 3
      %v3423 = vrot.slane %v3406, 4
      %v3424 = vrot.slane %v3406, 5
      %v3425 = vrot.slane %v3406, 6
      %v3426 = vrot.slane %v3407, 1
      %v3427 = vrot.slane %v3407, 2
      %v3428 = vrot.slane %v3407, 3
      %v3429 = vrot.slane %v3407, 4
      %v3430 = vrot.slane %v3407, 5
      %v3431 = vrot.slane %v3407, 6
      %v3432 = vrot.slane %v3408, 1
      %v3433 = vrot.slane %v3408, 2
      %v3434 = vrot.slane %v3408, 3
      %v3435 = vrot.slane %v3408, 4
      %v3436 = vrot.slane %v3408, 5
      %v3437 = vrot.slane %v3408, 6
      %v3438 = vrot.slane %v3409, 1
      %v3439 = vrot.slane %v3409, 2
      %v3440 = vrot.slane %v3409, 3
      %v3441 = vrot.slane %v3409, 4
      %v3442 = vrot.slane %v3409, 5
      %v3443 = vrot.slane %v3409, 6
      %v3444 = vrot.slane %v3410, 1
      %v3445 = vrot.slane %v3410, 2
      %v3446 = vrot.slane %v3410, 3
      %v3447 = vrot.slane %v3410, 4
      %v3448 = vrot.slane %v3410, 5
      %v3449 = vrot.slane %v3410, 6
      %v3450 = vrot.slane %v3411, 1
      %v3451 = vrot.slane %v3411, 2
      %v3452 = vrot.slane %v3411, 3
      %v3453 = vrot.slane %v3411, 4
      %v3454 = vrot.slane %v3411, 5
      %v3455 = vrot.slane %v3411, 6
      %v3456 = vrot.slane %v3412, 1
      %v3457 = vrot.slane %v3412, 2
      %v3458 = vrot.slane %v3412, 3
      %v3459 = vrot.slane %v3412, 4
      %v3460 = vrot.slane %v3412, 5
      %v3461 = vrot.slane %v3412, 6
      %v3462 = vld [vmem:[%s9] sm:$0xff]
      %v3463 = vld [vmem:[#allocation2 + $0x1] sm:$0x7f]
      %v3464 = vld [vmem:[#allocation2 + $0x11] sm:$0x7f]
      %v3465 = vld [vmem:[#allocation2 + $0x21] sm:$0x7f]
      %v3466 = vld [vmem:[#allocation2 + $0x31] sm:$0x7f]
      %v3467 = vld [vmem:[#allocation2 + $0x41] sm:$0x7f]
      %v3468 = vld [vmem:[#allocation2 + $0x51] sm:$0x7f]
      %v3469 = vld [vmem:[#allocation2 + $0x61] sm:$0x7f]
      %v3477 = vrot.slane %v3463, 1
      %v3478 = vrot.slane %v3463, 2
      %v3479 = vrot.slane %v3463, 3
      %v3480 = vrot.slane %v3463, 4
      %v3481 = vrot.slane %v3463, 5
      %v3482 = vrot.slane %v3463, 6
      %v3483 = vrot.slane %v3464, 1
      %v3484 = vrot.slane %v3464, 2
      %v3485 = vrot.slane %v3464, 3
      %v3486 = vrot.slane %v3464, 4
      %v3487 = vrot.slane %v3464, 5
      %v3488 = vrot.slane %v3464, 6
      %v3489 = vrot.slane %v3465, 1
      %v3490 = vrot.slane %v3465, 2
      %v3491 = vrot.slane %v3465, 3
      %v3492 = vrot.slane %v3465, 4
      %v3493 = vrot.slane %v3465, 5
      %v3494 = vrot.slane %v3465, 6
      %v3495 = vrot.slane %v3466, 1
      %v3496 = vrot.slane %v3466, 2
      %v3497 = vrot.slane %v3466, 3
      %v3498 = vrot.slane %v3466, 4
      %v3499 = vrot.slane %v3466, 5
      %v3500 = vrot.slane %v3466, 6
      %v3501 = vrot.slane %v3467, 1
      %v3502 = vrot.slane %v3467, 2
      %v3503 = vrot.slane %v3467, 3
      %v3504 = vrot.slane %v3467, 4
      %v3505 = vrot.slane %v3467, 5
      %v3506 = vrot.slane %v3467, 6
      %v3507 = vrot.slane %v3468, 1
      %v3508 = vrot.slane %v3468, 2
      %v3509 = vrot.slane %v3468, 3
      %v3510 = vrot.slane %v3468, 4
      %v3511 = vrot.slane %v3468, 5
      %v3512 = vrot.slane %v3468, 6
      %v3513 = vrot.slane %v3469, 1
      %v3514 = vrot.slane %v3469, 2
      %v3515 = vrot.slane %v3469, 3
      %v3516 = vrot.slane %v3469, 4
      %v3517 = vrot.slane %v3469, 5
      %v3518 = vrot.slane %v3469, 6
      %v3519 = vld [vmem:[%s9 + $0x8] sm:$0xff]
      %3520 = vst [vmem:[#allocation1] ss:$9 sm:$0xff] %v3463
      %s3521 = scalar_lea.vmem [#allocation1], 1
      %3522 = vst [vmem:[%s3521] ss:$9 sm:$0xff] %v3477
      %s3523 = scalar_lea.vmem [#allocation1], 2
      %3524 = vst [vmem:[%s3523] ss:$9 sm:$0xff] %v3478
      %s3525 = scalar_lea.vmem [#allocation1], 3
      %3526 = vst [vmem:[%s3525] ss:$9 sm:$0xff] %v3479
      %s3527 = scalar_lea.vmem [#allocation1], 4
      %3528 = vst [vmem:[%s3527] ss:$9 sm:$0xff] %v3480
      %s3529 = scalar_lea.vmem [#allocation1], 5
      %3530 = vst [vmem:[%s3529] ss:$9 sm:$0xff] %v3481
      %s3531 = scalar_lea.vmem [#allocation1], 6
      %3532 = vst [vmem:[%s3531] ss:$9 sm:$0xff] %v3482
      %s3533 = scalar_lea.vmem [#allocation1], 7
      %3534 = vst [vmem:[%s3533] ss:$9 sm:$0xff] %v3464
      %v3535 = vld [vmem:[#allocation1] sm:$0xff]
      %3536 = vst [vmem:[#allocation1] ss:$9 sm:$0xff] %v3483
      %3537 = vst [vmem:[%s3521] ss:$9 sm:$0xff] %v3484
      %3538 = vst [vmem:[%s3523] ss:$9 sm:$0xff] %v3485
      %3539 = vst [vmem:[%s3525] ss:$9 sm:$0xff] %v3486
      %3540 = vst [vmem:[%s3527] ss:$9 sm:$0xff] %v3487
      %3541 = vst [vmem:[%s3529] ss:$9 sm:$0xff] %v3488
      %3542 = vst [vmem:[%s3531] ss:$9 sm:$0xff] %v3465
      %3543 = vst [vmem:[%s3533] ss:$9 sm:$0xff] %v3489
      %v3544 = vld [vmem:[#allocation1] sm:$0xff]
      %3545 = vst [vmem:[#allocation1] ss:$9 sm:$0xff] %v3490
      %3546 = vst [vmem:[%s3521] ss:$9 sm:$0xff] %v3491
      %3547 = vst [vmem:[%s3523] ss:$9 sm:$0xff] %v3492
      %3548 = vst [vmem:[%s3525] ss:$9 sm:$0xff] %v3493
      %3549 = vst [vmem:[%s3527] ss:$9 sm:$0xff] %v3494
      %3550 = vst [vmem:[%s3529] ss:$9 sm:$0xff] %v3466
      %3551 = vst [vmem:[%s3531] ss:$9 sm:$0xff] %v3495
      %3552 = vst [vmem:[%s3533] ss:$9 sm:$0xff] %v3496
      %v3553 = vld [vmem:[#allocation1] sm:$0xff]
      %3554 = vst [vmem:[#allocation1] ss:$9 sm:$0xff] %v3497
      %3555 = vst [vmem:[%s3521] ss:$9 sm:$0xff] %v3498
      %3556 = vst [vmem:[%s3523] ss:$9 sm:$0xff] %v3499
      %3557 = vst [vmem:[%s3525] ss:$9 sm:$0xff] %v3500
      %3558 = vst [vmem:[%s3527] ss:$9 sm:$0xff] %v3467
      %3559 = vst [vmem:[%s3529] ss:$9 sm:$0xff] %v3501
      %3560 = vst [vmem:[%s3531] ss:$9 sm:$0xff] %v3502
      %3561 = vst [vmem:[%s3533] ss:$9 sm:$0xff] %v3503
      %v3562 = vld [vmem:[#allocation1] sm:$0xff]
      %3563 = vst [vmem:[#allocation1] ss:$9 sm:$0xff] %v3504
      %3564 = vst [vmem:[%s3521] ss:$9 sm:$0xff] %v3505
      %3565 = vst [vmem:[%s3523] ss:$9 sm:$0xff] %v3506
      %3566 = vst [vmem:[%s3525] ss:$9 sm:$0xff] %v3468
      %3567 = vst [vmem:[%s3527] ss:$9 sm:$0xff] %v3507
      %3568 = vst [vmem:[%s3529] ss:$9 sm:$0xff] %v3508
      %3569 = vst [vmem:[%s3531] ss:$9 sm:$0xff] %v3509
      %3570 = vst [vmem:[%s3533] ss:$9 sm:$0xff] %v3510
      %v3571 = vld [vmem:[#allocation1] sm:$0xff]
      %3572 = vst [vmem:[#allocation1] ss:$9 sm:$0xff] %v3511
      %3573 = vst [vmem:[%s3521] ss:$9 sm:$0xff] %v3512
      %3574 = vst [vmem:[%s3523] ss:$9 sm:$0xff] %v3469
      %3575 = vst [vmem:[%s3525] ss:$9 sm:$0xff] %v3513
      %3576 = vst [vmem:[%s3527] ss:$9 sm:$0xff] %v3514
      %3577 = vst [vmem:[%s3529] ss:$9 sm:$0xff] %v3515
      %3578 = vst [vmem:[%s3531] ss:$9 sm:$0xff] %v3516
      %3579 = vst [vmem:[%s3533] ss:$9 sm:$0xff] %v3517
      %v3580 = vld [vmem:[#allocation1] sm:$0xff]
      %3581 = vst [vmem:[#allocation1] ss:$9 sm:$0xff] %v3518
      %v3582 = vld [vmem:[#allocation1] sm:$0xff]
      %v3583 = vsel %vm1309, %v3535, 0
      %v3585 = vsel %vm1309, %v3544, 0
      %v3587 = vsel %vm1309, %v3553, 0
      %v3589 = vsel %vm1309, %v3562, 0
      %v3591 = vsel %vm1309, %v3571, 0
      %v3593 = vsel %vm1309, %v3580, 0
      %v3595 = vsel %vm1309, %v3582, 0
      %3597 = vmatpush.msra.mxu0 0.0
      %3598 = vmatpush.msra.mxu0 0.0
      %3599 = vmatpush.msra.mxu0 0.0
      %3600 = vmatpush.msra.mxu0 0.0
      %3601 = vmatpush.msra.mxu0 0.0
      %3602 = vmatpush.msra.mxu0 0.0
      %3603 = vmatpush.msra.mxu0 0.0
      %3604 = vmatpush.msra.mxu0 0.0
      %3605 = vmatpush.msra.mxu0 0.0
      %3606 = vmatpush.msra.mxu0 0.0
      %3607 = vmatpush.msra.mxu0 0.0
      %3608 = vmatpush.msra.mxu0 0.0
      %3609 = vmatpush.msra.mxu0 0.0
      %3610 = vmatpush.msra.mxu0 0.0
      %3611 = vmatpush.msra.mxu0 0.0
      %3612 = vmatpush.msra.mxu0 %v3519
      %3613 = vmatmul.f32.gmra.mxu0 %v3583
      %v3614 = vpop.f32.mrf.mxu0
      %v3615 = vadd.f32 0.0, %v3614
      %3616 = vmatmul.f32.gmra.mxu0 %v3585
      %v3617 = vpop.f32.mrf.mxu0
      %v3618 = vadd.f32 0.0, %v3617
      %3619 = vmatmul.f32.gmra.mxu0 %v3587
      %v3620 = vpop.f32.mrf.mxu0
      %v3621 = vadd.f32 0.0, %v3620
      %3622 = vmatmul.f32.gmra.mxu0 %v3589
      %v3623 = vpop.f32.mrf.mxu0
      %v3624 = vadd.f32 0.0, %v3623
      %3625 = vmatmul.f32.gmra.mxu0 %v3591
      %v3626 = vpop.f32.mrf.mxu0
      %v3627 = vadd.f32 0.0, %v3626
      %3628 = vmatmul.f32.gmra.mxu0 %v3593
      %v3629 = vpop.f32.mrf.mxu0
      %v3630 = vadd.f32 0.0, %v3629
      %3631 = vmatmul.f32.gmra.mxu0 %v3595
      %v3632 = vpop.f32.mrf.mxu0
      %v3633 = vadd.f32 0.0, %v3632
      %3634 = vdwg.mxu0
      %3635 = vst [vmem:[#allocation1] ss:$9 sm:$0xff] %v3406
      %s3636 = scalar_lea.vmem [#allocation1], 1
      %3637 = vst [vmem:[%s3636] ss:$9 sm:$0xff] %v3420
      %s3638 = scalar_lea.vmem [#allocation1], 2
      %3639 = vst [vmem:[%s3638] ss:$9 sm:$0xff] %v3421
      %s3640 = scalar_lea.vmem [#allocation1], 3
      %3641 = vst [vmem:[%s3640] ss:$9 sm:$0xff] %v3422
      %s3642 = scalar_lea.vmem [#allocation1], 4
      %3643 = vst [vmem:[%s3642] ss:$9 sm:$0xff] %v3423
      %s3644 = scalar_lea.vmem [#allocation1], 5
      %3645 = vst [vmem:[%s3644] ss:$9 sm:$0xff] %v3424
      %s3646 = scalar_lea.vmem [#allocation1], 6
      %3647 = vst [vmem:[%s3646] ss:$9 sm:$0xff] %v3425
      %s3648 = scalar_lea.vmem [#allocation1], 7
      %3649 = vst [vmem:[%s3648] ss:$9 sm:$0xff] %v3407
      %v3650 = vld [vmem:[#allocation1] sm:$0xff]
      %3651 = vst [vmem:[#allocation1] ss:$9 sm:$0xff] %v3426
      %3652 = vst [vmem:[%s3636] ss:$9 sm:$0xff] %v3427
      %3653 = vst [vmem:[%s3638] ss:$9 sm:$0xff] %v3428
      %3654 = vst [vmem:[%s3640] ss:$9 sm:$0xff] %v3429
      %3655 = vst [vmem:[%s3642] ss:$9 sm:$0xff] %v3430
      %3656 = vst [vmem:[%s3644] ss:$9 sm:$0xff] %v3431
      %3657 = vst [vmem:[%s3646] ss:$9 sm:$0xff] %v3408
      %3658 = vst [vmem:[%s3648] ss:$9 sm:$0xff] %v3432
      %v3659 = vld [vmem:[#allocation1] sm:$0xff]
      %3660 = vst [vmem:[#allocation1] ss:$9 sm:$0xff] %v3433
      %3661 = vst [vmem:[%s3636] ss:$9 sm:$0xff] %v3434
      %3662 = vst [vmem:[%s3638] ss:$9 sm:$0xff] %v3435
      %3663 = vst [vmem:[%s3640] ss:$9 sm:$0xff] %v3436
      %3664 = vst [vmem:[%s3642] ss:$9 sm:$0xff] %v3437
      %3665 = vst [vmem:[%s3644] ss:$9 sm:$0xff] %v3409
      %3666 = vst [vmem:[%s3646] ss:$9 sm:$0xff] %v3438
      %3667 = vst [vmem:[%s3648] ss:$9 sm:$0xff] %v3439
      %v3668 = vld [vmem:[#allocation1] sm:$0xff]
      %3669 = vst [vmem:[#allocation1] ss:$9 sm:$0xff] %v3440
      %3670 = vst [vmem:[%s3636] ss:$9 sm:$0xff] %v3441
      %3671 = vst [vmem:[%s3638] ss:$9 sm:$0xff] %v3442
      %3672 = vst [vmem:[%s3640] ss:$9 sm:$0xff] %v3443
      %3673 = vst [vmem:[%s3642] ss:$9 sm:$0xff] %v3410
      %3674 = vst [vmem:[%s3644] ss:$9 sm:$0xff] %v3444
      %3675 = vst [vmem:[%s3646] ss:$9 sm:$0xff] %v3445
      %3676 = vst [vmem:[%s3648] ss:$9 sm:$0xff] %v3446
      %v3677 = vld [vmem:[#allocation1] sm:$0xff]
      %3678 = vst [vmem:[#allocation1] ss:$9 sm:$0xff] %v3447
      %3679 = vst [vmem:[%s3636] ss:$9 sm:$0xff] %v3448
      %3680 = vst [vmem:[%s3638] ss:$9 sm:$0xff] %v3449
      %3681 = vst [vmem:[%s3640] ss:$9 sm:$0xff] %v3411
      %3682 = vst [vmem:[%s3642] ss:$9 sm:$0xff] %v3450
      %3683 = vst [vmem:[%s3644] ss:$9 sm:$0xff] %v3451
      %3684 = vst [vmem:[%s3646] ss:$9 sm:$0xff] %v3452
      %3685 = vst [vmem:[%s3648] ss:$9 sm:$0xff] %v3453
      %v3686 = vld [vmem:[#allocation1] sm:$0xff]
      %3687 = vst [vmem:[#allocation1] ss:$9 sm:$0xff] %v3454
      %3688 = vst [vmem:[%s3636] ss:$9 sm:$0xff] %v3455
      %3689 = vst [vmem:[%s3638] ss:$9 sm:$0xff] %v3412
      %3690 = vst [vmem:[%s3640] ss:$9 sm:$0xff] %v3456
      %3691 = vst [vmem:[%s3642] ss:$9 sm:$0xff] %v3457
      %3692 = vst [vmem:[%s3644] ss:$9 sm:$0xff] %v3458
      %3693 = vst [vmem:[%s3646] ss:$9 sm:$0xff] %v3459
      %3694 = vst [vmem:[%s3648] ss:$9 sm:$0xff] %v3460
      %v3695 = vld [vmem:[#allocation1] sm:$0xff]
      %3696 = vst [vmem:[#allocation1] ss:$9 sm:$0xff] %v3461
      %v3697 = vld [vmem:[#allocation1] sm:$0xff]
      %v3698 = vsel %vm1309, %v3650, 0
      %v3700 = vsel %vm1309, %v3659, 0
      %v3702 = vsel %vm1309, %v3668, 0
      %v3704 = vsel %vm1309, %v3677, 0
      %v3706 = vsel %vm1309, %v3686, 0
      %v3708 = vsel %vm1309, %v3695, 0
      %v3710 = vsel %vm1309, %v3697, 0
      %3712 = vmatpush.msra.mxu0 0.0
      %3713 = vmatpush.msra.mxu0 0.0
      %3714 = vmatpush.msra.mxu0 0.0
      %3715 = vmatpush.msra.mxu0 0.0
      %3716 = vmatpush.msra.mxu0 0.0
      %3717 = vmatpush.msra.mxu0 0.0
      %3718 = vmatpush.msra.mxu0 0.0
      %3719 = vmatpush.msra.mxu0 0.0
      %3720 = vmatpush.msra.mxu0 0.0
      %3721 = vmatpush.msra.mxu0 0.0
      %3722 = vmatpush.msra.mxu0 0.0
      %3723 = vmatpush.msra.mxu0 0.0
      %3724 = vmatpush.msra.mxu0 0.0
      %3725 = vmatpush.msra.mxu0 0.0
      %3726 = vmatpush.msra.mxu0 0.0
      %3727 = vmatpush.msra.mxu0 %v3462
      %3728 = vmatmul.f32.gmra.mxu0 %v3698
      %v3729 = vpop.f32.mrf.mxu0
      %v3730 = vadd.f32 %v3615, %v3729
      %3731 = vmatmul.f32.gmra.mxu0 %v3700
      %v3732 = vpop.f32.mrf.mxu0
      %v3733 = vadd.f32 %v3618, %v3732
      %3734 = vmatmul.f32.gmra.mxu0 %v3702
      %v3735 = vpop.f32.mrf.mxu0
      %v3736 = vadd.f32 %v3621, %v3735
      %3737 = vmatmul.f32.gmra.mxu0 %v3704
      %v3738 = vpop.f32.mrf.mxu0
      %v3739 = vadd.f32 %v3624, %v3738
      %3740 = vmatmul.f32.gmra.mxu0 %v3706
      %v3741 = vpop.f32.mrf.mxu0
      %v3742 = vadd.f32 %v3627, %v3741
      %3743 = vmatmul.f32.gmra.mxu0 %v3708
      %v3744 = vpop.f32.mrf.mxu0
      %v3745 = vadd.f32 %v3630, %v3744
      %3746 = vmatmul.f32.gmra.mxu0 %v3710
      %v3747 = vpop.f32.mrf.mxu0
      %v3748 = vadd.f32 %v3633, %v3747
      %3749 = vdwg.mxu0
      %v3750 = vld [vmem:[#allocation2 + $0x2] sm:$0x7f]
      %v3751 = vld [vmem:[#allocation2 + $0x12] sm:$0x7f]
      %v3752 = vld [vmem:[#allocation2 + $0x22] sm:$0x7f]
      %v3753 = vld [vmem:[#allocation2 + $0x32] sm:$0x7f]
      %v3754 = vld [vmem:[#allocation2 + $0x42] sm:$0x7f]
      %v3755 = vld [vmem:[#allocation2 + $0x52] sm:$0x7f]
      %v3756 = vld [vmem:[#allocation2 + $0x62] sm:$0x7f]
      %v3764 = vrot.slane %v3750, 1
      %v3765 = vrot.slane %v3750, 2
      %v3766 = vrot.slane %v3750, 3
      %v3767 = vrot.slane %v3750, 4
      %v3768 = vrot.slane %v3750, 5
      %v3769 = vrot.slane %v3750, 6
      %v3770 = vrot.slane %v3751, 1
      %v3771 = vrot.slane %v3751, 2
      %v3772 = vrot.slane %v3751, 3
      %v3773 = vrot.slane %v3751, 4
      %v3774 = vrot.slane %v3751, 5
      %v3775 = vrot.slane %v3751, 6
      %v3776 = vrot.slane %v3752, 1
      %v3777 = vrot.slane %v3752, 2
      %v3778 = vrot.slane %v3752, 3
      %v3779 = vrot.slane %v3752, 4
      %v3780 = vrot.slane %v3752, 5
      %v3781 = vrot.slane %v3752, 6
      %v3782 = vrot.slane %v3753, 1
      %v3783 = vrot.slane %v3753, 2
      %v3784 = vrot.slane %v3753, 3
      %v3785 = vrot.slane %v3753, 4
      %v3786 = vrot.slane %v3753, 5
      %v3787 = vrot.slane %v3753, 6
      %v3788 = vrot.slane %v3754, 1
      %v3789 = vrot.slane %v3754, 2
      %v3790 = vrot.slane %v3754, 3
      %v3791 = vrot.slane %v3754, 4
      %v3792 = vrot.slane %v3754, 5
      %v3793 = vrot.slane %v3754, 6
      %v3794 = vrot.slane %v3755, 1
      %v3795 = vrot.slane %v3755, 2
      %v3796 = vrot.slane %v3755, 3
      %v3797 = vrot.slane %v3755, 4
      %v3798 = vrot.slane %v3755, 5
      %v3799 = vrot.slane %v3755, 6
      %v3800 = vrot.slane %v3756, 1
      %v3801 = vrot.slane %v3756, 2
      %v3802 = vrot.slane %v3756, 3
      %v3803 = vrot.slane %v3756, 4
      %v3804 = vrot.slane %v3756, 5
      %v3805 = vrot.slane %v3756, 6
      %v3806 = vld [vmem:[%s9 + $0x10] sm:$0xff]
      %3807 = vst [vmem:[#allocation1] ss:$9 sm:$0xff] %v3750
      %s3808 = scalar_lea.vmem [#allocation1], 1
      %3809 = vst [vmem:[%s3808] ss:$9 sm:$0xff] %v3764
      %s3810 = scalar_lea.vmem [#allocation1], 2
      %3811 = vst [vmem:[%s3810] ss:$9 sm:$0xff] %v3765
      %s3812 = scalar_lea.vmem [#allocation1], 3
      %3813 = vst [vmem:[%s3812] ss:$9 sm:$0xff] %v3766
      %s3814 = scalar_lea.vmem [#allocation1], 4
      %3815 = vst [vmem:[%s3814] ss:$9 sm:$0xff] %v3767
      %s3816 = scalar_lea.vmem [#allocation1], 5
      %3817 = vst [vmem:[%s3816] ss:$9 sm:$0xff] %v3768
      %s3818 = scalar_lea.vmem [#allocation1], 6
      %3819 = vst [vmem:[%s3818] ss:$9 sm:$0xff] %v3769
      %s3820 = scalar_lea.vmem [#allocation1], 7
      %3821 = vst [vmem:[%s3820] ss:$9 sm:$0xff] %v3751
      %v3822 = vld [vmem:[#allocation1] sm:$0xff]
      %3823 = vst [vmem:[#allocation1] ss:$9 sm:$0xff] %v3770
      %3824 = vst [vmem:[%s3808] ss:$9 sm:$0xff] %v3771
      %3825 = vst [vmem:[%s3810] ss:$9 sm:$0xff] %v3772
      %3826 = vst [vmem:[%s3812] ss:$9 sm:$0xff] %v3773
      %3827 = vst [vmem:[%s3814] ss:$9 sm:$0xff] %v3774
      %3828 = vst [vmem:[%s3816] ss:$9 sm:$0xff] %v3775
      %3829 = vst [vmem:[%s3818] ss:$9 sm:$0xff] %v3752
      %3830 = vst [vmem:[%s3820] ss:$9 sm:$0xff] %v3776
      %v3831 = vld [vmem:[#allocation1] sm:$0xff]
      %3832 = vst [vmem:[#allocation1] ss:$9 sm:$0xff] %v3777
      %3833 = vst [vmem:[%s3808] ss:$9 sm:$0xff] %v3778
      %3834 = vst [vmem:[%s3810] ss:$9 sm:$0xff] %v3779
      %3835 = vst [vmem:[%s3812] ss:$9 sm:$0xff] %v3780
      %3836 = vst [vmem:[%s3814] ss:$9 sm:$0xff] %v3781
      %3837 = vst [vmem:[%s3816] ss:$9 sm:$0xff] %v3753
      %3838 = vst [vmem:[%s3818] ss:$9 sm:$0xff] %v3782
      %3839 = vst [vmem:[%s3820] ss:$9 sm:$0xff] %v3783
      %v3840 = vld [vmem:[#allocation1] sm:$0xff]
      %3841 = vst [vmem:[#allocation1] ss:$9 sm:$0xff] %v3784
      %3842 = vst [vmem:[%s3808] ss:$9 sm:$0xff] %v3785
      %3843 = vst [vmem:[%s3810] ss:$9 sm:$0xff] %v3786
      %3844 = vst [vmem:[%s3812] ss:$9 sm:$0xff] %v3787
      %3845 = vst [vmem:[%s3814] ss:$9 sm:$0xff] %v3754
      %3846 = vst [vmem:[%s3816] ss:$9 sm:$0xff] %v3788
      %3847 = vst [vmem:[%s3818] ss:$9 sm:$0xff] %v3789
      %3848 = vst [vmem:[%s3820] ss:$9 sm:$0xff] %v3790
      %v3849 = vld [vmem:[#allocation1] sm:$0xff]
      %3850 = vst [vmem:[#allocation1] ss:$9 sm:$0xff] %v3791
      %3851 = vst [vmem:[%s3808] ss:$9 sm:$0xff] %v3792
      %3852 = vst [vmem:[%s3810] ss:$9 sm:$0xff] %v3793
      %3853 = vst [vmem:[%s3812] ss:$9 sm:$0xff] %v3755
      %3854 = vst [vmem:[%s3814] ss:$9 sm:$0xff] %v3794
      %3855 = vst [vmem:[%s3816] ss:$9 sm:$0xff] %v3795
      %3856 = vst [vmem:[%s3818] ss:$9 sm:$0xff] %v3796
      %3857 = vst [vmem:[%s3820] ss:$9 sm:$0xff] %v3797
      %v3858 = vld [vmem:[#allocation1] sm:$0xff]
      %3859 = vst [vmem:[#allocation1] ss:$9 sm:$0xff] %v3798
      %3860 = vst [vmem:[%s3808] ss:$9 sm:$0xff] %v3799
      %3861 = vst [vmem:[%s3810] ss:$9 sm:$0xff] %v3756
      %3862 = vst [vmem:[%s3812] ss:$9 sm:$0xff] %v3800
      %3863 = vst [vmem:[%s3814] ss:$9 sm:$0xff] %v3801
      %3864 = vst [vmem:[%s3816] ss:$9 sm:$0xff] %v3802
      %3865 = vst [vmem:[%s3818] ss:$9 sm:$0xff] %v3803
      %3866 = vst [vmem:[%s3820] ss:$9 sm:$0xff] %v3804
      %v3867 = vld [vmem:[#allocation1] sm:$0xff]
      %3868 = vst [vmem:[#allocation1] ss:$9 sm:$0xff] %v3805
      %v3869 = vld [vmem:[#allocation1] sm:$0xff]
      %v3870 = vsel %vm1309, %v3822, 0
      %v3872 = vsel %vm1309, %v3831, 0
      %v3874 = vsel %vm1309, %v3840, 0
      %v3876 = vsel %vm1309, %v3849, 0
      %v3878 = vsel %vm1309, %v3858, 0
      %v3880 = vsel %vm1309, %v3867, 0
      %v3882 = vsel %vm1309, %v3869, 0
      %3884 = vmatpush.msra.mxu0 0.0
      %3885 = vmatpush.msra.mxu0 0.0
      %3886 = vmatpush.msra.mxu0 0.0
      %3887 = vmatpush.msra.mxu0 0.0
      %3888 = vmatpush.msra.mxu0 0.0
      %3889 = vmatpush.msra.mxu0 0.0
      %3890 = vmatpush.msra.mxu0 0.0
      %3891 = vmatpush.msra.mxu0 0.0
      %3892 = vmatpush.msra.mxu0 0.0
      %3893 = vmatpush.msra.mxu0 0.0
      %3894 = vmatpush.msra.mxu0 0.0
      %3895 = vmatpush.msra.mxu0 0.0
      %3896 = vmatpush.msra.mxu0 0.0
      %3897 = vmatpush.msra.mxu0 0.0
      %3898 = vmatpush.msra.mxu0 0.0
      %3899 = vmatpush.msra.mxu0 %v3806
      %3900 = vmatmul.f32.gmra.mxu0 %v3870
      %v3901 = vpop.f32.mrf.mxu0
      %v3902 = vadd.f32 0.0, %v3901
      %3903 = vmatmul.f32.gmra.mxu0 %v3872
      %v3904 = vpop.f32.mrf.mxu0
      %v3905 = vadd.f32 0.0, %v3904
      %3906 = vmatmul.f32.gmra.mxu0 %v3874
      %v3907 = vpop.f32.mrf.mxu0
      %v3908 = vadd.f32 0.0, %v3907
      %3909 = vmatmul.f32.gmra.mxu0 %v3876
      %v3910 = vpop.f32.mrf.mxu0
      %v3911 = vadd.f32 0.0, %v3910
      %3912 = vmatmul.f32.gmra.mxu0 %v3878
      %v3913 = vpop.f32.mrf.mxu0
      %v3914 = vadd.f32 0.0, %v3913
      %3915 = vmatmul.f32.gmra.mxu0 %v3880
      %v3916 = vpop.f32.mrf.mxu0
      %v3917 = vadd.f32 0.0, %v3916
      %3918 = vmatmul.f32.gmra.mxu0 %v3882
      %v3919 = vpop.f32.mrf.mxu0
      %v3920 = vadd.f32 0.0, %v3919
      %3921 = vdwg.mxu0
      %v3922 = vadd.f32 %v3730, %v3902
      %v3923 = vadd.f32 %v3733, %v3905
      %v3924 = vadd.f32 %v3736, %v3908
      %v3925 = vadd.f32 %v3739, %v3911
      %v3926 = vadd.f32 %v3742, %v3914
      %v3927 = vadd.f32 %v3745, %v3917
      %v3928 = vadd.f32 %v3748, %v3920
      %v3929 = vld [vmem:[%s1581] sm:$0x7f]
      %v3930 = vld [vmem:[%s1581 + $0x10] sm:$0x7f]
      %v3931 = vld [vmem:[%s1581 + $0x20] sm:$0x7f]
      %v3932 = vld [vmem:[%s1581 + $0x30] sm:$0x7f]
      %v3933 = vld [vmem:[%s1581 + $0x40] sm:$0x7f]
      %v3934 = vld [vmem:[%s1581 + $0x50] sm:$0x7f]
      %v3935 = vld [vmem:[%s1581 + $0x60] sm:$0x7f]
      %v3943 = vrot.slane %v3929, 1
      %v3944 = vrot.slane %v3929, 2
      %v3945 = vrot.slane %v3929, 3
      %v3946 = vrot.slane %v3929, 4
      %v3947 = vrot.slane %v3929, 5
      %v3948 = vrot.slane %v3929, 6
      %v3949 = vrot.slane %v3930, 1
      %v3950 = vrot.slane %v3930, 2
      %v3951 = vrot.slane %v3930, 3
      %v3952 = vrot.slane %v3930, 4
      %v3953 = vrot.slane %v3930, 5
      %v3954 = vrot.slane %v3930, 6
      %v3955 = vrot.slane %v3931, 1
      %v3956 = vrot.slane %v3931, 2
      %v3957 = vrot.slane %v3931, 3
      %v3958 = vrot.slane %v3931, 4
      %v3959 = vrot.slane %v3931, 5
      %v3960 = vrot.slane %v3931, 6
      %v3961 = vrot.slane %v3932, 1
      %v3962 = vrot.slane %v3932, 2
      %v3963 = vrot.slane %v3932, 3
      %v3964 = vrot.slane %v3932, 4
      %v3965 = vrot.slane %v3932, 5
      %v3966 = vrot.slane %v3932, 6
      %v3967 = vrot.slane %v3933, 1
      %v3968 = vrot.slane %v3933, 2
      %v3969 = vrot.slane %v3933, 3
      %v3970 = vrot.slane %v3933, 4
      %v3971 = vrot.slane %v3933, 5
      %v3972 = vrot.slane %v3933, 6
      %v3973 = vrot.slane %v3934, 1
      %v3974 = vrot.slane %v3934, 2
      %v3975 = vrot.slane %v3934, 3
      %v3976 = vrot.slane %v3934, 4
      %v3977 = vrot.slane %v3934, 5
      %v3978 = vrot.slane %v3934, 6
      %v3979 = vrot.slane %v3935, 1
      %v3980 = vrot.slane %v3935, 2
      %v3981 = vrot.slane %v3935, 3
      %v3982 = vrot.slane %v3935, 4
      %v3983 = vrot.slane %v3935, 5
      %v3984 = vrot.slane %v3935, 6
      %v3985 = vld [vmem:[%s9 + $0x18] sm:$0xff]
      %3986 = vst [vmem:[#allocation1] ss:$9 sm:$0xff] %v3929
      %s3987 = scalar_lea.vmem [#allocation1], 1
      %3988 = vst [vmem:[%s3987] ss:$9 sm:$0xff] %v3943
      %s3989 = scalar_lea.vmem [#allocation1], 2
      %3990 = vst [vmem:[%s3989] ss:$9 sm:$0xff] %v3944
      %s3991 = scalar_lea.vmem [#allocation1], 3
      %3992 = vst [vmem:[%s3991] ss:$9 sm:$0xff] %v3945
      %s3993 = scalar_lea.vmem [#allocation1], 4
      %3994 = vst [vmem:[%s3993] ss:$9 sm:$0xff] %v3946
      %s3995 = scalar_lea.vmem [#allocation1], 5
      %3996 = vst [vmem:[%s3995] ss:$9 sm:$0xff] %v3947
      %s3997 = scalar_lea.vmem [#allocation1], 6
      %3998 = vst [vmem:[%s3997] ss:$9 sm:$0xff] %v3948
      %s3999 = scalar_lea.vmem [#allocation1], 7
      %4000 = vst [vmem:[%s3999] ss:$9 sm:$0xff] %v3930
      %v4001 = vld [vmem:[#allocation1] sm:$0xff]
      %4002 = vst [vmem:[#allocation1] ss:$9 sm:$0xff] %v3949
      %4003 = vst [vmem:[%s3987] ss:$9 sm:$0xff] %v3950
      %4004 = vst [vmem:[%s3989] ss:$9 sm:$0xff] %v3951
      %4005 = vst [vmem:[%s3991] ss:$9 sm:$0xff] %v3952
      %4006 = vst [vmem:[%s3993] ss:$9 sm:$0xff] %v3953
      %4007 = vst [vmem:[%s3995] ss:$9 sm:$0xff] %v3954
      %4008 = vst [vmem:[%s3997] ss:$9 sm:$0xff] %v3931
      %4009 = vst [vmem:[%s3999] ss:$9 sm:$0xff] %v3955
      %v4010 = vld [vmem:[#allocation1] sm:$0xff]
      %4011 = vst [vmem:[#allocation1] ss:$9 sm:$0xff] %v3956
      %4012 = vst [vmem:[%s3987] ss:$9 sm:$0xff] %v3957
      %4013 = vst [vmem:[%s3989] ss:$9 sm:$0xff] %v3958
      %4014 = vst [vmem:[%s3991] ss:$9 sm:$0xff] %v3959
      %4015 = vst [vmem:[%s3993] ss:$9 sm:$0xff] %v3960
      %4016 = vst [vmem:[%s3995] ss:$9 sm:$0xff] %v3932
      %4017 = vst [vmem:[%s3997] ss:$9 sm:$0xff] %v3961
      %4018 = vst [vmem:[%s3999] ss:$9 sm:$0xff] %v3962
      %v4019 = vld [vmem:[#allocation1] sm:$0xff]
      %4020 = vst [vmem:[#allocation1] ss:$9 sm:$0xff] %v3963
      %4021 = vst [vmem:[%s3987] ss:$9 sm:$0xff] %v3964
      %4022 = vst [vmem:[%s3989] ss:$9 sm:$0xff] %v3965
      %4023 = vst [vmem:[%s3991] ss:$9 sm:$0xff] %v3966
      %4024 = vst [vmem:[%s3993] ss:$9 sm:$0xff] %v3933
      %4025 = vst [vmem:[%s3995] ss:$9 sm:$0xff] %v3967
      %4026 = vst [vmem:[%s3997] ss:$9 sm:$0xff] %v3968
      %4027 = vst [vmem:[%s3999] ss:$9 sm:$0xff] %v3969
      %v4028 = vld [vmem:[#allocation1] sm:$0xff]
      %4029 = vst [vmem:[#allocation1] ss:$9 sm:$0xff] %v3970
      %4030 = vst [vmem:[%s3987] ss:$9 sm:$0xff] %v3971
      %4031 = vst [vmem:[%s3989] ss:$9 sm:$0xff] %v3972
      %4032 = vst [vmem:[%s3991] ss:$9 sm:$0xff] %v3934
      %4033 = vst [vmem:[%s3993] ss:$9 sm:$0xff] %v3973
      %4034 = vst [vmem:[%s3995] ss:$9 sm:$0xff] %v3974
      %4035 = vst [vmem:[%s3997] ss:$9 sm:$0xff] %v3975
      %4036 = vst [vmem:[%s3999] ss:$9 sm:$0xff] %v3976
      %v4037 = vld [vmem:[#allocation1] sm:$0xff]
      %4038 = vst [vmem:[#allocation1] ss:$9 sm:$0xff] %v3977
      %4039 = vst [vmem:[%s3987] ss:$9 sm:$0xff] %v3978
      %4040 = vst [vmem:[%s3989] ss:$9 sm:$0xff] %v3935
      %4041 = vst [vmem:[%s3991] ss:$9 sm:$0xff] %v3979
      %4042 = vst [vmem:[%s3993] ss:$9 sm:$0xff] %v3980
      %4043 = vst [vmem:[%s3995] ss:$9 sm:$0xff] %v3981
      %4044 = vst [vmem:[%s3997] ss:$9 sm:$0xff] %v3982
      %4045 = vst [vmem:[%s3999] ss:$9 sm:$0xff] %v3983
      %v4046 = vld [vmem:[#allocation1] sm:$0xff]
      %4047 = vst [vmem:[#allocation1] ss:$9 sm:$0xff] %v3984
      %v4048 = vld [vmem:[#allocation1] sm:$0xff]
      %v4049 = vsel %vm1309, %v4001, 0
      %v4051 = vsel %vm1309, %v4010, 0
      %v4053 = vsel %vm1309, %v4019, 0
      %v4055 = vsel %vm1309, %v4028, 0
      %v4057 = vsel %vm1309, %v4037, 0
      %v4059 = vsel %vm1309, %v4046, 0
      %v4061 = vsel %vm1309, %v4048, 0
      %4063 = vmatpush.msra.mxu0 0.0
      %4064 = vmatpush.msra.mxu0 0.0
      %4065 = vmatpush.msra.mxu0 0.0
      %4066 = vmatpush.msra.mxu0 0.0
      %4067 = vmatpush.msra.mxu0 0.0
      %4068 = vmatpush.msra.mxu0 0.0
      %4069 = vmatpush.msra.mxu0 0.0
      %4070 = vmatpush.msra.mxu0 0.0
      %4071 = vmatpush.msra.mxu0 0.0
      %4072 = vmatpush.msra.mxu0 0.0
      %4073 = vmatpush.msra.mxu0 0.0
      %4074 = vmatpush.msra.mxu0 0.0
      %4075 = vmatpush.msra.mxu0 0.0
      %4076 = vmatpush.msra.mxu0 0.0
      %4077 = vmatpush.msra.mxu0 0.0
      %4078 = vmatpush.msra.mxu0 %v3985
      %4079 = vmatmul.f32.gmra.mxu0 %v4049
      %v4080 = vpop.f32.mrf.mxu0
      %v4081 = vadd.f32 0.0, %v4080
      %4082 = vmatmul.f32.gmra.mxu0 %v4051
      %v4083 = vpop.f32.mrf.mxu0
      %v4084 = vadd.f32 0.0, %v4083
      %4085 = vmatmul.f32.gmra.mxu0 %v4053
      %v4086 = vpop.f32.mrf.mxu0
      %v4087 = vadd.f32 0.0, %v4086
      %4088 = vmatmul.f32.gmra.mxu0 %v4055
      %v4089 = vpop.f32.mrf.mxu0
      %v4090 = vadd.f32 0.0, %v4089
      %4091 = vmatmul.f32.gmra.mxu0 %v4057
      %v4092 = vpop.f32.mrf.mxu0
      %v4093 = vadd.f32 0.0, %v4092
      %4094 = vmatmul.f32.gmra.mxu0 %v4059
      %v4095 = vpop.f32.mrf.mxu0
      %v4096 = vadd.f32 0.0, %v4095
      %4097 = vmatmul.f32.gmra.mxu0 %v4061
      %v4098 = vpop.f32.mrf.mxu0
      %v4099 = vadd.f32 0.0, %v4098
      %4100 = vdwg.mxu0
      %v4101 = vadd.f32 %v3922, %v4081
      %v4102 = vadd.f32 %v3923, %v4084
      %v4103 = vadd.f32 %v3924, %v4087
      %v4104 = vadd.f32 %v3925, %v4090
      %v4105 = vadd.f32 %v3926, %v4093
      %v4106 = vadd.f32 %v3927, %v4096
      %v4107 = vadd.f32 %v3928, %v4099
      %v4108 = vld [vmem:[%s1581 + $0x1] sm:$0x7f]
      %v4109 = vld [vmem:[%s1581 + $0x11] sm:$0x7f]
      %v4110 = vld [vmem:[%s1581 + $0x21] sm:$0x7f]
      %v4111 = vld [vmem:[%s1581 + $0x31] sm:$0x7f]
      %v4112 = vld [vmem:[%s1581 + $0x41] sm:$0x7f]
      %v4113 = vld [vmem:[%s1581 + $0x51] sm:$0x7f]
      %v4114 = vld [vmem:[%s1581 + $0x61] sm:$0x7f]
      %v4122 = vrot.slane %v4108, 1
      %v4123 = vrot.slane %v4108, 2
      %v4124 = vrot.slane %v4108, 3
      %v4125 = vrot.slane %v4108, 4
      %v4126 = vrot.slane %v4108, 5
      %v4127 = vrot.slane %v4108, 6
      %v4128 = vrot.slane %v4109, 1
      %v4129 = vrot.slane %v4109, 2
      %v4130 = vrot.slane %v4109, 3
      %v4131 = vrot.slane %v4109, 4
      %v4132 = vrot.slane %v4109, 5
      %v4133 = vrot.slane %v4109, 6
      %v4134 = vrot.slane %v4110, 1
      %v4135 = vrot.slane %v4110, 2
      %v4136 = vrot.slane %v4110, 3
      %v4137 = vrot.slane %v4110, 4
      %v4138 = vrot.slane %v4110, 5
      %v4139 = vrot.slane %v4110, 6
      %v4140 = vrot.slane %v4111, 1
      %v4141 = vrot.slane %v4111, 2
      %v4142 = vrot.slane %v4111, 3
      %v4143 = vrot.slane %v4111, 4
      %v4144 = vrot.slane %v4111, 5
      %v4145 = vrot.slane %v4111, 6
      %v4146 = vrot.slane %v4112, 1
      %v4147 = vrot.slane %v4112, 2
      %v4148 = vrot.slane %v4112, 3
      %v4149 = vrot.slane %v4112, 4
      %v4150 = vrot.slane %v4112, 5
      %v4151 = vrot.slane %v4112, 6
      %v4152 = vrot.slane %v4113, 1
      %v4153 = vrot.slane %v4113, 2
      %v4154 = vrot.slane %v4113, 3
      %v4155 = vrot.slane %v4113, 4
      %v4156 = vrot.slane %v4113, 5
      %v4157 = vrot.slane %v4113, 6
      %v4158 = vrot.slane %v4114, 1
      %v4159 = vrot.slane %v4114, 2
      %v4160 = vrot.slane %v4114, 3
      %v4161 = vrot.slane %v4114, 4
      %v4162 = vrot.slane %v4114, 5
      %v4163 = vrot.slane %v4114, 6
      %v4164 = vld [vmem:[%s9 + $0x20] sm:$0xff]
      %4165 = vst [vmem:[#allocation1] ss:$9 sm:$0xff] %v4108
      %s4166 = scalar_lea.vmem [#allocation1], 1
      %4167 = vst [vmem:[%s4166] ss:$9 sm:$0xff] %v4122
      %s4168 = scalar_lea.vmem [#allocation1], 2
      %4169 = vst [vmem:[%s4168] ss:$9 sm:$0xff] %v4123
      %s4170 = scalar_lea.vmem [#allocation1], 3
      %4171 = vst [vmem:[%s4170] ss:$9 sm:$0xff] %v4124
      %s4172 = scalar_lea.vmem [#allocation1], 4
      %4173 = vst [vmem:[%s4172] ss:$9 sm:$0xff] %v4125
      %s4174 = scalar_lea.vmem [#allocation1], 5
      %4175 = vst [vmem:[%s4174] ss:$9 sm:$0xff] %v4126
      %s4176 = scalar_lea.vmem [#allocation1], 6
      %4177 = vst [vmem:[%s4176] ss:$9 sm:$0xff] %v4127
      %s4178 = scalar_lea.vmem [#allocation1], 7
      %4179 = vst [vmem:[%s4178] ss:$9 sm:$0xff] %v4109
      %v4180 = vld [vmem:[#allocation1] sm:$0xff]
      %4181 = vst [vmem:[#allocation1] ss:$9 sm:$0xff] %v4128
      %4182 = vst [vmem:[%s4166] ss:$9 sm:$0xff] %v4129
      %4183 = vst [vmem:[%s4168] ss:$9 sm:$0xff] %v4130
      %4184 = vst [vmem:[%s4170] ss:$9 sm:$0xff] %v4131
      %4185 = vst [vmem:[%s4172] ss:$9 sm:$0xff] %v4132
      %4186 = vst [vmem:[%s4174] ss:$9 sm:$0xff] %v4133
      %4187 = vst [vmem:[%s4176] ss:$9 sm:$0xff] %v4110
      %4188 = vst [vmem:[%s4178] ss:$9 sm:$0xff] %v4134
      %v4189 = vld [vmem:[#allocation1] sm:$0xff]
      %4190 = vst [vmem:[#allocation1] ss:$9 sm:$0xff] %v4135
      %4191 = vst [vmem:[%s4166] ss:$9 sm:$0xff] %v4136
      %4192 = vst [vmem:[%s4168] ss:$9 sm:$0xff] %v4137
      %4193 = vst [vmem:[%s4170] ss:$9 sm:$0xff] %v4138
      %4194 = vst [vmem:[%s4172] ss:$9 sm:$0xff] %v4139
      %4195 = vst [vmem:[%s4174] ss:$9 sm:$0xff] %v4111
      %4196 = vst [vmem:[%s4176] ss:$9 sm:$0xff] %v4140
      %4197 = vst [vmem:[%s4178] ss:$9 sm:$0xff] %v4141
      %v4198 = vld [vmem:[#allocation1] sm:$0xff]
      %4199 = vst [vmem:[#allocation1] ss:$9 sm:$0xff] %v4142
      %4200 = vst [vmem:[%s4166] ss:$9 sm:$0xff] %v4143
      %4201 = vst [vmem:[%s4168] ss:$9 sm:$0xff] %v4144
      %4202 = vst [vmem:[%s4170] ss:$9 sm:$0xff] %v4145
      %4203 = vst [vmem:[%s4172] ss:$9 sm:$0xff] %v4112
      %4204 = vst [vmem:[%s4174] ss:$9 sm:$0xff] %v4146
      %4205 = vst [vmem:[%s4176] ss:$9 sm:$0xff] %v4147
      %4206 = vst [vmem:[%s4178] ss:$9 sm:$0xff] %v4148
      %v4207 = vld [vmem:[#allocation1] sm:$0xff]
      %4208 = vst [vmem:[#allocation1] ss:$9 sm:$0xff] %v4149
      %4209 = vst [vmem:[%s4166] ss:$9 sm:$0xff] %v4150
      %4210 = vst [vmem:[%s4168] ss:$9 sm:$0xff] %v4151
      %4211 = vst [vmem:[%s4170] ss:$9 sm:$0xff] %v4113
      %4212 = vst [vmem:[%s4172] ss:$9 sm:$0xff] %v4152
      %4213 = vst [vmem:[%s4174] ss:$9 sm:$0xff] %v4153
      %4214 = vst [vmem:[%s4176] ss:$9 sm:$0xff] %v4154
      %4215 = vst [vmem:[%s4178] ss:$9 sm:$0xff] %v4155
      %v4216 = vld [vmem:[#allocation1] sm:$0xff]
      %4217 = vst [vmem:[#allocation1] ss:$9 sm:$0xff] %v4156
      %4218 = vst [vmem:[%s4166] ss:$9 sm:$0xff] %v4157
      %4219 = vst [vmem:[%s4168] ss:$9 sm:$0xff] %v4114
      %4220 = vst [vmem:[%s4170] ss:$9 sm:$0xff] %v4158
      %4221 = vst [vmem:[%s4172] ss:$9 sm:$0xff] %v4159
      %4222 = vst [vmem:[%s4174] ss:$9 sm:$0xff] %v4160
      %4223 = vst [vmem:[%s4176] ss:$9 sm:$0xff] %v4161
      %4224 = vst [vmem:[%s4178] ss:$9 sm:$0xff] %v4162
      %v4225 = vld [vmem:[#allocation1] sm:$0xff]
      %4226 = vst [vmem:[#allocation1] ss:$9 sm:$0xff] %v4163
      %v4227 = vld [vmem:[#allocation1] sm:$0xff]
      %v4228 = vsel %vm1309, %v4180, 0
      %v4230 = vsel %vm1309, %v4189, 0
      %v4232 = vsel %vm1309, %v4198, 0
      %v4234 = vsel %vm1309, %v4207, 0
      %v4236 = vsel %vm1309, %v4216, 0
      %v4238 = vsel %vm1309, %v4225, 0
      %v4240 = vsel %vm1309, %v4227, 0
      %4242 = vmatpush.msra.mxu0 0.0
      %4243 = vmatpush.msra.mxu0 0.0
      %4244 = vmatpush.msra.mxu0 0.0
      %4245 = vmatpush.msra.mxu0 0.0
      %4246 = vmatpush.msra.mxu0 0.0
      %4247 = vmatpush.msra.mxu0 0.0
      %4248 = vmatpush.msra.mxu0 0.0
      %4249 = vmatpush.msra.mxu0 0.0
      %4250 = vmatpush.msra.mxu0 0.0
      %4251 = vmatpush.msra.mxu0 0.0
      %4252 = vmatpush.msra.mxu0 0.0
      %4253 = vmatpush.msra.mxu0 0.0
      %4254 = vmatpush.msra.mxu0 0.0
      %4255 = vmatpush.msra.mxu0 0.0
      %4256 = vmatpush.msra.mxu0 0.0
      %4257 = vmatpush.msra.mxu0 %v4164
      %4258 = vmatmul.f32.gmra.mxu0 %v4228
      %v4259 = vpop.f32.mrf.mxu0
      %v4260 = vadd.f32 0.0, %v4259
      %4261 = vmatmul.f32.gmra.mxu0 %v4230
      %v4262 = vpop.f32.mrf.mxu0
      %v4263 = vadd.f32 0.0, %v4262
      %4264 = vmatmul.f32.gmra.mxu0 %v4232
      %v4265 = vpop.f32.mrf.mxu0
      %v4266 = vadd.f32 0.0, %v4265
      %4267 = vmatmul.f32.gmra.mxu0 %v4234
      %v4268 = vpop.f32.mrf.mxu0
      %v4269 = vadd.f32 0.0, %v4268
      %4270 = vmatmul.f32.gmra.mxu0 %v4236
      %v4271 = vpop.f32.mrf.mxu0
      %v4272 = vadd.f32 0.0, %v4271
      %4273 = vmatmul.f32.gmra.mxu0 %v4238
      %v4274 = vpop.f32.mrf.mxu0
      %v4275 = vadd.f32 0.0, %v4274
      %4276 = vmatmul.f32.gmra.mxu0 %v4240
      %v4277 = vpop.f32.mrf.mxu0
      %v4278 = vadd.f32 0.0, %v4277
      %4279 = vdwg.mxu0
      %v4280 = vadd.f32 %v4101, %v4260
      %v4281 = vadd.f32 %v4102, %v4263
      %v4282 = vadd.f32 %v4103, %v4266
      %v4283 = vadd.f32 %v4104, %v4269
      %v4284 = vadd.f32 %v4105, %v4272
      %v4285 = vadd.f32 %v4106, %v4275
      %v4286 = vadd.f32 %v4107, %v4278
      %v4287 = vld [vmem:[%s1581 + $0x2] sm:$0x7f]
      %v4288 = vld [vmem:[%s1581 + $0x12] sm:$0x7f]
      %v4289 = vld [vmem:[%s1581 + $0x22] sm:$0x7f]
      %v4290 = vld [vmem:[%s1581 + $0x32] sm:$0x7f]
      %v4291 = vld [vmem:[%s1581 + $0x42] sm:$0x7f]
      %v4292 = vld [vmem:[%s1581 + $0x52] sm:$0x7f]
      %v4293 = vld [vmem:[%s1581 + $0x62] sm:$0x7f]
      %v4301 = vrot.slane %v4287, 1
      %v4302 = vrot.slane %v4287, 2
      %v4303 = vrot.slane %v4287, 3
      %v4304 = vrot.slane %v4287, 4
      %v4305 = vrot.slane %v4287, 5
      %v4306 = vrot.slane %v4287, 6
      %v4307 = vrot.slane %v4288, 1
      %v4308 = vrot.slane %v4288, 2
      %v4309 = vrot.slane %v4288, 3
      %v4310 = vrot.slane %v4288, 4
      %v4311 = vrot.slane %v4288, 5
      %v4312 = vrot.slane %v4288, 6
      %v4313 = vrot.slane %v4289, 1
      %v4314 = vrot.slane %v4289, 2
      %v4315 = vrot.slane %v4289, 3
      %v4316 = vrot.slane %v4289, 4
      %v4317 = vrot.slane %v4289, 5
      %v4318 = vrot.slane %v4289, 6
      %v4319 = vrot.slane %v4290, 1
      %v4320 = vrot.slane %v4290, 2
      %v4321 = vrot.slane %v4290, 3
      %v4322 = vrot.slane %v4290, 4
      %v4323 = vrot.slane %v4290, 5
      %v4324 = vrot.slane %v4290, 6
      %v4325 = vrot.slane %v4291, 1
      %v4326 = vrot.slane %v4291, 2
      %v4327 = vrot.slane %v4291, 3
      %v4328 = vrot.slane %v4291, 4
      %v4329 = vrot.slane %v4291, 5
      %v4330 = vrot.slane %v4291, 6
      %v4331 = vrot.slane %v4292, 1
      %v4332 = vrot.slane %v4292, 2
      %v4333 = vrot.slane %v4292, 3
      %v4334 = vrot.slane %v4292, 4
      %v4335 = vrot.slane %v4292, 5
      %v4336 = vrot.slane %v4292, 6
      %v4337 = vrot.slane %v4293, 1
      %v4338 = vrot.slane %v4293, 2
      %v4339 = vrot.slane %v4293, 3
      %v4340 = vrot.slane %v4293, 4
      %v4341 = vrot.slane %v4293, 5
      %v4342 = vrot.slane %v4293, 6
      %v4343 = vld [vmem:[%s9 + $0x28] sm:$0xff]
      %4344 = vst [vmem:[#allocation1] ss:$9 sm:$0xff] %v4287
      %s4345 = scalar_lea.vmem [#allocation1], 1
      %4346 = vst [vmem:[%s4345] ss:$9 sm:$0xff] %v4301
      %s4347 = scalar_lea.vmem [#allocation1], 2
      %4348 = vst [vmem:[%s4347] ss:$9 sm:$0xff] %v4302
      %s4349 = scalar_lea.vmem [#allocation1], 3
      %4350 = vst [vmem:[%s4349] ss:$9 sm:$0xff] %v4303
      %s4351 = scalar_lea.vmem [#allocation1], 4
      %4352 = vst [vmem:[%s4351] ss:$9 sm:$0xff] %v4304
      %s4353 = scalar_lea.vmem [#allocation1], 5
      %4354 = vst [vmem:[%s4353] ss:$9 sm:$0xff] %v4305
      %s4355 = scalar_lea.vmem [#allocation1], 6
      %4356 = vst [vmem:[%s4355] ss:$9 sm:$0xff] %v4306
      %s4357 = scalar_lea.vmem [#allocation1], 7
      %4358 = vst [vmem:[%s4357] ss:$9 sm:$0xff] %v4288
      %v4359 = vld [vmem:[#allocation1] sm:$0xff]
      %4360 = vst [vmem:[#allocation1] ss:$9 sm:$0xff] %v4307
      %4361 = vst [vmem:[%s4345] ss:$9 sm:$0xff] %v4308
      %4362 = vst [vmem:[%s4347] ss:$9 sm:$0xff] %v4309
      %4363 = vst [vmem:[%s4349] ss:$9 sm:$0xff] %v4310
      %4364 = vst [vmem:[%s4351] ss:$9 sm:$0xff] %v4311
      %4365 = vst [vmem:[%s4353] ss:$9 sm:$0xff] %v4312
      %4366 = vst [vmem:[%s4355] ss:$9 sm:$0xff] %v4289
      %4367 = vst [vmem:[%s4357] ss:$9 sm:$0xff] %v4313
      %v4368 = vld [vmem:[#allocation1] sm:$0xff]
      %4369 = vst [vmem:[#allocation1] ss:$9 sm:$0xff] %v4314
      %4370 = vst [vmem:[%s4345] ss:$9 sm:$0xff] %v4315
      %4371 = vst [vmem:[%s4347] ss:$9 sm:$0xff] %v4316
      %4372 = vst [vmem:[%s4349] ss:$9 sm:$0xff] %v4317
      %4373 = vst [vmem:[%s4351] ss:$9 sm:$0xff] %v4318
      %4374 = vst [vmem:[%s4353] ss:$9 sm:$0xff] %v4290
      %4375 = vst [vmem:[%s4355] ss:$9 sm:$0xff] %v4319
      %4376 = vst [vmem:[%s4357] ss:$9 sm:$0xff] %v4320
      %v4377 = vld [vmem:[#allocation1] sm:$0xff]
      %4378 = vst [vmem:[#allocation1] ss:$9 sm:$0xff] %v4321
      %4379 = vst [vmem:[%s4345] ss:$9 sm:$0xff] %v4322
      %4380 = vst [vmem:[%s4347] ss:$9 sm:$0xff] %v4323
      %4381 = vst [vmem:[%s4349] ss:$9 sm:$0xff] %v4324
      %4382 = vst [vmem:[%s4351] ss:$9 sm:$0xff] %v4291
      %4383 = vst [vmem:[%s4353] ss:$9 sm:$0xff] %v4325
      %4384 = vst [vmem:[%s4355] ss:$9 sm:$0xff] %v4326
      %4385 = vst [vmem:[%s4357] ss:$9 sm:$0xff] %v4327
      %v4386 = vld [vmem:[#allocation1] sm:$0xff]
      %4387 = vst [vmem:[#allocation1] ss:$9 sm:$0xff] %v4328
      %4388 = vst [vmem:[%s4345] ss:$9 sm:$0xff] %v4329
      %4389 = vst [vmem:[%s4347] ss:$9 sm:$0xff] %v4330
      %4390 = vst [vmem:[%s4349] ss:$9 sm:$0xff] %v4292
      %4391 = vst [vmem:[%s4351] ss:$9 sm:$0xff] %v4331
      %4392 = vst [vmem:[%s4353] ss:$9 sm:$0xff] %v4332
      %4393 = vst [vmem:[%s4355] ss:$9 sm:$0xff] %v4333
      %4394 = vst [vmem:[%s4357] ss:$9 sm:$0xff] %v4334
      %v4395 = vld [vmem:[#allocation1] sm:$0xff]
      %4396 = vst [vmem:[#allocation1] ss:$9 sm:$0xff] %v4335
      %4397 = vst [vmem:[%s4345] ss:$9 sm:$0xff] %v4336
      %4398 = vst [vmem:[%s4347] ss:$9 sm:$0xff] %v4293
      %4399 = vst [vmem:[%s4349] ss:$9 sm:$0xff] %v4337
      %4400 = vst [vmem:[%s4351] ss:$9 sm:$0xff] %v4338
      %4401 = vst [vmem:[%s4353] ss:$9 sm:$0xff] %v4339
      %4402 = vst [vmem:[%s4355] ss:$9 sm:$0xff] %v4340
      %4403 = vst [vmem:[%s4357] ss:$9 sm:$0xff] %v4341
      %v4404 = vld [vmem:[#allocation1] sm:$0xff]
      %4405 = vst [vmem:[#allocation1] ss:$9 sm:$0xff] %v4342
      %v4406 = vld [vmem:[#allocation1] sm:$0xff]
      %v4407 = vsel %vm1309, %v4359, 0
      %v4409 = vsel %vm1309, %v4368, 0
      %v4411 = vsel %vm1309, %v4377, 0
      %v4413 = vsel %vm1309, %v4386, 0
      %v4415 = vsel %vm1309, %v4395, 0
      %v4417 = vsel %vm1309, %v4404, 0
      %v4419 = vsel %vm1309, %v4406, 0
      %4421 = vmatpush.msra.mxu0 0.0
      %4422 = vmatpush.msra.mxu0 0.0
      %4423 = vmatpush.msra.mxu0 0.0
      %4424 = vmatpush.msra.mxu0 0.0
      %4425 = vmatpush.msra.mxu0 0.0
      %4426 = vmatpush.msra.mxu0 0.0
      %4427 = vmatpush.msra.mxu0 0.0
      %4428 = vmatpush.msra.mxu0 0.0
      %4429 = vmatpush.msra.mxu0 0.0
      %4430 = vmatpush.msra.mxu0 0.0
      %4431 = vmatpush.msra.mxu0 0.0
      %4432 = vmatpush.msra.mxu0 0.0
      %4433 = vmatpush.msra.mxu0 0.0
      %4434 = vmatpush.msra.mxu0 0.0
      %4435 = vmatpush.msra.mxu0 0.0
      %4436 = vmatpush.msra.mxu0 %v4343
      %4437 = vmatmul.f32.gmra.mxu0 %v4407
      %v4438 = vpop.f32.mrf.mxu0
      %v4439 = vadd.f32 0.0, %v4438
      %4440 = vmatmul.f32.gmra.mxu0 %v4409
      %v4441 = vpop.f32.mrf.mxu0
      %v4442 = vadd.f32 0.0, %v4441
      %4443 = vmatmul.f32.gmra.mxu0 %v4411
      %v4444 = vpop.f32.mrf.mxu0
      %v4445 = vadd.f32 0.0, %v4444
      %4446 = vmatmul.f32.gmra.mxu0 %v4413
      %v4447 = vpop.f32.mrf.mxu0
      %v4448 = vadd.f32 0.0, %v4447
      %4449 = vmatmul.f32.gmra.mxu0 %v4415
      %v4450 = vpop.f32.mrf.mxu0
      %v4451 = vadd.f32 0.0, %v4450
      %4452 = vmatmul.f32.gmra.mxu0 %v4417
      %v4453 = vpop.f32.mrf.mxu0
      %v4454 = vadd.f32 0.0, %v4453
      %4455 = vmatmul.f32.gmra.mxu0 %v4419
      %v4456 = vpop.f32.mrf.mxu0
      %v4457 = vadd.f32 0.0, %v4456
      %4458 = vdwg.mxu0
      %v4459 = vadd.f32 %v4280, %v4439
      %v4460 = vadd.f32 %v4281, %v4442
      %v4461 = vadd.f32 %v4282, %v4445
      %v4462 = vadd.f32 %v4283, %v4448
      %v4463 = vadd.f32 %v4284, %v4451
      %v4464 = vadd.f32 %v4285, %v4454
      %v4465 = vadd.f32 %v4286, %v4457
      %v4466 = vld [vmem:[%s2650] sm:$0x7f]
      %v4467 = vld [vmem:[%s2650 + $0x10] sm:$0x7f]
      %v4468 = vld [vmem:[%s2650 + $0x20] sm:$0x7f]
      %v4469 = vld [vmem:[%s2650 + $0x30] sm:$0x7f]
      %v4470 = vld [vmem:[%s2650 + $0x40] sm:$0x7f]
      %v4471 = vld [vmem:[%s2650 + $0x50] sm:$0x7f]
      %v4472 = vld [vmem:[%s2650 + $0x60] sm:$0x7f]
      %v4480 = vrot.slane %v4466, 1
      %v4481 = vrot.slane %v4466, 2
      %v4482 = vrot.slane %v4466, 3
      %v4483 = vrot.slane %v4466, 4
      %v4484 = vrot.slane %v4466, 5
      %v4485 = vrot.slane %v4466, 6
      %v4486 = vrot.slane %v4467, 1
      %v4487 = vrot.slane %v4467, 2
      %v4488 = vrot.slane %v4467, 3
      %v4489 = vrot.slane %v4467, 4
      %v4490 = vrot.slane %v4467, 5
      %v4491 = vrot.slane %v4467, 6
      %v4492 = vrot.slane %v4468, 1
      %v4493 = vrot.slane %v4468, 2
      %v4494 = vrot.slane %v4468, 3
      %v4495 = vrot.slane %v4468, 4
      %v4496 = vrot.slane %v4468, 5
      %v4497 = vrot.slane %v4468, 6
      %v4498 = vrot.slane %v4469, 1
      %v4499 = vrot.slane %v4469, 2
      %v4500 = vrot.slane %v4469, 3
      %v4501 = vrot.slane %v4469, 4
      %v4502 = vrot.slane %v4469, 5
      %v4503 = vrot.slane %v4469, 6
      %v4504 = vrot.slane %v4470, 1
      %v4505 = vrot.slane %v4470, 2
      %v4506 = vrot.slane %v4470, 3
      %v4507 = vrot.slane %v4470, 4
      %v4508 = vrot.slane %v4470, 5
      %v4509 = vrot.slane %v4470, 6
      %v4510 = vrot.slane %v4471, 1
      %v4511 = vrot.slane %v4471, 2
      %v4512 = vrot.slane %v4471, 3
      %v4513 = vrot.slane %v4471, 4
      %v4514 = vrot.slane %v4471, 5
      %v4515 = vrot.slane %v4471, 6
      %v4516 = vrot.slane %v4472, 1
      %v4517 = vrot.slane %v4472, 2
      %v4518 = vrot.slane %v4472, 3
      %v4519 = vrot.slane %v4472, 4
      %v4520 = vrot.slane %v4472, 5
      %v4521 = vrot.slane %v4472, 6
      %v4522 = vld [vmem:[%s9 + $0x30] sm:$0xff]
      %4523 = vst [vmem:[#allocation1] ss:$9 sm:$0xff] %v4466
      %s4524 = scalar_lea.vmem [#allocation1], 1
      %4525 = vst [vmem:[%s4524] ss:$9 sm:$0xff] %v4480
      %s4526 = scalar_lea.vmem [#allocation1], 2
      %4527 = vst [vmem:[%s4526] ss:$9 sm:$0xff] %v4481
      %s4528 = scalar_lea.vmem [#allocation1], 3
      %4529 = vst [vmem:[%s4528] ss:$9 sm:$0xff] %v4482
      %s4530 = scalar_lea.vmem [#allocation1], 4
      %4531 = vst [vmem:[%s4530] ss:$9 sm:$0xff] %v4483
      %s4532 = scalar_lea.vmem [#allocation1], 5
      %4533 = vst [vmem:[%s4532] ss:$9 sm:$0xff] %v4484
      %s4534 = scalar_lea.vmem [#allocation1], 6
      %4535 = vst [vmem:[%s4534] ss:$9 sm:$0xff] %v4485
      %s4536 = scalar_lea.vmem [#allocation1], 7
      %4537 = vst [vmem:[%s4536] ss:$9 sm:$0xff] %v4467
      %v4538 = vld [vmem:[#allocation1] sm:$0xff]
      %4539 = vst [vmem:[#allocation1] ss:$9 sm:$0xff] %v4486
      %4540 = vst [vmem:[%s4524] ss:$9 sm:$0xff] %v4487
      %4541 = vst [vmem:[%s4526] ss:$9 sm:$0xff] %v4488
      %4542 = vst [vmem:[%s4528] ss:$9 sm:$0xff] %v4489
      %4543 = vst [vmem:[%s4530] ss:$9 sm:$0xff] %v4490
      %4544 = vst [vmem:[%s4532] ss:$9 sm:$0xff] %v4491
      %4545 = vst [vmem:[%s4534] ss:$9 sm:$0xff] %v4468
      %4546 = vst [vmem:[%s4536] ss:$9 sm:$0xff] %v4492
      %v4547 = vld [vmem:[#allocation1] sm:$0xff]
      %4548 = vst [vmem:[#allocation1] ss:$9 sm:$0xff] %v4493
      %4549 = vst [vmem:[%s4524] ss:$9 sm:$0xff] %v4494
      %4550 = vst [vmem:[%s4526] ss:$9 sm:$0xff] %v4495
      %4551 = vst [vmem:[%s4528] ss:$9 sm:$0xff] %v4496
      %4552 = vst [vmem:[%s4530] ss:$9 sm:$0xff] %v4497
      %4553 = vst [vmem:[%s4532] ss:$9 sm:$0xff] %v4469
      %4554 = vst [vmem:[%s4534] ss:$9 sm:$0xff] %v4498
      %4555 = vst [vmem:[%s4536] ss:$9 sm:$0xff] %v4499
      %v4556 = vld [vmem:[#allocation1] sm:$0xff]
      %4557 = vst [vmem:[#allocation1] ss:$9 sm:$0xff] %v4500
      %4558 = vst [vmem:[%s4524] ss:$9 sm:$0xff] %v4501
      %4559 = vst [vmem:[%s4526] ss:$9 sm:$0xff] %v4502
      %4560 = vst [vmem:[%s4528] ss:$9 sm:$0xff] %v4503
      %4561 = vst [vmem:[%s4530] ss:$9 sm:$0xff] %v4470
      %4562 = vst [vmem:[%s4532] ss:$9 sm:$0xff] %v4504
      %4563 = vst [vmem:[%s4534] ss:$9 sm:$0xff] %v4505
      %4564 = vst [vmem:[%s4536] ss:$9 sm:$0xff] %v4506
      %v4565 = vld [vmem:[#allocation1] sm:$0xff]
      %4566 = vst [vmem:[#allocation1] ss:$9 sm:$0xff] %v4507
      %4567 = vst [vmem:[%s4524] ss:$9 sm:$0xff] %v4508
      %4568 = vst [vmem:[%s4526] ss:$9 sm:$0xff] %v4509
      %4569 = vst [vmem:[%s4528] ss:$9 sm:$0xff] %v4471
      %4570 = vst [vmem:[%s4530] ss:$9 sm:$0xff] %v4510
      %4571 = vst [vmem:[%s4532] ss:$9 sm:$0xff] %v4511
      %4572 = vst [vmem:[%s4534] ss:$9 sm:$0xff] %v4512
      %4573 = vst [vmem:[%s4536] ss:$9 sm:$0xff] %v4513
      %v4574 = vld [vmem:[#allocation1] sm:$0xff]
      %4575 = vst [vmem:[#allocation1] ss:$9 sm:$0xff] %v4514
      %4576 = vst [vmem:[%s4524] ss:$9 sm:$0xff] %v4515
      %4577 = vst [vmem:[%s4526] ss:$9 sm:$0xff] %v4472
      %4578 = vst [vmem:[%s4528] ss:$9 sm:$0xff] %v4516
      %4579 = vst [vmem:[%s4530] ss:$9 sm:$0xff] %v4517
      %4580 = vst [vmem:[%s4532] ss:$9 sm:$0xff] %v4518
      %4581 = vst [vmem:[%s4534] ss:$9 sm:$0xff] %v4519
      %4582 = vst [vmem:[%s4536] ss:$9 sm:$0xff] %v4520
      %v4583 = vld [vmem:[#allocation1] sm:$0xff]
      %4584 = vst [vmem:[#allocation1] ss:$9 sm:$0xff] %v4521
      %v4585 = vld [vmem:[#allocation1] sm:$0xff]
      %v4586 = vsel %vm1309, %v4538, 0
      %v4588 = vsel %vm1309, %v4547, 0
      %v4590 = vsel %vm1309, %v4556, 0
      %v4592 = vsel %vm1309, %v4565, 0
      %v4594 = vsel %vm1309, %v4574, 0
      %v4596 = vsel %vm1309, %v4583, 0
      %v4598 = vsel %vm1309, %v4585, 0
      %4600 = vmatpush.msra.mxu0 0.0
      %4601 = vmatpush.msra.mxu0 0.0
      %4602 = vmatpush.msra.mxu0 0.0
      %4603 = vmatpush.msra.mxu0 0.0
      %4604 = vmatpush.msra.mxu0 0.0
      %4605 = vmatpush.msra.mxu0 0.0
      %4606 = vmatpush.msra.mxu0 0.0
      %4607 = vmatpush.msra.mxu0 0.0
      %4608 = vmatpush.msra.mxu0 0.0
      %4609 = vmatpush.msra.mxu0 0.0
      %4610 = vmatpush.msra.mxu0 0.0
      %4611 = vmatpush.msra.mxu0 0.0
      %4612 = vmatpush.msra.mxu0 0.0
      %4613 = vmatpush.msra.mxu0 0.0
      %4614 = vmatpush.msra.mxu0 0.0
      %4615 = vmatpush.msra.mxu0 %v4522
      %4616 = vmatmul.f32.gmra.mxu0 %v4586
      %v4617 = vpop.f32.mrf.mxu0
      %v4618 = vadd.f32 0.0, %v4617
      %4619 = vmatmul.f32.gmra.mxu0 %v4588
      %v4620 = vpop.f32.mrf.mxu0
      %v4621 = vadd.f32 0.0, %v4620
      %4622 = vmatmul.f32.gmra.mxu0 %v4590
      %v4623 = vpop.f32.mrf.mxu0
      %v4624 = vadd.f32 0.0, %v4623
      %4625 = vmatmul.f32.gmra.mxu0 %v4592
      %v4626 = vpop.f32.mrf.mxu0
      %v4627 = vadd.f32 0.0, %v4626
      %4628 = vmatmul.f32.gmra.mxu0 %v4594
      %v4629 = vpop.f32.mrf.mxu0
      %v4630 = vadd.f32 0.0, %v4629
      %4631 = vmatmul.f32.gmra.mxu0 %v4596
      %v4632 = vpop.f32.mrf.mxu0
      %v4633 = vadd.f32 0.0, %v4632
      %4634 = vmatmul.f32.gmra.mxu0 %v4598
      %v4635 = vpop.f32.mrf.mxu0
      %v4636 = vadd.f32 0.0, %v4635
      %4637 = vdwg.mxu0
      %v4638 = vadd.f32 %v4459, %v4618
      %v4639 = vadd.f32 %v4460, %v4621
      %v4640 = vadd.f32 %v4461, %v4624
      %v4641 = vadd.f32 %v4462, %v4627
      %v4642 = vadd.f32 %v4463, %v4630
      %v4643 = vadd.f32 %v4464, %v4633
      %v4644 = vadd.f32 %v4465, %v4636
      %v4645 = vld [vmem:[%s2650 + $0x1] sm:$0x7f]
      %v4646 = vld [vmem:[%s2650 + $0x11] sm:$0x7f]
      %v4647 = vld [vmem:[%s2650 + $0x21] sm:$0x7f]
      %v4648 = vld [vmem:[%s2650 + $0x31] sm:$0x7f]
      %v4649 = vld [vmem:[%s2650 + $0x41] sm:$0x7f]
      %v4650 = vld [vmem:[%s2650 + $0x51] sm:$0x7f]
      %v4651 = vld [vmem:[%s2650 + $0x61] sm:$0x7f]
      %v4659 = vrot.slane %v4645, 1
      %v4660 = vrot.slane %v4645, 2
      %v4661 = vrot.slane %v4645, 3
      %v4662 = vrot.slane %v4645, 4
      %v4663 = vrot.slane %v4645, 5
      %v4664 = vrot.slane %v4645, 6
      %v4665 = vrot.slane %v4646, 1
      %v4666 = vrot.slane %v4646, 2
      %v4667 = vrot.slane %v4646, 3
      %v4668 = vrot.slane %v4646, 4
      %v4669 = vrot.slane %v4646, 5
      %v4670 = vrot.slane %v4646, 6
      %v4671 = vrot.slane %v4647, 1
      %v4672 = vrot.slane %v4647, 2
      %v4673 = vrot.slane %v4647, 3
      %v4674 = vrot.slane %v4647, 4
      %v4675 = vrot.slane %v4647, 5
      %v4676 = vrot.slane %v4647, 6
      %v4677 = vrot.slane %v4648, 1
      %v4678 = vrot.slane %v4648, 2
      %v4679 = vrot.slane %v4648, 3
      %v4680 = vrot.slane %v4648, 4
      %v4681 = vrot.slane %v4648, 5
      %v4682 = vrot.slane %v4648, 6
      %v4683 = vrot.slane %v4649, 1
      %v4684 = vrot.slane %v4649, 2
      %v4685 = vrot.slane %v4649, 3
      %v4686 = vrot.slane %v4649, 4
      %v4687 = vrot.slane %v4649, 5
      %v4688 = vrot.slane %v4649, 6
      %v4689 = vrot.slane %v4650, 1
      %v4690 = vrot.slane %v4650, 2
      %v4691 = vrot.slane %v4650, 3
      %v4692 = vrot.slane %v4650, 4
      %v4693 = vrot.slane %v4650, 5
      %v4694 = vrot.slane %v4650, 6
      %v4695 = vrot.slane %v4651, 1
      %v4696 = vrot.slane %v4651, 2
      %v4697 = vrot.slane %v4651, 3
      %v4698 = vrot.slane %v4651, 4
      %v4699 = vrot.slane %v4651, 5
      %v4700 = vrot.slane %v4651, 6
      %v4701 = vld [vmem:[%s9 + $0x38] sm:$0xff]
      %4702 = vst [vmem:[#allocation1] ss:$9 sm:$0xff] %v4645
      %s4703 = scalar_lea.vmem [#allocation1], 1
      %4704 = vst [vmem:[%s4703] ss:$9 sm:$0xff] %v4659
      %s4705 = scalar_lea.vmem [#allocation1], 2
      %4706 = vst [vmem:[%s4705] ss:$9 sm:$0xff] %v4660
      %s4707 = scalar_lea.vmem [#allocation1], 3
      %4708 = vst [vmem:[%s4707] ss:$9 sm:$0xff] %v4661
      %s4709 = scalar_lea.vmem [#allocation1], 4
      %4710 = vst [vmem:[%s4709] ss:$9 sm:$0xff] %v4662
      %s4711 = scalar_lea.vmem [#allocation1], 5
      %4712 = vst [vmem:[%s4711] ss:$9 sm:$0xff] %v4663
      %s4713 = scalar_lea.vmem [#allocation1], 6
      %4714 = vst [vmem:[%s4713] ss:$9 sm:$0xff] %v4664
      %s4715 = scalar_lea.vmem [#allocation1], 7
      %4716 = vst [vmem:[%s4715] ss:$9 sm:$0xff] %v4646
      %v4717 = vld [vmem:[#allocation1] sm:$0xff]
      %4718 = vst [vmem:[#allocation1] ss:$9 sm:$0xff] %v4665
      %4719 = vst [vmem:[%s4703] ss:$9 sm:$0xff] %v4666
      %4720 = vst [vmem:[%s4705] ss:$9 sm:$0xff] %v4667
      %4721 = vst [vmem:[%s4707] ss:$9 sm:$0xff] %v4668
      %4722 = vst [vmem:[%s4709] ss:$9 sm:$0xff] %v4669
      %4723 = vst [vmem:[%s4711] ss:$9 sm:$0xff] %v4670
      %4724 = vst [vmem:[%s4713] ss:$9 sm:$0xff] %v4647
      %4725 = vst [vmem:[%s4715] ss:$9 sm:$0xff] %v4671
      %v4726 = vld [vmem:[#allocation1] sm:$0xff]
      %4727 = vst [vmem:[#allocation1] ss:$9 sm:$0xff] %v4672
      %4728 = vst [vmem:[%s4703] ss:$9 sm:$0xff] %v4673
      %4729 = vst [vmem:[%s4705] ss:$9 sm:$0xff] %v4674
      %4730 = vst [vmem:[%s4707] ss:$9 sm:$0xff] %v4675
      %4731 = vst [vmem:[%s4709] ss:$9 sm:$0xff] %v4676
      %4732 = vst [vmem:[%s4711] ss:$9 sm:$0xff] %v4648
      %4733 = vst [vmem:[%s4713] ss:$9 sm:$0xff] %v4677
      %4734 = vst [vmem:[%s4715] ss:$9 sm:$0xff] %v4678
      %v4735 = vld [vmem:[#allocation1] sm:$0xff]
      %4736 = vst [vmem:[#allocation1] ss:$9 sm:$0xff] %v4679
      %4737 = vst [vmem:[%s4703] ss:$9 sm:$0xff] %v4680
      %4738 = vst [vmem:[%s4705] ss:$9 sm:$0xff] %v4681
      %4739 = vst [vmem:[%s4707] ss:$9 sm:$0xff] %v4682
      %4740 = vst [vmem:[%s4709] ss:$9 sm:$0xff] %v4649
      %4741 = vst [vmem:[%s4711] ss:$9 sm:$0xff] %v4683
      %4742 = vst [vmem:[%s4713] ss:$9 sm:$0xff] %v4684
      %4743 = vst [vmem:[%s4715] ss:$9 sm:$0xff] %v4685
      %v4744 = vld [vmem:[#allocation1] sm:$0xff]
      %4745 = vst [vmem:[#allocation1] ss:$9 sm:$0xff] %v4686
      %4746 = vst [vmem:[%s4703] ss:$9 sm:$0xff] %v4687
      %4747 = vst [vmem:[%s4705] ss:$9 sm:$0xff] %v4688
      %4748 = vst [vmem:[%s4707] ss:$9 sm:$0xff] %v4650
      %4749 = vst [vmem:[%s4709] ss:$9 sm:$0xff] %v4689
      %4750 = vst [vmem:[%s4711] ss:$9 sm:$0xff] %v4690
      %4751 = vst [vmem:[%s4713] ss:$9 sm:$0xff] %v4691
      %4752 = vst [vmem:[%s4715] ss:$9 sm:$0xff] %v4692
      %v4753 = vld [vmem:[#allocation1] sm:$0xff]
      %4754 = vst [vmem:[#allocation1] ss:$9 sm:$0xff] %v4693
      %4755 = vst [vmem:[%s4703] ss:$9 sm:$0xff] %v4694
      %4756 = vst [vmem:[%s4705] ss:$9 sm:$0xff] %v4651
      %4757 = vst [vmem:[%s4707] ss:$9 sm:$0xff] %v4695
      %4758 = vst [vmem:[%s4709] ss:$9 sm:$0xff] %v4696
      %4759 = vst [vmem:[%s4711] ss:$9 sm:$0xff] %v4697
      %4760 = vst [vmem:[%s4713] ss:$9 sm:$0xff] %v4698
      %4761 = vst [vmem:[%s4715] ss:$9 sm:$0xff] %v4699
      %v4762 = vld [vmem:[#allocation1] sm:$0xff]
      %4763 = vst [vmem:[#allocation1] ss:$9 sm:$0xff] %v4700
      %v4764 = vld [vmem:[#allocation1] sm:$0xff]
      %v4765 = vsel %vm1309, %v4717, 0
      %v4767 = vsel %vm1309, %v4726, 0
      %v4769 = vsel %vm1309, %v4735, 0
      %v4771 = vsel %vm1309, %v4744, 0
      %v4773 = vsel %vm1309, %v4753, 0
      %v4775 = vsel %vm1309, %v4762, 0
      %v4777 = vsel %vm1309, %v4764, 0
      %4779 = vmatpush.msra.mxu0 0.0
      %4780 = vmatpush.msra.mxu0 0.0
      %4781 = vmatpush.msra.mxu0 0.0
      %4782 = vmatpush.msra.mxu0 0.0
      %4783 = vmatpush.msra.mxu0 0.0
      %4784 = vmatpush.msra.mxu0 0.0
      %4785 = vmatpush.msra.mxu0 0.0
      %4786 = vmatpush.msra.mxu0 0.0
      %4787 = vmatpush.msra.mxu0 0.0
      %4788 = vmatpush.msra.mxu0 0.0
      %4789 = vmatpush.msra.mxu0 0.0
      %4790 = vmatpush.msra.mxu0 0.0
      %4791 = vmatpush.msra.mxu0 0.0
      %4792 = vmatpush.msra.mxu0 0.0
      %4793 = vmatpush.msra.mxu0 0.0
      %4794 = vmatpush.msra.mxu0 %v4701
      %4795 = vmatmul.f32.gmra.mxu0 %v4765
      %v4796 = vpop.f32.mrf.mxu0
      %v4797 = vadd.f32 0.0, %v4796
      %4798 = vmatmul.f32.gmra.mxu0 %v4767
      %v4799 = vpop.f32.mrf.mxu0
      %v4800 = vadd.f32 0.0, %v4799
      %4801 = vmatmul.f32.gmra.mxu0 %v4769
      %v4802 = vpop.f32.mrf.mxu0
      %v4803 = vadd.f32 0.0, %v4802
      %4804 = vmatmul.f32.gmra.mxu0 %v4771
      %v4805 = vpop.f32.mrf.mxu0
      %v4806 = vadd.f32 0.0, %v4805
      %4807 = vmatmul.f32.gmra.mxu0 %v4773
      %v4808 = vpop.f32.mrf.mxu0
      %v4809 = vadd.f32 0.0, %v4808
      %4810 = vmatmul.f32.gmra.mxu0 %v4775
      %v4811 = vpop.f32.mrf.mxu0
      %v4812 = vadd.f32 0.0, %v4811
      %4813 = vmatmul.f32.gmra.mxu0 %v4777
      %v4814 = vpop.f32.mrf.mxu0
      %v4815 = vadd.f32 0.0, %v4814
      %4816 = vdwg.mxu0
      %v4817 = vadd.f32 %v4638, %v4797
      %v4818 = vadd.f32 %v4639, %v4800
      %v4819 = vadd.f32 %v4640, %v4803
      %v4820 = vadd.f32 %v4641, %v4806
      %v4821 = vadd.f32 %v4642, %v4809
      %v4822 = vadd.f32 %v4643, %v4812
      %v4823 = vadd.f32 %v4644, %v4815
      %v4824 = vld [vmem:[%s2650 + $0x2] sm:$0x7f]
      %v4825 = vld [vmem:[%s2650 + $0x12] sm:$0x7f]
      %v4826 = vld [vmem:[%s2650 + $0x22] sm:$0x7f]
      %v4827 = vld [vmem:[%s2650 + $0x32] sm:$0x7f]
      %v4828 = vld [vmem:[%s2650 + $0x42] sm:$0x7f]
      %v4829 = vld [vmem:[%s2650 + $0x52] sm:$0x7f]
      %v4830 = vld [vmem:[%s2650 + $0x62] sm:$0x7f]
      %v4838 = vrot.slane %v4824, 1
      %v4839 = vrot.slane %v4824, 2
      %v4840 = vrot.slane %v4824, 3
      %v4841 = vrot.slane %v4824, 4
      %v4842 = vrot.slane %v4824, 5
      %v4843 = vrot.slane %v4824, 6
      %v4844 = vrot.slane %v4825, 1
      %v4845 = vrot.slane %v4825, 2
      %v4846 = vrot.slane %v4825, 3
      %v4847 = vrot.slane %v4825, 4
      %v4848 = vrot.slane %v4825, 5
      %v4849 = vrot.slane %v4825, 6
      %v4850 = vrot.slane %v4826, 1
      %v4851 = vrot.slane %v4826, 2
      %v4852 = vrot.slane %v4826, 3
      %v4853 = vrot.slane %v4826, 4
      %v4854 = vrot.slane %v4826, 5
      %v4855 = vrot.slane %v4826, 6
      %v4856 = vrot.slane %v4827, 1
      %v4857 = vrot.slane %v4827, 2
      %v4858 = vrot.slane %v4827, 3
      %v4859 = vrot.slane %v4827, 4
      %v4860 = vrot.slane %v4827, 5
      %v4861 = vrot.slane %v4827, 6
      %v4862 = vrot.slane %v4828, 1
      %v4863 = vrot.slane %v4828, 2
      %v4864 = vrot.slane %v4828, 3
      %v4865 = vrot.slane %v4828, 4
      %v4866 = vrot.slane %v4828, 5
      %v4867 = vrot.slane %v4828, 6
      %v4868 = vrot.slane %v4829, 1
      %v4869 = vrot.slane %v4829, 2
      %v4870 = vrot.slane %v4829, 3
      %v4871 = vrot.slane %v4829, 4
      %v4872 = vrot.slane %v4829, 5
      %v4873 = vrot.slane %v4829, 6
      %v4874 = vrot.slane %v4830, 1
      %v4875 = vrot.slane %v4830, 2
      %v4876 = vrot.slane %v4830, 3
      %v4877 = vrot.slane %v4830, 4
      %v4878 = vrot.slane %v4830, 5
      %v4879 = vrot.slane %v4830, 6
      %v4880 = vld [vmem:[%s9 + $0x40] sm:$0xff]
      %4881 = vst [vmem:[#allocation1] ss:$9 sm:$0xff] %v4824
      %s4882 = scalar_lea.vmem [#allocation1], 1
      %4883 = vst [vmem:[%s4882] ss:$9 sm:$0xff] %v4838
      %s4884 = scalar_lea.vmem [#allocation1], 2
      %4885 = vst [vmem:[%s4884] ss:$9 sm:$0xff] %v4839
      %s4886 = scalar_lea.vmem [#allocation1], 3
      %4887 = vst [vmem:[%s4886] ss:$9 sm:$0xff] %v4840
      %s4888 = scalar_lea.vmem [#allocation1], 4
      %4889 = vst [vmem:[%s4888] ss:$9 sm:$0xff] %v4841
      %s4890 = scalar_lea.vmem [#allocation1], 5
      %4891 = vst [vmem:[%s4890] ss:$9 sm:$0xff] %v4842
      %s4892 = scalar_lea.vmem [#allocation1], 6
      %4893 = vst [vmem:[%s4892] ss:$9 sm:$0xff] %v4843
      %s4894 = scalar_lea.vmem [#allocation1], 7
      %4895 = vst [vmem:[%s4894] ss:$9 sm:$0xff] %v4825
      %v4896 = vld [vmem:[#allocation1] sm:$0xff]
      %4897 = vst [vmem:[#allocation1] ss:$9 sm:$0xff] %v4844
      %4898 = vst [vmem:[%s4882] ss:$9 sm:$0xff] %v4845
      %4899 = vst [vmem:[%s4884] ss:$9 sm:$0xff] %v4846
      %4900 = vst [vmem:[%s4886] ss:$9 sm:$0xff] %v4847
      %4901 = vst [vmem:[%s4888] ss:$9 sm:$0xff] %v4848
      %4902 = vst [vmem:[%s4890] ss:$9 sm:$0xff] %v4849
      %4903 = vst [vmem:[%s4892] ss:$9 sm:$0xff] %v4826
      %4904 = vst [vmem:[%s4894] ss:$9 sm:$0xff] %v4850
      %v4905 = vld [vmem:[#allocation1] sm:$0xff]
      %4906 = vst [vmem:[#allocation1] ss:$9 sm:$0xff] %v4851
      %4907 = vst [vmem:[%s4882] ss:$9 sm:$0xff] %v4852
      %4908 = vst [vmem:[%s4884] ss:$9 sm:$0xff] %v4853
      %4909 = vst [vmem:[%s4886] ss:$9 sm:$0xff] %v4854
      %4910 = vst [vmem:[%s4888] ss:$9 sm:$0xff] %v4855
      %4911 = vst [vmem:[%s4890] ss:$9 sm:$0xff] %v4827
      %4912 = vst [vmem:[%s4892] ss:$9 sm:$0xff] %v4856
      %4913 = vst [vmem:[%s4894] ss:$9 sm:$0xff] %v4857
      %v4914 = vld [vmem:[#allocation1] sm:$0xff]
      %4915 = vst [vmem:[#allocation1] ss:$9 sm:$0xff] %v4858
      %4916 = vst [vmem:[%s4882] ss:$9 sm:$0xff] %v4859
      %4917 = vst [vmem:[%s4884] ss:$9 sm:$0xff] %v4860
      %4918 = vst [vmem:[%s4886] ss:$9 sm:$0xff] %v4861
      %4919 = vst [vmem:[%s4888] ss:$9 sm:$0xff] %v4828
      %4920 = vst [vmem:[%s4890] ss:$9 sm:$0xff] %v4862
      %4921 = vst [vmem:[%s4892] ss:$9 sm:$0xff] %v4863
      %4922 = vst [vmem:[%s4894] ss:$9 sm:$0xff] %v4864
      %v4923 = vld [vmem:[#allocation1] sm:$0xff]
      %4924 = vst [vmem:[#allocation1] ss:$9 sm:$0xff] %v4865
      %4925 = vst [vmem:[%s4882] ss:$9 sm:$0xff] %v4866
      %4926 = vst [vmem:[%s4884] ss:$9 sm:$0xff] %v4867
      %4927 = vst [vmem:[%s4886] ss:$9 sm:$0xff] %v4829
      %4928 = vst [vmem:[%s4888] ss:$9 sm:$0xff] %v4868
      %4929 = vst [vmem:[%s4890] ss:$9 sm:$0xff] %v4869
      %4930 = vst [vmem:[%s4892] ss:$9 sm:$0xff] %v4870
      %4931 = vst [vmem:[%s4894] ss:$9 sm:$0xff] %v4871
      %v4932 = vld [vmem:[#allocation1] sm:$0xff]
      %4933 = vst [vmem:[#allocation1] ss:$9 sm:$0xff] %v4872
      %4934 = vst [vmem:[%s4882] ss:$9 sm:$0xff] %v4873
      %4935 = vst [vmem:[%s4884] ss:$9 sm:$0xff] %v4830
      %4936 = vst [vmem:[%s4886] ss:$9 sm:$0xff] %v4874
      %4937 = vst [vmem:[%s4888] ss:$9 sm:$0xff] %v4875
      %4938 = vst [vmem:[%s4890] ss:$9 sm:$0xff] %v4876
      %4939 = vst [vmem:[%s4892] ss:$9 sm:$0xff] %v4877
      %4940 = vst [vmem:[%s4894] ss:$9 sm:$0xff] %v4878
      %v4941 = vld [vmem:[#allocation1] sm:$0xff]
      %4942 = vst [vmem:[#allocation1] ss:$9 sm:$0xff] %v4879
      %v4943 = vld [vmem:[#allocation1] sm:$0xff]
      %v4944 = vsel %vm1309, %v4896, 0
      %v4946 = vsel %vm1309, %v4905, 0
      %v4948 = vsel %vm1309, %v4914, 0
      %v4950 = vsel %vm1309, %v4923, 0
      %v4952 = vsel %vm1309, %v4932, 0
      %v4954 = vsel %vm1309, %v4941, 0
      %v4956 = vsel %vm1309, %v4943, 0
      %4958 = vmatpush.msra.mxu0 0.0
      %4959 = vmatpush.msra.mxu0 0.0
      %4960 = vmatpush.msra.mxu0 0.0
      %4961 = vmatpush.msra.mxu0 0.0
      %4962 = vmatpush.msra.mxu0 0.0
      %4963 = vmatpush.msra.mxu0 0.0
      %4964 = vmatpush.msra.mxu0 0.0
      %4965 = vmatpush.msra.mxu0 0.0
      %4966 = vmatpush.msra.mxu0 0.0
      %4967 = vmatpush.msra.mxu0 0.0
      %4968 = vmatpush.msra.mxu0 0.0
      %4969 = vmatpush.msra.mxu0 0.0
      %4970 = vmatpush.msra.mxu0 0.0
      %4971 = vmatpush.msra.mxu0 0.0
      %4972 = vmatpush.msra.mxu0 0.0
      %4973 = vmatpush.msra.mxu0 %v4880
      %4974 = vmatmul.f32.gmra.mxu0 %v4944
      %v4975 = vpop.f32.mrf.mxu0
      %v4976 = vadd.f32 0.0, %v4975
      %4977 = vmatmul.f32.gmra.mxu0 %v4946
      %v4978 = vpop.f32.mrf.mxu0
      %v4979 = vadd.f32 0.0, %v4978
      %4980 = vmatmul.f32.gmra.mxu0 %v4948
      %v4981 = vpop.f32.mrf.mxu0
      %v4982 = vadd.f32 0.0, %v4981
      %4983 = vmatmul.f32.gmra.mxu0 %v4950
      %v4984 = vpop.f32.mrf.mxu0
      %v4985 = vadd.f32 0.0, %v4984
      %4986 = vmatmul.f32.gmra.mxu0 %v4952
      %v4987 = vpop.f32.mrf.mxu0
      %v4988 = vadd.f32 0.0, %v4987
      %4989 = vmatmul.f32.gmra.mxu0 %v4954
      %v4990 = vpop.f32.mrf.mxu0
      %v4991 = vadd.f32 0.0, %v4990
      %4992 = vmatmul.f32.gmra.mxu0 %v4956
      %v4993 = vpop.f32.mrf.mxu0
      %v4994 = vadd.f32 0.0, %v4993
      %4995 = vdwg.mxu0
      %v4996 = vadd.f32 %v4817, %v4976
      %v4997 = vadd.f32 %v4818, %v4979
      %v4998 = vadd.f32 %v4819, %v4982
      %v4999 = vadd.f32 %v4820, %v4985
      %v5000 = vadd.f32 %v4821, %v4988
      %v5001 = vadd.f32 %v4822, %v4991
      %v5002 = vadd.f32 %v4823, %v4994
      %v5003 = vld [vmem:[%s10] sm:$0x1]
      %v5005 = vperm.slane %v5003, 0
      %v5007 = vadd.f32 %v4996, %v5005
      %v5008 = vadd.f32 %v4997, %v5005
      %v5009 = vadd.f32 %v4998, %v5005
      %v5010 = vadd.f32 %v4999, %v5005
      %v5011 = vadd.f32 %v5000, %v5005
      %v5012 = vadd.f32 %v5001, %v5005
      %v5013 = vadd.f32 %v5002, %v5005
      %v5014 = vmax.f32 %v5007, 0.0
      %v5015 = vmax.f32 %v5008, 0.0
      %v5016 = vmax.f32 %v5009, 0.0
      %v5017 = vmax.f32 %v5010, 0.0
      %v5018 = vmax.f32 %v5011, 0.0
      %v5019 = vmax.f32 %v5012, 0.0
      %v5020 = vmax.f32 %v5013, 0.0
      %5021 = vst.msk [vmem:[%s386] sm:$0xff] %vm3214, %v5014
      %5022 = vst.msk [vmem:[%s386 + $0x8] sm:$0xff] %vm3214, %v5015
      %5023 = vst.msk [vmem:[%s386 + $0x10] sm:$0xff] %vm3214, %v5016
      %5024 = vst.msk [vmem:[%s386 + $0x18] sm:$0xff] %vm3214, %v5017
      %5025 = vst.msk [vmem:[%s386 + $0x20] sm:$0xff] %vm3214, %v5018
      %5026 = vst.msk [vmem:[%s386 + $0x28] sm:$0xff] %vm3214, %v5019
      %vm5027 = vcmask 253952
      %5028 = vst.msk [vmem:[%s386 + $0x30] sm:$0x1] %vm5027, %v5020
      %p5029 = scmp.lt.s32.totalorder %s22, 1
      %s5030 = scalar_select %p5029, %s22, 1
      %s5031 = smul.addr %s5030, 7
      %s5032 = smul.addr %s5031, 8
      %s5033 = scalar_lea.vmem %s11, %s5032
      // Predicated region
      $region65: #{squeezenet_mini_forward.1} parent=63 // pred_check
        %p5034 = pneg %p276
      $region66: #{squeezenet_mini_forward.1} parent=63 // pred_check_branch
        %5036 = sbr.rel (%p5034) target = $region68
      $region67: #{squeezenet_mini_forward.1} parent=63 // pred_region
        _
      $region68: #{squeezenet_mini_forward.1} parent=63 // pred_fallthru
        _
    $region64: #{squeezenet_mini_forward.1} parent=5 // pred_fallthru
      _
    %p5037 = scmp.le.s32.totalorder 2, %s17
    // Predicated region
    $region69: #{squeezenet_mini_forward.1} parent=5 // pred_check
      %p5038 = pneg %p5037
    $region70: #{squeezenet_mini_forward.1} parent=5 // pred_check_branch
      %5040 = sbr.rel (%p5038) target = $region72
    $region71: #{squeezenet_mini_forward.1} parent=5 // pred_region
      %s5041 = ssub.s32 %s17, 2
      // Predicated region
      $region73: #{squeezenet_mini_forward.1} parent=71 // pred_check
        %p5042 = pneg %p282
      $region74: #{squeezenet_mini_forward.1} parent=71 // pred_check_branch
        %5044 = sbr.rel (%p5042) target = $region76
      $region75: #{squeezenet_mini_forward.1} parent=71 // pred_region
        %p5045 = scmp.lt.s32.totalorder %s23, 1
        %s5046 = scalar_select %p5045, %s23, 1
        %s5047 = smul.addr %s5046, 7
        %s5048 = smul.addr %s5047, 8
        %s5049 = scalar_lea.vmem %s11, %s5048
      $region76: #{squeezenet_mini_forward.1} parent=71 // pred_fallthru
        _
    $region72: #{squeezenet_mini_forward.1} parent=5 // pred_fallthru
      _
  $region6: #{squeezenet_mini_forward.1} parent=0 // loop_footer
    %s21 = sadd.s32 1, %s17
  $region7: #{squeezenet_mini_forward.1} parent=0 // loop_footer_branch
    %16 = sbr.rel target = $region3
  $region8: #{squeezenet_mini_forward.1} parent=0 // loop_exit
    _

</llo_original>
